<compile_context>
chip_gen: v5e
topology: v5e:2x2
jax: 0.10.0
libtpu: 0.0.40
codegen_flags: <defaults>
</compile_context>

<pallas_src>
import functools

import jax
import jax.numpy as jnp
import numpy as np
from jax.experimental import pallas as pl
from jax.experimental.pallas import tpu as pltpu

EPS = 1e-5
F32 = jnp.float32
BF16 = jnp.bfloat16
_HI = jax.lax.Precision.HIGHEST


def _sign(v):
    # torch.sign forward semantics (sign(0) == 0); compare+select on the VPU.
    return jnp.where(v > 0, 1.0, jnp.where(v < 0, -1.0, 0.0)).astype(v.dtype)


# -----------------------------------------------------------------------------------------
# Lane-shift helper.  pltpu.roll (XLU) is the cheap path; its direction is resolved ONCE per
# process by a tiny probe (falls back to slice+concat if roll is rejected) so that the main
# wrapper can be fully jitted with `mode` as a static argument.
# -----------------------------------------------------------------------------------------
def _roll_probe_kernel(o_ref):
    o_ref[...] = pltpu.roll(
        jax.lax.broadcasted_iota(jnp.float32, (8, 128), 1), shift=1, axis=1)


@functools.lru_cache(maxsize=None)
def _shift_mode():
    try:
        probe = pl.pallas_call(
            _roll_probe_kernel,
            out_shape=jax.ShapeDtypeStruct((8, 128), jnp.float32))()
        v = float(probe[0, 1])
    except Exception:                       # roll unavailable -> slice+concat fallback
        return "concat"
    if v == 0.0:
        return "roll_numpy"                 # out[j] = in[j - shift] (jnp.roll semantics)
    if v == 2.0:
        return "roll_inverted"              # out[j] = in[j + shift]
    return "concat"


def _shift_lanes(xs, s, mode):
    """Circular shift along lanes: result[:, j] = xs[:, (j + s) % L] (s static)."""
    L = xs.shape[-1]
    s = s % L
    if s == 0:
        return xs
    if mode == "roll_numpy":
        return pltpu.roll(xs, shift=L - s, axis=1)
    if mode == "roll_inverted":
        return pltpu.roll(xs, shift=s, axis=1)
    return jnp.concatenate([xs[:, s:], xs[:, :s]], axis=1)


def _conv3x3_fused(xs, w2_ref, msk_ref, width, mode):
    """3x3 / pad 1 / stride 1 binary conv as ONE MXU matmul (K = 9*Ci).

    xs:      [Ci, Lb]    bf16 signs (+-1 / 0); Lb = B_IMG * H * W (whole images per chunk)
    w2_ref:  [Co, 9*Ci]  bf16 sign weights; column index = tap*Ci + in_channel, tap = dh*3+dw
    msk_ref: [9, 1, Lb]  bf16 {0,1} tap validity masks (zero-padding semantics)
    returns  [Co, Lb]    f32  un-scaled conv result (exact, integer-valued)
    """
    taps = []
    for dh in range(3):
        for dw in range(3):
            t = dh * 3 + dw
            s = (dh - 1) * width + (dw - 1)
            if s == 0:
                taps.append(xs)                               # center tap: no shift, no mask
            else:
                taps.append(_shift_lanes(xs, s, mode) * msk_ref[t])
    stack = jnp.concatenate(taps, axis=0)                     # [9*Ci, Lb]
    return jnp.dot(w2_ref[...], stack, preferred_element_type=jnp.float32)


# -----------------------------------------------------------------------------------------
# Tiny finalize math (plain JAX, runs inside the same jit; Precision.HIGHEST to avoid the
# TPU default bf16 truncation on these f32 matmuls).
# -----------------------------------------------------------------------------------------
def _mm(a, b):
    return jnp.dot(a, b, precision=_HI)


def _lin_stats(wt, xsum, gram):
    """Per-out-channel sum / sum-of-squares of z = wt @ x over the whole batch, derived
    exactly from the accumulated per-pixel sum and Gram of x (z is linear in x)."""
    s = _mm(wt, xsum)
    ss = jnp.sum(_mm(wt, gram) * wt, axis=1, keepdims=True)
    return s, ss


def _bn_affine(s, ss, scale, gamma, beta, count, eps):
    """Training-mode BatchNorm with the conv weight-scale folded in exactly: y = a*z + b,
    where z is the *un-scaled* conv output with batch sum s and sum-of-squares ss."""
    mean = s / count
    var = jnp.maximum(ss / count - mean * mean, 0.0)
    a = gamma * scale * jax.lax.rsqrt(scale * scale * var + eps)
    b = beta - a * mean
    return a, b


# -----------------------------------------------------------------------------------------
# Kernels.  Grid = (N // B_IMG,); each step owns a lane chunk of B_IMG whole images.
# Every kernel writes per-chunk partial statistics -> all grid axes are "parallel".
# -----------------------------------------------------------------------------------------
def _k1_stats(x_ref, xsum_ref, gram_ref):
    xc = x_ref[...]                                           # [cin, Lb] f32
    xsum_ref[...] = jnp.sum(xc, axis=1, keepdims=True)
    gram_ref[...] = jax.lax.dot_general(                      # x . x^T  (K = Lb on the MXU)
        xc, xc, (((1,), (1,)), ((), ())), preferred_element_type=jnp.float32)


def _k2_apply1_stats2(x_ref, w1_ref, a1_ref, b1_ref, w2_ref, msk_ref,
                      y1s_ref, s2_ref, ss2_ref, *, width, mode):
    # conv1 (1x1 binary, scale folded into a1/b1) -> bn1 -> sign, stored as bf16 +-1 (exact)
    z1 = jnp.dot(w1_ref[...], x_ref[...], preferred_element_type=jnp.float32)
    y1s = _sign(a1_ref[...] * z1 + b1_ref[...]).astype(jnp.bfloat16)
    y1s_ref[...] = y1s
    # conv2 (3x3, single fused matmul) partial statistics from the resident sign tile
    z2 = _conv3x3_fused(y1s, w2_ref, msk_ref, width, mode)
    s2_ref[...] = jnp.sum(z2, axis=1, keepdims=True)
    ss2_ref[...] = jnp.sum(z2 * z2, axis=1, keepdims=True)


def _k3_apply2_stats3(y1s_ref, w2_ref, msk_ref, a2_ref, b2_ref,
                      y2s_ref, ysum_ref, ygram_ref, *, width, mode):
    # conv2 (3x3 binary) -> bn2 -> sign
    z2 = _conv3x3_fused(y1s_ref[...], w2_ref, msk_ref, width, mode)
    y2s = _sign(a2_ref[...] * z2 + b2_ref[...]).astype(jnp.bfloat16)
    y2s_ref[...] = y2s
    # bn3 statistics via sum + Gram of y2 (conv3 is linear; finalized in JAX) -> no conv3
    # recompute in this pass and no extra HBM traffic.
    ysum_ref[...] = jnp.sum(y2s.astype(jnp.float32), axis=1, keepdims=True)
    ygram_ref[...] = jax.lax.dot_general(
        y2s, y2s, (((1,), (1,)), ((), ())), preferred_element_type=jnp.float32)


def _k4_final(y2s_ref, w3_ref, a3_ref, b3_ref, x_ref, *rest, has_sc_conv):
    z3 = jnp.dot(w3_ref[...], y2s_ref[...], preferred_element_type=jnp.float32)
    out = a3_ref[...] * z3 + b3_ref[...]
    if has_sc_conv:
        wsc_ref, asc_ref, bsc_ref, o_ref = rest
        zsc = jnp.dot(wsc_ref[...], x_ref[...], preferred_element_type=jnp.float32)
        out = out + asc_ref[...] * zsc + bsc_ref[...]
    else:
        (o_ref,) = rest
        out = out + x_ref[...]                                # identity shortcut
    o_ref[...] = out


# -----------------------------------------------------------------------------------------
# Wrapper
# -----------------------------------------------------------------------------------------
def _chunk_spec(c, lb):
    return pl.BlockSpec((c, lb), lambda i: (0, i))


def _part_spec(c, d):
    return pl.BlockSpec((None, c, d), lambda i: (i, 0, 0))


def _const_spec(shape):
    return pl.BlockSpec(shape, lambda i: (0,) * len(shape))


@functools.lru_cache(maxsize=None)
def _vmem_limit_bytes():
    cap = 128 * 1024 * 1024
    try:
        cap = int(pltpu.get_tpu_info().vmem_capacity_bytes)
    except Exception:
        pass
    # ~48 MiB on v7x (64 MiB physical), ~96-112 MiB on v5e/v6e (128 MiB physical)
    return min((cap * 3) // 4, 112 * 1024 * 1024)


def _pick_b_img(n, hw, cin, planes, cout):
    """Images per grid step: as many as fit a modest VMEM budget, keeping the lane block a
    multiple of 128 (falls back to the whole batch as one full-array block otherwise)."""
    per_lane = 8 * cin + 28 * planes + 8 * cout + 20          # rough bytes/lane for K2/K3
    max_lanes = max(hw, (8 * 1024 * 1024) // max(per_lane, 1))
    best = 0
    for cand in range(1, n + 1):
        if n % cand == 0 and cand * hw <= max_lanes and (cand * hw) % 128 == 0:
            best = cand
    return best if best else n


@functools.partial(jax.jit, static_argnames=("mode", "eps"))
def _block_forward_impl(x, params, *, mode, eps):
    n, cin, h, w = x.shape
    hw = h * w
    L = n * hw
    count = float(L)
    planes = params["w2"].shape[0]
    cout = params["w3"].shape[0]
    has_sc_conv = cin != cout

    b_img = _pick_b_img(n, hw, cin, planes, cout)
    g_steps = n // b_img
    lb = b_img * hw

    # Channel-major activation slab [C, N*H*W] (one XLA transpose in, one out).
    x_cm = jnp.transpose(x.astype(F32).reshape(n, cin, hw), (1, 0, 2)).reshape(cin, L)

    # ---- weight / BN-parameter preprocessing (tiny tensors, fused by jit) ----
    w1 = params["w1"].astype(F32)
    sc1 = jnp.mean(jnp.abs(w1), axis=(1, 2, 3)).reshape(planes, 1)
    w1s = jnp.sign(w1).reshape(planes, cin)                   # f32 (x stays f32)

    w2 = params["w2"].astype(F32)
    sc2 = jnp.mean(jnp.abs(w2), axis=(1, 2, 3)).reshape(planes, 1)
    # fused-tap layout: column t*Ci + i  <->  sign(w2)[o, i, dh, dw] with t = dh*3 + dw
    w2flat = jnp.sign(w2).transpose(0, 2, 3, 1).reshape(planes, 9 * planes).astype(BF16)

    w3 = params["w3"].astype(F32)
    sc3 = jnp.mean(jnp.abs(w3), axis=(1, 2, 3)).reshape(cout, 1)
    w3s_f = jnp.sign(w3).reshape(cout, planes)
    w3s = w3s_f.astype(BF16)

    g1 = params["g1"].reshape(planes, 1).astype(F32)
    bt1 = params["b1"].reshape(planes, 1).astype(F32)
    g2 = params["g2"].reshape(planes, 1).astype(F32)
    bt2 = params["b2"].reshape(planes, 1).astype(F32)
    g3 = params["g3"].reshape(cout, 1).astype(F32)
    bt3 = params["b3"].reshape(cout, 1).astype(F32)

    # 3x3 tap validity masks (compile-time constants), tiled over the B_IMG images of a chunk.
    masks_np = np.zeros((9, 1, hw), np.float32)
    for dh in range(3):
        for dw in range(3):
            dy, dx = dh - 1, dw - 1
            m = np.zeros((h, w), np.float32)
            m[max(0, -dy):h - max(0, dy), max(0, -dx):w - max(0, dx)] = 1.0
            masks_np[dh * 3 + dw, 0, :] = m.reshape(-1)
    tap_masks = jnp.asarray(np.tile(masks_np, (1, 1, b_img)), dtype=BF16)

    grid = (g_steps,)
    cp = pltpu.CompilerParams(dimension_semantics=("parallel",),
                              vmem_limit_bytes=_vmem_limit_bytes())
    # TODO(synk): mark invariant operands with pipeline_mode=pl.Buffered(1) if very large
    # B_IMG blocks ever make their double-buffered copies matter on v7x's 64 MiB VMEM.

    # ---- K1: x statistics (sum + Gram) -> bn1 and shortcut-bn affines ----
    xsum_p, xgram_p = pl.pallas_call(
        _k1_stats,
        grid=grid,
        in_specs=[_chunk_spec(cin, lb)],
        out_specs=[_part_spec(cin, 1), _part_spec(cin, cin)],
        out_shape=[jax.ShapeDtypeStruct((g_steps, cin, 1), F32),
                   jax.ShapeDtypeStruct((g_steps, cin, cin), F32)],
        compiler_params=cp,
    )(x_cm)
    xsum, xgram = jnp.sum(xsum_p, axis=0), jnp.sum(xgram_p, axis=0)

    s1, ss1 = _lin_stats(w1s, xsum, xgram)
    a1, b1 = _bn_affine(s1, ss1, sc1, g1, bt1, count, eps)
    if has_sc_conv:
        wsc = params["wsc"].reshape(cout, cin).astype(F32)
        gsc = params["gsc"].reshape(cout, 1).astype(F32)
        btsc = params["bsc"].reshape(cout, 1).astype(F32)
        s_sc, ss_sc = _lin_stats(wsc, xsum, xgram)              # free from the same x Gram
        asc, bsc = _bn_affine(s_sc, ss_sc, jnp.ones_like(gsc), gsc, btsc, count, eps)

    # ---- K2: conv1 apply (-> bf16 signs) fused with conv2 (3x3) statistics ----
    y1s, s2_p, ss2_p = pl.pallas_call(
        functools.partial(_k2_apply1_stats2, width=w, mode=mode),
        grid=grid,
        in_specs=[_chunk_spec(cin, lb), _const_spec((planes, cin)),
                  _const_spec((planes, 1)), _const_spec((planes, 1)),
                  _const_spec((planes, 9 * planes)), _const_spec((9, 1, lb))],
        out_specs=[_chunk_spec(planes, lb), _part_spec(planes, 1), _part_spec(planes, 1)],
        out_shape=[jax.ShapeDtypeStruct((planes, L), BF16),
                   jax.ShapeDtypeStruct((g_steps, planes, 1), F32),
                   jax.ShapeDtypeStruct((g_steps, planes, 1), F32)],
        compiler_params=cp,
    )(x_cm, w1s, a1, b1, w2flat, tap_masks)
    a2, b2 = _bn_affine(jnp.sum(s2_p, axis=0), jnp.sum(ss2_p, axis=0),
                        sc2, g2, bt2, count, eps)

    # ---- K3: conv2 apply (-> bf16 signs) fused with y2 sum + Gram (bn3 statistics) ----
    y2s, ysum_p, ygram_p = pl.pallas_call(
        functools.partial(_k3_apply2_stats3, width=w, mode=mode),
        grid=grid,
        in_specs=[_chunk_spec(planes, lb), _const_spec((planes, 9 * planes)),
                  _const_spec((9, 1, lb)), _const_spec((planes, 1)),
                  _const_spec((planes, 1))],
        out_specs=[_chunk_spec(planes, lb), _part_spec(planes, 1),
                   _part_spec(planes, planes)],
        out_shape=[jax.ShapeDtypeStruct((planes, L), BF16),
                   jax.ShapeDtypeStruct((g_steps, planes, 1), F32),
                   jax.ShapeDtypeStruct((g_steps, planes, planes), F32)],
        compiler_params=cp,
    )(y1s, w2flat, tap_masks, a2, b2)
    s3, ss3 = _lin_stats(w3s_f, jnp.sum(ysum_p, axis=0), jnp.sum(ygram_p, axis=0))
    a3, b3 = _bn_affine(s3, ss3, sc3, g3, bt3, count, eps)

    # ---- K4: conv3 apply + shortcut apply + residual add (fully parallel over chunks) ----
    if has_sc_conv:
        out_cm = pl.pallas_call(
            functools.partial(_k4_final, has_sc_conv=True),
            grid=grid,
            in_specs=[_chunk_spec(planes, lb), _const_spec((cout, planes)),
                      _const_spec((cout, 1)), _const_spec((cout, 1)),
                      _chunk_spec(cin, lb), _const_spec((cout, cin)),
                      _const_spec((cout, 1)), _const_spec((cout, 1))],
            out_specs=_chunk_spec(cout, lb),
            out_shape=jax.ShapeDtypeStruct((cout, L), F32),
            compiler_params=cp,
        )(y2s, w3s, a3, b3, x_cm, wsc, asc, bsc)
    else:
        out_cm = pl.pallas_call(
            functools.partial(_k4_final, has_sc_conv=False),
            grid=grid,
            in_specs=[_chunk_spec(planes, lb), _const_spec((cout, planes)),
                      _const_spec((cout, 1)), _const_spec((cout, 1)),
                      _chunk_spec(cin, lb)],
            out_specs=_chunk_spec(cout, lb),
            out_shape=jax.ShapeDtypeStruct((cout, L), F32),
            compiler_params=cp,
        )(y2s, w3s, a3, b3, x_cm)

    return jnp.transpose(out_cm.reshape(cout, n, hw), (1, 0, 2)).reshape(n, cout, h, w)


def block_forward(x, params, *, stride=1, eps=EPS):
    """Forward of trailmet's MobileNetV2-BiReal `Block` (binary=True).  x: NCHW float32."""
    if stride != 1:
        # TODO(synk): stride=2 path (strided 3x3 conv, no residual add) not implemented.
        raise NotImplementedError("only stride=1 is implemented")
    return _block_forward_impl(x, params, mode=_shift_mode(), eps=eps)


# -----------------------------------------------------------------------------------------
# Pure-JAX reference (NCHW, lax.conv) for a correctness check
# -----------------------------------------------------------------------------------------
def binarize_weight(wt):
    """HardBinaryConv effective forward weight: per-out-channel mean(|W|) * sign(W)."""
    scale = jnp.mean(jnp.abs(wt), axis=(1, 2, 3), keepdims=True)
    return scale * jnp.sign(wt)


def block_forward_ref(x, params):
    def bn(y, gamma, beta):
        mean = jnp.mean(y, axis=(0, 2, 3), keepdims=True)
        var = jnp.mean(jnp.square(y - mean), axis=(0, 2, 3), keepdims=True)
        return (gamma.reshape(1, -1, 1, 1) * (y - mean) * jax.lax.rsqrt(var + EPS)
                + beta.reshape(1, -1, 1, 1))

    def conv(y, wt, padding=0):
        return jax.lax.conv_general_dilated(
            y, wt, (1, 1), [(padding, padding)] * 2,
            dimension_numbers=("NCHW", "OIHW", "NCHW"),
            precision=jax.lax.Precision.HIGHEST)

    out = _sign(bn(conv(x, binarize_weight(params["w1"])), params["g1"], params["b1"]))
    out = _sign(bn(conv(out, binarize_weight(params["w2"]), padding=1), params["g2"], params["b2"]))
    out = bn(conv(out, binarize_weight(params["w3"])), params["g3"], params["b3"])
    sc = bn(conv(x, params["wsc"]), params["gsc"], params["bsc"])
    return out + sc


# -----------------------------------------------------------------------------------------
if __name__ == "__main__":
    key = jax.random.PRNGKey(0)
    N, IN_PLANES, OUT_PLANES, EXPANSION, H, W = 2, 8, 16, 2, 16, 16
    PLANES = EXPANSION * IN_PLANES
    ks = jax.random.split(key, 13)

    x = jax.random.normal(ks[0], (N, IN_PLANES, H, W), jnp.float32)

    params = {
        # HardBinaryConv raw weights (module init is torch.rand*1e-3; symmetric uniform of
        # the same scale so sign(W) exercises both branches).
        "w1": jax.random.uniform(ks[1], (PLANES, IN_PLANES, 1, 1), jnp.float32, -1e-3, 1e-3),
        "w2": jax.random.uniform(ks[2], (PLANES, PLANES, 3, 3), jnp.float32, -1e-3, 1e-3),
        "w3": jax.random.uniform(ks[3], (OUT_PLANES, PLANES, 1, 1), jnp.float32, -1e-3, 1e-3),
        # Plain (non-binary) shortcut conv weight.
        "wsc": 0.1 * jax.random.normal(ks[4], (OUT_PLANES, IN_PLANES, 1, 1), jnp.float32),
        # BatchNorm affine params (randomized to exercise broadcasts).
        "g1": jax.random.uniform(ks[5], (PLANES,), jnp.float32, 0.5, 1.5),
        "b1": 0.1 * jax.random.normal(ks[6], (PLANES,), jnp.float32),
        "g2": jax.random.uniform(ks[7], (PLANES,), jnp.float32, 0.5, 1.5),
        "b2": 0.1 * jax.random.normal(ks[8], (PLANES,), jnp.float32),
        "g3": jax.random.uniform(ks[9], (OUT_PLANES,), jnp.float32, 0.5, 1.5),
        "b3": 0.1 * jax.random.normal(ks[10], (OUT_PLANES,), jnp.float32),
        "gsc": jax.random.uniform(ks[11], (OUT_PLANES,), jnp.float32, 0.5, 1.5),
        "bsc": 0.1 * jax.random.normal(ks[12], (OUT_PLANES,), jnp.float32),
    }

    out = jax.block_until_ready(block_forward(x, params, stride=1))
    ref = jax.block_until_ready(block_forward_ref(x, params))

    assert out.shape == (N, OUT_PLANES, H, W), out.shape
    max_diff = float(jnp.max(jnp.abs(out - ref)))
    if not jnp.allclose(out, ref, atol=1e-3, rtol=1e-3):
        raise AssertionError(f"Pallas output mismatch vs reference, max abs diff = {max_diff}")
    print("KERNEL_OK")
</pallas_src>

<mosaic_0001>
module attributes {stable_mosaic.version = 11 : i64} {
  func.func @_k1_stats(%arg0: i32, %arg1: memref<8x512xf32, #tpu.memory_space<vmem>>, %arg2: memref<1x8x1xf32, #tpu.memory_space<vmem>>, %arg3: memref<1x8x8xf32, #tpu.memory_space<vmem>>) attributes {dimension_semantics = [#tpu.dimension_semantics<parallel>], iteration_bounds = array<i64: 1>, scalar_prefetch = 0 : i64, scratch_operands = 0 : i64, tpu.core_type = #tpu.core_type<tc>, window_params = [{transform_indices = @transform_0, window_bounds = array<i64: 8, 512>}, {transform_indices = @transform_1, window_bounds = array<i64: 1, 8, 1>}, {transform_indices = @transform_2, window_bounds = array<i64: 1, 8, 8>}]} {
    %c0 = arith.constant 0 : index
    %c0_0 = arith.constant 0 : index
    %0 = vector.load %arg1[%c0, %c0_0] : memref<8x512xf32, #tpu.memory_space<vmem>>, vector<8x512xf32>
    %cst = arith.constant dense<0.000000e+00> : vector<8xf32>
    %1 = vector.multi_reduction <add>, %0, %cst [1] : vector<8x512xf32> to vector<8xf32>
    %2 = vector.shape_cast %1 : vector<8xf32> to vector<8x1xf32>
    %c0_1 = arith.constant 0 : index
    %c0_2 = arith.constant 0 : index
    %c0_3 = arith.constant 0 : index
    %3 = vector.load %arg2[%c0_1, %c0_2, %c0_3] : memref<1x8x1xf32, #tpu.memory_space<vmem>>, vector<1x8x1xf32>
    %4 = vector.shape_cast %3 : vector<1x8x1xf32> to vector<8x1xf32>
    %5 = vector.shape_cast %2 : vector<8x1xf32> to vector<1x8x1xf32>
    tpu.vector_store %arg2[%c0_1, %c0_2, %c0_3], %5 {strides = array<i32>} : memref<1x8x1xf32, #tpu.memory_space<vmem>>, vector<1x8x1xf32>,
    %cst_4 = arith.constant dense<0.000000e+00> : vector<8x8xf32>
    %6 = tpu.matmul %0, %0, %cst_4 {dimension_numbers = #tpu.dot_dimension_numbers<[1], [1], [0], [0], [0, 0, 1, 0], [], []>} : vector<8x512xf32>, vector<8x512xf32>, vector<8x8xf32> -> vector<8x8xf32>
    %c0_5 = arith.constant 0 : index
    %c0_6 = arith.constant 0 : index
    %c0_7 = arith.constant 0 : index
    %7 = vector.load %arg3[%c0_5, %c0_6, %c0_7] : memref<1x8x8xf32, #tpu.memory_space<vmem>>, vector<1x8x8xf32>
    %8 = vector.shape_cast %7 : vector<1x8x8xf32> to vector<8x8xf32>
    %9 = vector.shape_cast %6 : vector<8x8xf32> to vector<1x8x8xf32>
    tpu.vector_store %arg3[%c0_5, %c0_6, %c0_7], %9 {strides = array<i32>} : memref<1x8x8xf32, #tpu.memory_space<vmem>>, vector<1x8x8xf32>,
    return
  }
  func.func @transform_0(%arg0: i32) -> (i32, i32) {
    %c0_i32 = arith.constant 0 : i32
    %c0_i32_0 = arith.constant 0 : i32
    return %c0_i32, %arg0 : i32, i32
  }
  func.func @transform_1(%arg0: i32) -> (i32, i32, i32) {
    %c0_i32 = arith.constant 0 : i32
    %c0_i32_0 = arith.constant 0 : i32
    %c0_i32_1 = arith.constant 0 : i32
    return %arg0, %c0_i32, %c0_i32_0 : i32, i32, i32
  }
  func.func @transform_2(%arg0: i32) -> (i32, i32, i32) {
    %c0_i32 = arith.constant 0 : i32
    %c0_i32_0 = arith.constant 0 : i32
    %c0_i32_1 = arith.constant 0 : i32
    return %arg0, %c0_i32, %c0_i32_0 : i32, i32, i32
  }
}

module attributes {stable_mosaic.version = 11 : i64} {
  func.func @_k2_apply1_stats2(%arg0: i32, %arg1: memref<8x512xf32, #tpu.memory_space<vmem>>, %arg2: memref<16x8xf32, #tpu.memory_space<vmem>>, %arg3: memref<16x1xf32, #tpu.memory_space<vmem>>, %arg4: memref<16x1xf32, #tpu.memory_space<vmem>>, %arg5: memref<16x144xbf16, #tpu.memory_space<vmem>>, %arg6: memref<9x1x512xbf16, #tpu.memory_space<vmem>>, %arg7: memref<16x512xbf16, #tpu.memory_space<vmem>>, %arg8: memref<1x16x1xf32, #tpu.memory_space<vmem>>, %arg9: memref<1x16x1xf32, #tpu.memory_space<vmem>>) attributes {dimension_semantics = [#tpu.dimension_semantics<parallel>], iteration_bounds = array<i64: 1>, scalar_prefetch = 0 : i64, scratch_operands = 0 : i64, tpu.core_type = #tpu.core_type<tc>, window_params = [{transform_indices = @transform_0, window_bounds = array<i64: 8, 512>}, {pipeline_mode = #tpu.pipeline_mode<synchronous>, transform_indices = @transform_1, window_bounds = array<i64: 16, 8>}, {pipeline_mode = #tpu.pipeline_mode<synchronous>, transform_indices = @transform_2, window_bounds = array<i64: 16, 1>}, {pipeline_mode = #tpu.pipeline_mode<synchronous>, transform_indices = @transform_3, window_bounds = array<i64: 16, 1>}, {pipeline_mode = #tpu.pipeline_mode<synchronous>, transform_indices = @transform_4, window_bounds = array<i64: 16, 144>}, {pipeline_mode = #tpu.pipeline_mode<synchronous>, transform_indices = @transform_5, window_bounds = array<i64: 9, 1, 512>}, {transform_indices = @transform_6, window_bounds = array<i64: 16, 512>}, {transform_indices = @transform_7, window_bounds = array<i64: 1, 16, 1>}, {transform_indices = @transform_8, window_bounds = array<i64: 1, 16, 1>}]} {
    %c0 = arith.constant 0 : index
    %c0_0 = arith.constant 0 : index
    %0 = vector.load %arg2[%c0, %c0_0] : memref<16x8xf32, #tpu.memory_space<vmem>>, vector<16x8xf32>
    %c0_1 = arith.constant 0 : index
    %c0_2 = arith.constant 0 : index
    %1 = vector.load %arg1[%c0_1, %c0_2] : memref<8x512xf32, #tpu.memory_space<vmem>>, vector<8x512xf32>
    %cst = arith.constant dense<0.000000e+00> : vector<16x512xf32>
    %2 = tpu.matmul %0, %1, %cst {dimension_numbers = #tpu.dot_dimension_numbers<[1], [0], [0], [1], [0, 0, 1, 1], [], []>} : vector<16x8xf32>, vector<8x512xf32>, vector<16x512xf32> -> vector<16x512xf32>
    %c0_3 = arith.constant 0 : index
    %c0_4 = arith.constant 0 : index
    %3 = vector.load %arg3[%c0_3, %c0_4] : memref<16x1xf32, #tpu.memory_space<vmem>>, vector<16x1xf32>
    %4 = vector.broadcast %3 : vector<16x1xf32> to vector<16x512xf32>
    %5 = arith.mulf %4, %2 : vector<16x512xf32>
    %c0_5 = arith.constant 0 : index
    %c0_6 = arith.constant 0 : index
    %6 = vector.load %arg4[%c0_5, %c0_6] : memref<16x1xf32, #tpu.memory_space<vmem>>, vector<16x1xf32>
    %7 = vector.broadcast %6 : vector<16x1xf32> to vector<16x512xf32>
    %8 = arith.addf %5, %7 : vector<16x512xf32>
    %cst_7 = arith.constant 0.000000e+00 : f32
    %9 = vector.broadcast %cst_7 : f32 to vector<16x512xf32>
    %10 = arith.cmpf ogt, %8, %9 : vector<16x512xf32>
    %cst_8 = arith.constant 0.000000e+00 : f32
    %11 = vector.broadcast %cst_8 : f32 to vector<16x512xf32>
    %12 = arith.cmpf olt, %8, %11 : vector<16x512xf32>
    %cst_9 = arith.constant -1.000000e+00 : f32
    %cst_10 = arith.constant 0.000000e+00 : f32
    %13 = vector.broadcast %cst_9 : f32 to vector<16x512xf32>
    %14 = vector.broadcast %cst_10 : f32 to vector<16x512xf32>
    %15 = arith.select %12, %13, %14 : vector<16x512xi1>, vector<16x512xf32>
    %cst_11 = arith.constant 1.000000e+00 : f32
    %16 = vector.broadcast %cst_11 : f32 to vector<16x512xf32>
    %17 = arith.select %10, %16, %15 : vector<16x512xi1>, vector<16x512xf32>
    %18 = arith.truncf %17 : vector<16x512xf32> to vector<16x512xbf16>
    %c0_12 = arith.constant 0 : index
    %c0_13 = arith.constant 0 : index
    %19 = vector.load %arg7[%c0_12, %c0_13] : memref<16x512xbf16, #tpu.memory_space<vmem>>, vector<16x512xbf16>
    tpu.vector_store %arg7[%c0_12, %c0_13], %18 {strides = array<i32>} : memref<16x512xbf16, #tpu.memory_space<vmem>>, vector<16x512xbf16>,
    %20 = vector.extract_strided_slice %18 {offsets = [0, 495], sizes = [16, 17], strides = [1, 1]} : vector<16x512xbf16> to vector<16x17xbf16>
    %21 = vector.extract_strided_slice %18 {offsets = [0, 0], sizes = [16, 495], strides = [1, 1]} : vector<16x512xbf16> to vector<16x495xbf16>
    %22 = tpu.concatenate %20, %21 in 1 : vector<16x17xbf16>, vector<16x495xbf16> -> vector<16x512xbf16>
    %c0_14 = arith.constant 0 : index
    %c0_15 = arith.constant 0 : index
    %c0_16 = arith.constant 0 : index
    %23 = vector.load %arg6[%c0_14, %c0_15, %c0_16] : memref<9x1x512xbf16, #tpu.memory_space<vmem>>, vector<1x1x512xbf16>
    %24 = vector.shape_cast %23 : vector<1x1x512xbf16> to vector<1x512xbf16>
    %25 = vector.broadcast %24 : vector<1x512xbf16> to vector<16x512xbf16>
    %26 = arith.mulf %22, %25 : vector<16x512xbf16>
    %27 = vector.extract_strided_slice %18 {offsets = [0, 496], sizes = [16, 16], strides = [1, 1]} : vector<16x512xbf16> to vector<16x16xbf16>
    %28 = vector.extract_strided_slice %18 {offsets = [0, 0], sizes = [16, 496], strides = [1, 1]} : vector<16x512xbf16> to vector<16x496xbf16>
    %29 = tpu.concatenate %27, %28 in 1 : vector<16x16xbf16>, vector<16x496xbf16> -> vector<16x512xbf16>
    %c1 = arith.constant 1 : index
    %c0_17 = arith.constant 0 : index
    %c0_18 = arith.constant 0 : index
    %30 = vector.load %arg6[%c1, %c0_17, %c0_18] : memref<9x1x512xbf16, #tpu.memory_space<vmem>>, vector<1x1x512xbf16>
    %31 = vector.shape_cast %30 : vector<1x1x512xbf16> to vector<1x512xbf16>
    %32 = vector.broadcast %31 : vector<1x512xbf16> to vector<16x512xbf16>
    %33 = arith.mulf %29, %32 : vector<16x512xbf16>
    %34 = vector.extract_strided_slice %18 {offsets = [0, 497], sizes = [16, 15], strides = [1, 1]} : vector<16x512xbf16> to vector<16x15xbf16>
    %35 = vector.extract_strided_slice %18 {offsets = [0, 0], sizes = [16, 497], strides = [1, 1]} : vector<16x512xbf16> to vector<16x497xbf16>
    %36 = tpu.concatenate %34, %35 in 1 : vector<16x15xbf16>, vector<16x497xbf16> -> vector<16x512xbf16>
    %c2 = arith.constant 2 : index
    %c0_19 = arith.constant 0 : index
    %c0_20 = arith.constant 0 : index
    %37 = vector.load %arg6[%c2, %c0_19, %c0_20] : memref<9x1x512xbf16, #tpu.memory_space<vmem>>, vector<1x1x512xbf16>
    %38 = vector.shape_cast %37 : vector<1x1x512xbf16> to vector<1x512xbf16>
    %39 = vector.broadcast %38 : vector<1x512xbf16> to vector<16x512xbf16>
    %40 = arith.mulf %36, %39 : vector<16x512xbf16>
    %41 = vector.extract_strided_slice %18 {offsets = [0, 511], sizes = [16, 1], strides = [1, 1]} : vector<16x512xbf16> to vector<16x1xbf16>
    %42 = vector.extract_strided_slice %18 {offsets = [0, 0], sizes = [16, 511], strides = [1, 1]} : vector<16x512xbf16> to vector<16x511xbf16>
    %43 = tpu.concatenate %41, %42 in 1 : vector<16x1xbf16>, vector<16x511xbf16> -> vector<16x512xbf16>
    %c3 = arith.constant 3 : index
    %c0_21 = arith.constant 0 : index
    %c0_22 = arith.constant 0 : index
    %44 = vector.load %arg6[%c3, %c0_21, %c0_22] : memref<9x1x512xbf16, #tpu.memory_space<vmem>>, vector<1x1x512xbf16>
    %45 = vector.shape_cast %44 : vector<1x1x512xbf16> to vector<1x512xbf16>
    %46 = vector.broadcast %45 : vector<1x512xbf16> to vector<16x512xbf16>
    %47 = arith.mulf %43, %46 : vector<16x512xbf16>
    %48 = vector.extract_strided_slice %18 {offsets = [0, 1], sizes = [16, 511], strides = [1, 1]} : vector<16x512xbf16> to vector<16x511xbf16>
    %49 = vector.extract_strided_slice %18 {offsets = [0, 0], sizes = [16, 1], strides = [1, 1]} : vector<16x512xbf16> to vector<16x1xbf16>
    %50 = tpu.concatenate %48, %49 in 1 : vector<16x511xbf16>, vector<16x1xbf16> -> vector<16x512xbf16>
    %c5 = arith.constant 5 : index
    %c0_23 = arith.constant 0 : index
    %c0_24 = arith.constant 0 : index
    %51 = vector.load %arg6[%c5, %c0_23, %c0_24] : memref<9x1x512xbf16, #tpu.memory_space<vmem>>, vector<1x1x512xbf16>
    %52 = vector.shape_cast %51 : vector<1x1x512xbf16> to vector<1x512xbf16>
    %53 = vector.broadcast %52 : vector<1x512xbf16> to vector<16x512xbf16>
    %54 = arith.mulf %50, %53 : vector<16x512xbf16>
    %55 = vector.extract_strided_slice %18 {offsets = [0, 15], sizes = [16, 497], strides = [1, 1]} : vector<16x512xbf16> to vector<16x497xbf16>
    %56 = vector.extract_strided_slice %18 {offsets = [0, 0], sizes = [16, 15], strides = [1, 1]} : vector<16x512xbf16> to vector<16x15xbf16>
    %57 = tpu.concatenate %55, %56 in 1 : vector<16x497xbf16>, vector<16x15xbf16> -> vector<16x512xbf16>
    %c6 = arith.constant 6 : index
    %c0_25 = arith.constant 0 : index
    %c0_26 = arith.constant 0 : index
    %58 = vector.load %arg6[%c6, %c0_25, %c0_26] : memref<9x1x512xbf16, #tpu.memory_space<vmem>>, vector<1x1x512xbf16>
    %59 = vector.shape_cast %58 : vector<1x1x512xbf16> to vector<1x512xbf16>
    %60 = vector.broadcast %59 : vector<1x512xbf16> to vector<16x512xbf16>
    %61 = arith.mulf %57, %60 : vector<16x512xbf16>
    %62 = vector.extract_strided_slice %18 {offsets = [0, 16], sizes = [16, 496], strides = [1, 1]} : vector<16x512xbf16> to vector<16x496xbf16>
    %63 = vector.extract_strided_slice %18 {offsets = [0, 0], sizes = [16, 16], strides = [1, 1]} : vector<16x512xbf16> to vector<16x16xbf16>
    %64 = tpu.concatenate %62, %63 in 1 : vector<16x496xbf16>, vector<16x16xbf16> -> vector<16x512xbf16>
    %c7 = arith.constant 7 : index
    %c0_27 = arith.constant 0 : index
    %c0_28 = arith.constant 0 : index
    %65 = vector.load %arg6[%c7, %c0_27, %c0_28] : memref<9x1x512xbf16, #tpu.memory_space<vmem>>, vector<1x1x512xbf16>
    %66 = vector.shape_cast %65 : vector<1x1x512xbf16> to vector<1x512xbf16>
    %67 = vector.broadcast %66 : vector<1x512xbf16> to vector<16x512xbf16>
    %68 = arith.mulf %64, %67 : vector<16x512xbf16>
    %69 = vector.extract_strided_slice %18 {offsets = [0, 17], sizes = [16, 495], strides = [1, 1]} : vector<16x512xbf16> to vector<16x495xbf16>
    %70 = vector.extract_strided_slice %18 {offsets = [0, 0], sizes = [16, 17], strides = [1, 1]} : vector<16x512xbf16> to vector<16x17xbf16>
    %71 = tpu.concatenate %69, %70 in 1 : vector<16x495xbf16>, vector<16x17xbf16> -> vector<16x512xbf16>
    %c8 = arith.constant 8 : index
    %c0_29 = arith.constant 0 : index
    %c0_30 = arith.constant 0 : index
    %72 = vector.load %arg6[%c8, %c0_29, %c0_30] : memref<9x1x512xbf16, #tpu.memory_space<vmem>>, vector<1x1x512xbf16>
    %73 = vector.shape_cast %72 : vector<1x1x512xbf16> to vector<1x512xbf16>
    %74 = vector.broadcast %73 : vector<1x512xbf16> to vector<16x512xbf16>
    %75 = arith.mulf %71, %74 : vector<16x512xbf16>
    %76 = tpu.concatenate %26, %33, %40, %47, %18, %54, %61, %68, %75 in 0 : vector<16x512xbf16>, vector<16x512xbf16>, vector<16x512xbf16>, vector<16x512xbf16>, vector<16x512xbf16>, vector<16x512xbf16>, vector<16x512xbf16>, vector<16x512xbf16>, vector<16x512xbf16> -> vector<144x512xbf16>
    %c0_31 = arith.constant 0 : index
    %c0_32 = arith.constant 0 : index
    %77 = vector.load %arg5[%c0_31, %c0_32] : memref<16x144xbf16, #tpu.memory_space<vmem>>, vector<16x144xbf16>
    %cst_33 = arith.constant dense<0.000000e+00> : vector<16x512xf32>
    %78 = tpu.matmul %77, %76, %cst_33 {dimension_numbers = #tpu.dot_dimension_numbers<[1], [0], [0], [1], [0, 0, 1, 1], [], []>} : vector<16x144xbf16>, vector<144x512xbf16>, vector<16x512xf32> -> vector<16x512xf32>
    %cst_34 = arith.constant dense<0.000000e+00> : vector<16xf32>
    %79 = vector.multi_reduction <add>, %78, %cst_34 [1] : vector<16x512xf32> to vector<16xf32>
    %80 = vector.shape_cast %79 : vector<16xf32> to vector<16x1xf32>
    %c0_35 = arith.constant 0 : index
    %c0_36 = arith.constant 0 : index
    %c0_37 = arith.constant 0 : index
    %81 = vector.load %arg8[%c0_35, %c0_36, %c0_37] : memref<1x16x1xf32, #tpu.memory_space<vmem>>, vector<1x16x1xf32>
    %82 = vector.shape_cast %81 : vector<1x16x1xf32> to vector<16x1xf32>
    %83 = vector.shape_cast %80 : vector<16x1xf32> to vector<1x16x1xf32>
    tpu.vector_store %arg8[%c0_35, %c0_36, %c0_37], %83 {strides = array<i32>} : memref<1x16x1xf32, #tpu.memory_space<vmem>>, vector<1x16x1xf32>,
    %84 = arith.mulf %78, %78 : vector<16x512xf32>
    %cst_38 = arith.constant dense<0.000000e+00> : vector<16xf32>
    %85 = vector.multi_reduction <add>, %84, %cst_38 [1] : vector<16x512xf32> to vector<16xf32>
    %86 = vector.shape_cast %85 : vector<16xf32> to vector<16x1xf32>
    %c0_39 = arith.constant 0 : index
    %c0_40 = arith.constant 0 : index
    %c0_41 = arith.constant 0 : index
    %87 = vector.load %arg9[%c0_39, %c0_40, %c0_41] : memref<1x16x1xf32, #tpu.memory_space<vmem>>, vector<1x16x1xf32>
    %88 = vector.shape_cast %87 : vector<1x16x1xf32> to vector<16x1xf32>
    %89 = vector.shape_cast %86 : vector<16x1xf32> to vector<1x16x1xf32>
    tpu.vector_store %arg9[%c0_39, %c0_40, %c0_41], %89 {strides = array<i32>} : memref<1x16x1xf32, #tpu.memory_space<vmem>>, vector<1x16x1xf32>,
    return
  }
  func.func @transform_0(%arg0: i32) -> (i32, i32) {
    %c0_i32 = arith.constant 0 : i32
    %c0_i32_0 = arith.constant 0 : i32
    return %c0_i32, %arg0 : i32, i32
  }
  func.func @transform_1(%arg0: i32) -> (i32, i32) {
    %c0_i32 = arith.constant 0 : i32
    %c0_i32_0 = arith.constant 0 : i32
    %c0_i32_1 = arith.constant 0 : i32
    return %c0_i32, %c0_i32_0 : i32, i32
  }
  func.func @transform_2(%arg0: i32) -> (i32, i32) {
    %c0_i32 = arith.constant 0 : i32
    %c0_i32_0 = arith.constant 0 : i32
    %c0_i32_1 = arith.constant 0 : i32
    return %c0_i32, %c0_i32_0 : i32, i32
  }
  func.func @transform_3(%arg0: i32) -> (i32, i32) {
    %c0_i32 = arith.constant 0 : i32
    %c0_i32_0 = arith.constant 0 : i32
    %c0_i32_1 = arith.constant 0 : i32
    return %c0_i32, %c0_i32_0 : i32, i32
  }
  func.func @transform_4(%arg0: i32) -> (i32, i32) {
    %c0_i32 = arith.constant 0 : i32
    %c0_i32_0 = arith.constant 0 : i32
    %c0_i32_1 = arith.constant 0 : i32
    return %c0_i32, %c0_i32_0 : i32, i32
  }
  func.func @transform_5(%arg0: i32) -> (i32, i32, i32) {
    %c0_i32 = arith.constant 0 : i32
    %c0_i32_0 = arith.constant 0 : i32
    %c0_i32_1 = arith.constant 0 : i32
    %c0_i32_2 = arith.constant 0 : i32
    return %c0_i32, %c0_i32_0, %c0_i32_1 : i32, i32, i32
  }
  func.func @transform_6(%arg0: i32) -> (i32, i32) {
    %c0_i32 = arith.constant 0 : i32
    %c0_i32_0 = arith.constant 0 : i32
    return %c0_i32, %arg0 : i32, i32
  }
  func.func @transform_7(%arg0: i32) -> (i32, i32, i32) {
    %c0_i32 = arith.constant 0 : i32
    %c0_i32_0 = arith.constant 0 : i32
    %c0_i32_1 = arith.constant 0 : i32
    return %arg0, %c0_i32, %c0_i32_0 : i32, i32, i32
  }
  func.func @transform_8(%arg0: i32) -> (i32, i32, i32) {
    %c0_i32 = arith.constant 0 : i32
    %c0_i32_0 = arith.constant 0 : i32
    %c0_i32_1 = arith.constant 0 : i32
    return %arg0, %c0_i32, %c0_i32_0 : i32, i32, i32
  }
}

module attributes {stable_mosaic.version = 11 : i64} {
  func.func @_k3_apply2_stats3(%arg0: i32, %arg1: memref<16x512xbf16, #tpu.memory_space<vmem>>, %arg2: memref<16x144xbf16, #tpu.memory_space<vmem>>, %arg3: memref<9x1x512xbf16, #tpu.memory_space<vmem>>, %arg4: memref<16x1xf32, #tpu.memory_space<vmem>>, %arg5: memref<16x1xf32, #tpu.memory_space<vmem>>, %arg6: memref<16x512xbf16, #tpu.memory_space<vmem>>, %arg7: memref<1x16x1xf32, #tpu.memory_space<vmem>>, %arg8: memref<1x16x16xf32, #tpu.memory_space<vmem>>) attributes {dimension_semantics = [#tpu.dimension_semantics<parallel>], iteration_bounds = array<i64: 1>, scalar_prefetch = 0 : i64, scratch_operands = 0 : i64, tpu.core_type = #tpu.core_type<tc>, window_params = [{transform_indices = @transform_0, window_bounds = array<i64: 16, 512>}, {pipeline_mode = #tpu.pipeline_mode<synchronous>, transform_indices = @transform_1, window_bounds = array<i64: 16, 144>}, {pipeline_mode = #tpu.pipeline_mode<synchronous>, transform_indices = @transform_2, window_bounds = array<i64: 9, 1, 512>}, {pipeline_mode = #tpu.pipeline_mode<synchronous>, transform_indices = @transform_3, window_bounds = array<i64: 16, 1>}, {pipeline_mode = #tpu.pipeline_mode<synchronous>, transform_indices = @transform_4, window_bounds = array<i64: 16, 1>}, {transform_indices = @transform_5, window_bounds = array<i64: 16, 512>}, {transform_indices = @transform_6, window_bounds = array<i64: 1, 16, 1>}, {transform_indices = @transform_7, window_bounds = array<i64: 1, 16, 16>}]} {
    %c0 = arith.constant 0 : index
    %c0_0 = arith.constant 0 : index
    %0 = vector.load %arg1[%c0, %c0_0] : memref<16x512xbf16, #tpu.memory_space<vmem>>, vector<16x512xbf16>
    %1 = vector.extract_strided_slice %0 {offsets = [0, 495], sizes = [16, 17], strides = [1, 1]} : vector<16x512xbf16> to vector<16x17xbf16>
    %2 = vector.extract_strided_slice %0 {offsets = [0, 0], sizes = [16, 495], strides = [1, 1]} : vector<16x512xbf16> to vector<16x495xbf16>
    %3 = tpu.concatenate %1, %2 in 1 : vector<16x17xbf16>, vector<16x495xbf16> -> vector<16x512xbf16>
    %c0_1 = arith.constant 0 : index
    %c0_2 = arith.constant 0 : index
    %c0_3 = arith.constant 0 : index
    %4 = vector.load %arg3[%c0_1, %c0_2, %c0_3] : memref<9x1x512xbf16, #tpu.memory_space<vmem>>, vector<1x1x512xbf16>
    %5 = vector.shape_cast %4 : vector<1x1x512xbf16> to vector<1x512xbf16>
    %6 = vector.broadcast %5 : vector<1x512xbf16> to vector<16x512xbf16>
    %7 = arith.mulf %3, %6 : vector<16x512xbf16>
    %8 = vector.extract_strided_slice %0 {offsets = [0, 496], sizes = [16, 16], strides = [1, 1]} : vector<16x512xbf16> to vector<16x16xbf16>
    %9 = vector.extract_strided_slice %0 {offsets = [0, 0], sizes = [16, 496], strides = [1, 1]} : vector<16x512xbf16> to vector<16x496xbf16>
    %10 = tpu.concatenate %8, %9 in 1 : vector<16x16xbf16>, vector<16x496xbf16> -> vector<16x512xbf16>
    %c1 = arith.constant 1 : index
    %c0_4 = arith.constant 0 : index
    %c0_5 = arith.constant 0 : index
    %11 = vector.load %arg3[%c1, %c0_4, %c0_5] : memref<9x1x512xbf16, #tpu.memory_space<vmem>>, vector<1x1x512xbf16>
    %12 = vector.shape_cast %11 : vector<1x1x512xbf16> to vector<1x512xbf16>
    %13 = vector.broadcast %12 : vector<1x512xbf16> to vector<16x512xbf16>
    %14 = arith.mulf %10, %13 : vector<16x512xbf16>
    %15 = vector.extract_strided_slice %0 {offsets = [0, 497], sizes = [16, 15], strides = [1, 1]} : vector<16x512xbf16> to vector<16x15xbf16>
    %16 = vector.extract_strided_slice %0 {offsets = [0, 0], sizes = [16, 497], strides = [1, 1]} : vector<16x512xbf16> to vector<16x497xbf16>
    %17 = tpu.concatenate %15, %16 in 1 : vector<16x15xbf16>, vector<16x497xbf16> -> vector<16x512xbf16>
    %c2 = arith.constant 2 : index
    %c0_6 = arith.constant 0 : index
    %c0_7 = arith.constant 0 : index
    %18 = vector.load %arg3[%c2, %c0_6, %c0_7] : memref<9x1x512xbf16, #tpu.memory_space<vmem>>, vector<1x1x512xbf16>
    %19 = vector.shape_cast %18 : vector<1x1x512xbf16> to vector<1x512xbf16>
    %20 = vector.broadcast %19 : vector<1x512xbf16> to vector<16x512xbf16>
    %21 = arith.mulf %17, %20 : vector<16x512xbf16>
    %22 = vector.extract_strided_slice %0 {offsets = [0, 511], sizes = [16, 1], strides = [1, 1]} : vector<16x512xbf16> to vector<16x1xbf16>
    %23 = vector.extract_strided_slice %0 {offsets = [0, 0], sizes = [16, 511], strides = [1, 1]} : vector<16x512xbf16> to vector<16x511xbf16>
    %24 = tpu.concatenate %22, %23 in 1 : vector<16x1xbf16>, vector<16x511xbf16> -> vector<16x512xbf16>
    %c3 = arith.constant 3 : index
    %c0_8 = arith.constant 0 : index
    %c0_9 = arith.constant 0 : index
    %25 = vector.load %arg3[%c3, %c0_8, %c0_9] : memref<9x1x512xbf16, #tpu.memory_space<vmem>>, vector<1x1x512xbf16>
    %26 = vector.shape_cast %25 : vector<1x1x512xbf16> to vector<1x512xbf16>
    %27 = vector.broadcast %26 : vector<1x512xbf16> to vector<16x512xbf16>
    %28 = arith.mulf %24, %27 : vector<16x512xbf16>
    %29 = vector.extract_strided_slice %0 {offsets = [0, 1], sizes = [16, 511], strides = [1, 1]} : vector<16x512xbf16> to vector<16x511xbf16>
    %30 = vector.extract_strided_slice %0 {offsets = [0, 0], sizes = [16, 1], strides = [1, 1]} : vector<16x512xbf16> to vector<16x1xbf16>
    %31 = tpu.concatenate %29, %30 in 1 : vector<16x511xbf16>, vector<16x1xbf16> -> vector<16x512xbf16>
    %c5 = arith.constant 5 : index
    %c0_10 = arith.constant 0 : index
    %c0_11 = arith.constant 0 : index
    %32 = vector.load %arg3[%c5, %c0_10, %c0_11] : memref<9x1x512xbf16, #tpu.memory_space<vmem>>, vector<1x1x512xbf16>
    %33 = vector.shape_cast %32 : vector<1x1x512xbf16> to vector<1x512xbf16>
    %34 = vector.broadcast %33 : vector<1x512xbf16> to vector<16x512xbf16>
    %35 = arith.mulf %31, %34 : vector<16x512xbf16>
    %36 = vector.extract_strided_slice %0 {offsets = [0, 15], sizes = [16, 497], strides = [1, 1]} : vector<16x512xbf16> to vector<16x497xbf16>
    %37 = vector.extract_strided_slice %0 {offsets = [0, 0], sizes = [16, 15], strides = [1, 1]} : vector<16x512xbf16> to vector<16x15xbf16>
    %38 = tpu.concatenate %36, %37 in 1 : vector<16x497xbf16>, vector<16x15xbf16> -> vector<16x512xbf16>
    %c6 = arith.constant 6 : index
    %c0_12 = arith.constant 0 : index
    %c0_13 = arith.constant 0 : index
    %39 = vector.load %arg3[%c6, %c0_12, %c0_13] : memref<9x1x512xbf16, #tpu.memory_space<vmem>>, vector<1x1x512xbf16>
    %40 = vector.shape_cast %39 : vector<1x1x512xbf16> to vector<1x512xbf16>
    %41 = vector.broadcast %40 : vector<1x512xbf16> to vector<16x512xbf16>
    %42 = arith.mulf %38, %41 : vector<16x512xbf16>
    %43 = vector.extract_strided_slice %0 {offsets = [0, 16], sizes = [16, 496], strides = [1, 1]} : vector<16x512xbf16> to vector<16x496xbf16>
    %44 = vector.extract_strided_slice %0 {offsets = [0, 0], sizes = [16, 16], strides = [1, 1]} : vector<16x512xbf16> to vector<16x16xbf16>
    %45 = tpu.concatenate %43, %44 in 1 : vector<16x496xbf16>, vector<16x16xbf16> -> vector<16x512xbf16>
    %c7 = arith.constant 7 : index
    %c0_14 = arith.constant 0 : index
    %c0_15 = arith.constant 0 : index
    %46 = vector.load %arg3[%c7, %c0_14, %c0_15] : memref<9x1x512xbf16, #tpu.memory_space<vmem>>, vector<1x1x512xbf16>
    %47 = vector.shape_cast %46 : vector<1x1x512xbf16> to vector<1x512xbf16>
    %48 = vector.broadcast %47 : vector<1x512xbf16> to vector<16x512xbf16>
    %49 = arith.mulf %45, %48 : vector<16x512xbf16>
    %50 = vector.extract_strided_slice %0 {offsets = [0, 17], sizes = [16, 495], strides = [1, 1]} : vector<16x512xbf16> to vector<16x495xbf16>
    %51 = vector.extract_strided_slice %0 {offsets = [0, 0], sizes = [16, 17], strides = [1, 1]} : vector<16x512xbf16> to vector<16x17xbf16>
    %52 = tpu.concatenate %50, %51 in 1 : vector<16x495xbf16>, vector<16x17xbf16> -> vector<16x512xbf16>
    %c8 = arith.constant 8 : index
    %c0_16 = arith.constant 0 : index
    %c0_17 = arith.constant 0 : index
    %53 = vector.load %arg3[%c8, %c0_16, %c0_17] : memref<9x1x512xbf16, #tpu.memory_space<vmem>>, vector<1x1x512xbf16>
    %54 = vector.shape_cast %53 : vector<1x1x512xbf16> to vector<1x512xbf16>
    %55 = vector.broadcast %54 : vector<1x512xbf16> to vector<16x512xbf16>
    %56 = arith.mulf %52, %55 : vector<16x512xbf16>
    %57 = tpu.concatenate %7, %14, %21, %28, %0, %35, %42, %49, %56 in 0 : vector<16x512xbf16>, vector<16x512xbf16>, vector<16x512xbf16>, vector<16x512xbf16>, vector<16x512xbf16>, vector<16x512xbf16>, vector<16x512xbf16>, vector<16x512xbf16>, vector<16x512xbf16> -> vector<144x512xbf16>
    %c0_18 = arith.constant 0 : index
    %c0_19 = arith.constant 0 : index
    %58 = vector.load %arg2[%c0_18, %c0_19] : memref<16x144xbf16, #tpu.memory_space<vmem>>, vector<16x144xbf16>
    %cst = arith.constant dense<0.000000e+00> : vector<16x512xf32>
    %59 = tpu.matmul %58, %57, %cst {dimension_numbers = #tpu.dot_dimension_numbers<[1], [0], [0], [1], [0, 0, 1, 1], [], []>} : vector<16x144xbf16>, vector<144x512xbf16>, vector<16x512xf32> -> vector<16x512xf32>
    %c0_20 = arith.constant 0 : index
    %c0_21 = arith.constant 0 : index
    %60 = vector.load %arg4[%c0_20, %c0_21] : memref<16x1xf32, #tpu.memory_space<vmem>>, vector<16x1xf32>
    %61 = vector.broadcast %60 : vector<16x1xf32> to vector<16x512xf32>
    %62 = arith.mulf %61, %59 : vector<16x512xf32>
    %c0_22 = arith.constant 0 : index
    %c0_23 = arith.constant 0 : index
    %63 = vector.load %arg5[%c0_22, %c0_23] : memref<16x1xf32, #tpu.memory_space<vmem>>, vector<16x1xf32>
    %64 = vector.broadcast %63 : vector<16x1xf32> to vector<16x512xf32>
    %65 = arith.addf %62, %64 : vector<16x512xf32>
    %cst_24 = arith.constant 0.000000e+00 : f32
    %66 = vector.broadcast %cst_24 : f32 to vector<16x512xf32>
    %67 = arith.cmpf ogt, %65, %66 : vector<16x512xf32>
    %cst_25 = arith.constant 0.000000e+00 : f32
    %68 = vector.broadcast %cst_25 : f32 to vector<16x512xf32>
    %69 = arith.cmpf olt, %65, %68 : vector<16x512xf32>
    %cst_26 = arith.constant -1.000000e+00 : f32
    %cst_27 = arith.constant 0.000000e+00 : f32
    %70 = vector.broadcast %cst_26 : f32 to vector<16x512xf32>
    %71 = vector.broadcast %cst_27 : f32 to vector<16x512xf32>
    %72 = arith.select %69, %70, %71 : vector<16x512xi1>, vector<16x512xf32>
    %cst_28 = arith.constant 1.000000e+00 : f32
    %73 = vector.broadcast %cst_28 : f32 to vector<16x512xf32>
    %74 = arith.select %67, %73, %72 : vector<16x512xi1>, vector<16x512xf32>
    %75 = arith.truncf %74 : vector<16x512xf32> to vector<16x512xbf16>
    %c0_29 = arith.constant 0 : index
    %c0_30 = arith.constant 0 : index
    %76 = vector.load %arg6[%c0_29, %c0_30] : memref<16x512xbf16, #tpu.memory_space<vmem>>, vector<16x512xbf16>
    tpu.vector_store %arg6[%c0_29, %c0_30], %75 {strides = array<i32>} : memref<16x512xbf16, #tpu.memory_space<vmem>>, vector<16x512xbf16>,
    %77 = arith.extf %75 : vector<16x512xbf16> to vector<16x512xf32>
    %cst_31 = arith.constant dense<0.000000e+00> : vector<16xf32>
    %78 = vector.multi_reduction <add>, %77, %cst_31 [1] : vector<16x512xf32> to vector<16xf32>
    %79 = vector.shape_cast %78 : vector<16xf32> to vector<16x1xf32>
    %c0_32 = arith.constant 0 : index
    %c0_33 = arith.constant 0 : index
    %c0_34 = arith.constant 0 : index
    %80 = vector.load %arg7[%c0_32, %c0_33, %c0_34] : memref<1x16x1xf32, #tpu.memory_space<vmem>>, vector<1x16x1xf32>
    %81 = vector.shape_cast %80 : vector<1x16x1xf32> to vector<16x1xf32>
    %82 = vector.shape_cast %79 : vector<16x1xf32> to vector<1x16x1xf32>
    tpu.vector_store %arg7[%c0_32, %c0_33, %c0_34], %82 {strides = array<i32>} : memref<1x16x1xf32, #tpu.memory_space<vmem>>, vector<1x16x1xf32>,
    %cst_35 = arith.constant dense<0.000000e+00> : vector<16x16xf32>
    %83 = tpu.matmul %75, %75, %cst_35 {dimension_numbers = #tpu.dot_dimension_numbers<[1], [1], [0], [0], [0, 0, 1, 0], [], []>} : vector<16x512xbf16>, vector<16x512xbf16>, vector<16x16xf32> -> vector<16x16xf32>
    %c0_36 = arith.constant 0 : index
    %c0_37 = arith.constant 0 : index
    %c0_38 = arith.constant 0 : index
    %84 = vector.load %arg8[%c0_36, %c0_37, %c0_38] : memref<1x16x16xf32, #tpu.memory_space<vmem>>, vector<1x16x16xf32>
    %85 = vector.shape_cast %84 : vector<1x16x16xf32> to vector<16x16xf32>
    %86 = vector.shape_cast %83 : vector<16x16xf32> to vector<1x16x16xf32>
    tpu.vector_store %arg8[%c0_36, %c0_37, %c0_38], %86 {strides = array<i32>} : memref<1x16x16xf32, #tpu.memory_space<vmem>>, vector<1x16x16xf32>,
    return
  }
  func.func @transform_0(%arg0: i32) -> (i32, i32) {
    %c0_i32 = arith.constant 0 : i32
    %c0_i32_0 = arith.constant 0 : i32
    return %c0_i32, %arg0 : i32, i32
  }
  func.func @transform_1(%arg0: i32) -> (i32, i32) {
    %c0_i32 = arith.constant 0 : i32
    %c0_i32_0 = arith.constant 0 : i32
    %c0_i32_1 = arith.constant 0 : i32
    return %c0_i32, %c0_i32_0 : i32, i32
  }
  func.func @transform_2(%arg0: i32) -> (i32, i32, i32) {
    %c0_i32 = arith.constant 0 : i32
    %c0_i32_0 = arith.constant 0 : i32
    %c0_i32_1 = arith.constant 0 : i32
    %c0_i32_2 = arith.constant 0 : i32
    return %c0_i32, %c0_i32_0, %c0_i32_1 : i32, i32, i32
  }
  func.func @transform_3(%arg0: i32) -> (i32, i32) {
    %c0_i32 = arith.constant 0 : i32
    %c0_i32_0 = arith.constant 0 : i32
    %c0_i32_1 = arith.constant 0 : i32
    return %c0_i32, %c0_i32_0 : i32, i32
  }
  func.func @transform_4(%arg0: i32) -> (i32, i32) {
    %c0_i32 = arith.constant 0 : i32
    %c0_i32_0 = arith.constant 0 : i32
    %c0_i32_1 = arith.constant 0 : i32
    return %c0_i32, %c0_i32_0 : i32, i32
  }
  func.func @transform_5(%arg0: i32) -> (i32, i32) {
    %c0_i32 = arith.constant 0 : i32
    %c0_i32_0 = arith.constant 0 : i32
    return %c0_i32, %arg0 : i32, i32
  }
  func.func @transform_6(%arg0: i32) -> (i32, i32, i32) {
    %c0_i32 = arith.constant 0 : i32
    %c0_i32_0 = arith.constant 0 : i32
    %c0_i32_1 = arith.constant 0 : i32
    return %arg0, %c0_i32, %c0_i32_0 : i32, i32, i32
  }
  func.func @transform_7(%arg0: i32) -> (i32, i32, i32) {
    %c0_i32 = arith.constant 0 : i32
    %c0_i32_0 = arith.constant 0 : i32
    %c0_i32_1 = arith.constant 0 : i32
    return %arg0, %c0_i32, %c0_i32_0 : i32, i32, i32
  }
}

module attributes {stable_mosaic.version = 11 : i64} {
  func.func @_k4_final(%arg0: i32, %arg1: memref<16x512xbf16, #tpu.memory_space<vmem>>, %arg2: memref<16x16xbf16, #tpu.memory_space<vmem>>, %arg3: memref<16x1xf32, #tpu.memory_space<vmem>>, %arg4: memref<16x1xf32, #tpu.memory_space<vmem>>, %arg5: memref<8x512xf32, #tpu.memory_space<vmem>>, %arg6: memref<16x8xf32, #tpu.memory_space<vmem>>, %arg7: memref<16x1xf32, #tpu.memory_space<vmem>>, %arg8: memref<16x1xf32, #tpu.memory_space<vmem>>, %arg9: memref<16x512xf32, #tpu.memory_space<vmem>>) attributes {dimension_semantics = [#tpu.dimension_semantics<parallel>], iteration_bounds = array<i64: 1>, scalar_prefetch = 0 : i64, scratch_operands = 0 : i64, tpu.core_type = #tpu.core_type<tc>, window_params = [{transform_indices = @transform_0, window_bounds = array<i64: 16, 512>}, {pipeline_mode = #tpu.pipeline_mode<synchronous>, transform_indices = @transform_1, window_bounds = array<i64: 16, 16>}, {pipeline_mode = #tpu.pipeline_mode<synchronous>, transform_indices = @transform_2, window_bounds = array<i64: 16, 1>}, {pipeline_mode = #tpu.pipeline_mode<synchronous>, transform_indices = @transform_3, window_bounds = array<i64: 16, 1>}, {transform_indices = @transform_4, window_bounds = array<i64: 8, 512>}, {pipeline_mode = #tpu.pipeline_mode<synchronous>, transform_indices = @transform_5, window_bounds = array<i64: 16, 8>}, {pipeline_mode = #tpu.pipeline_mode<synchronous>, transform_indices = @transform_6, window_bounds = array<i64: 16, 1>}, {pipeline_mode = #tpu.pipeline_mode<synchronous>, transform_indices = @transform_7, window_bounds = array<i64: 16, 1>}, {transform_indices = @transform_8, window_bounds = array<i64: 16, 512>}]} {
    %c0 = arith.constant 0 : index
    %c0_0 = arith.constant 0 : index
    %0 = vector.load %arg2[%c0, %c0_0] : memref<16x16xbf16, #tpu.memory_space<vmem>>, vector<16x16xbf16>
    %c0_1 = arith.constant 0 : index
    %c0_2 = arith.constant 0 : index
    %1 = vector.load %arg1[%c0_1, %c0_2] : memref<16x512xbf16, #tpu.memory_space<vmem>>, vector<16x512xbf16>
    %cst = arith.constant dense<0.000000e+00> : vector<16x512xf32>
    %2 = tpu.matmul %0, %1, %cst {dimension_numbers = #tpu.dot_dimension_numbers<[1], [0], [0], [1], [0, 0, 1, 1], [], []>} : vector<16x16xbf16>, vector<16x512xbf16>, vector<16x512xf32> -> vector<16x512xf32>
    %c0_3 = arith.constant 0 : index
    %c0_4 = arith.constant 0 : index
    %3 = vector.load %arg3[%c0_3, %c0_4] : memref<16x1xf32, #tpu.memory_space<vmem>>, vector<16x1xf32>
    %4 = vector.broadcast %3 : vector<16x1xf32> to vector<16x512xf32>
    %5 = arith.mulf %4, %2 : vector<16x512xf32>
    %c0_5 = arith.constant 0 : index
    %c0_6 = arith.constant 0 : index
    %6 = vector.load %arg4[%c0_5, %c0_6] : memref<16x1xf32, #tpu.memory_space<vmem>>, vector<16x1xf32>
    %7 = vector.broadcast %6 : vector<16x1xf32> to vector<16x512xf32>
    %8 = arith.addf %5, %7 : vector<16x512xf32>
    %c0_7 = arith.constant 0 : index
    %c0_8 = arith.constant 0 : index
    %9 = vector.load %arg6[%c0_7, %c0_8] : memref<16x8xf32, #tpu.memory_space<vmem>>, vector<16x8xf32>
    %c0_9 = arith.constant 0 : index
    %c0_10 = arith.constant 0 : index
    %10 = vector.load %arg5[%c0_9, %c0_10] : memref<8x512xf32, #tpu.memory_space<vmem>>, vector<8x512xf32>
    %cst_11 = arith.constant dense<0.000000e+00> : vector<16x512xf32>
    %11 = tpu.matmul %9, %10, %cst_11 {dimension_numbers = #tpu.dot_dimension_numbers<[1], [0], [0], [1], [0, 0, 1, 1], [], []>} : vector<16x8xf32>, vector<8x512xf32>, vector<16x512xf32> -> vector<16x512xf32>
    %c0_12 = arith.constant 0 : index
    %c0_13 = arith.constant 0 : index
    %12 = vector.load %arg7[%c0_12, %c0_13] : memref<16x1xf32, #tpu.memory_space<vmem>>, vector<16x1xf32>
    %13 = vector.broadcast %12 : vector<16x1xf32> to vector<16x512xf32>
    %14 = arith.mulf %13, %11 : vector<16x512xf32>
    %15 = arith.addf %8, %14 : vector<16x512xf32>
    %c0_14 = arith.constant 0 : index
    %c0_15 = arith.constant 0 : index
    %16 = vector.load %arg8[%c0_14, %c0_15] : memref<16x1xf32, #tpu.memory_space<vmem>>, vector<16x1xf32>
    %17 = vector.broadcast %16 : vector<16x1xf32> to vector<16x512xf32>
    %18 = arith.addf %15, %17 : vector<16x512xf32>
    %c0_16 = arith.constant 0 : index
    %c0_17 = arith.constant 0 : index
    %19 = vector.load %arg9[%c0_16, %c0_17] : memref<16x512xf32, #tpu.memory_space<vmem>>, vector<16x512xf32>
    tpu.vector_store %arg9[%c0_16, %c0_17], %18 {strides = array<i32>} : memref<16x512xf32, #tpu.memory_space<vmem>>, vector<16x512xf32>,
    return
  }
  func.func @transform_0(%arg0: i32) -> (i32, i32) {
    %c0_i32 = arith.constant 0 : i32
    %c0_i32_0 = arith.constant 0 : i32
    return %c0_i32, %arg0 : i32, i32
  }
  func.func @transform_1(%arg0: i32) -> (i32, i32) {
    %c0_i32 = arith.constant 0 : i32
    %c0_i32_0 = arith.constant 0 : i32
    %c0_i32_1 = arith.constant 0 : i32
    return %c0_i32, %c0_i32_0 : i32, i32
  }
  func.func @transform_2(%arg0: i32) -> (i32, i32) {
    %c0_i32 = arith.constant 0 : i32
    %c0_i32_0 = arith.constant 0 : i32
    %c0_i32_1 = arith.constant 0 : i32
    return %c0_i32, %c0_i32_0 : i32, i32
  }
  func.func @transform_3(%arg0: i32) -> (i32, i32) {
    %c0_i32 = arith.constant 0 : i32
    %c0_i32_0 = arith.constant 0 : i32
    %c0_i32_1 = arith.constant 0 : i32
    return %c0_i32, %c0_i32_0 : i32, i32
  }
  func.func @transform_4(%arg0: i32) -> (i32, i32) {
    %c0_i32 = arith.constant 0 : i32
    %c0_i32_0 = arith.constant 0 : i32
    return %c0_i32, %arg0 : i32, i32
  }
  func.func @transform_5(%arg0: i32) -> (i32, i32) {
    %c0_i32 = arith.constant 0 : i32
    %c0_i32_0 = arith.constant 0 : i32
    %c0_i32_1 = arith.constant 0 : i32
    return %c0_i32, %c0_i32_0 : i32, i32
  }
  func.func @transform_6(%arg0: i32) -> (i32, i32) {
    %c0_i32 = arith.constant 0 : i32
    %c0_i32_0 = arith.constant 0 : i32
    %c0_i32_1 = arith.constant 0 : i32
    return %c0_i32, %c0_i32_0 : i32, i32
  }
  func.func @transform_7(%arg0: i32) -> (i32, i32) {
    %c0_i32 = arith.constant 0 : i32
    %c0_i32_0 = arith.constant 0 : i32
    %c0_i32_1 = arith.constant 0 : i32
    return %c0_i32, %c0_i32_0 : i32, i32
  }
  func.func @transform_8(%arg0: i32) -> (i32, i32) {
    %c0_i32 = arith.constant 0 : i32
    %c0_i32_0 = arith.constant 0 : i32
    return %c0_i32, %arg0 : i32, i32
  }
}

</mosaic_0001>

<llo_original>
// kernel: _block_forward_impl.4
$region0: #{_block_forward_impl.4}
  #allocation0 [shape = 'u32[]', space=smem, size = 0x4, offset = 0x4, fixed_abs, tag = 'smem constant byte address 0x4 - core index']
  #allocation1 [shape = 'u32[72,128]{1,0:T(1,128)}', space=vmem, size = 0x9000, scoped, tag = 'internal scratch']
  %s0 = inlined_call_operand.vmem [shape: f32[8,512], index: 0, kind: input, shape index: {}]
  %s1 = inlined_call_operand.vmem [shape: f32[1,8,1], index: 1, kind: output, shape index: {0}]
  %s2 = inlined_call_operand.vmem [shape: f32[1,8,8], index: 2, kind: output, shape index: {1}]
  %3 = xla_tuple %s1, %s2
  %s4 = sld [smem:[#allocation0]]
  $region22: #{_block_forward_impl.4} parent=0
    _
  %s6 = ssub.s32 1, %s4
  %s7 = scalar_select 0, %s6, %s4
  // Predicated region
  $region2: #{_block_forward_impl.4} parent=0 // pred_check
    _
  $region3: #{_block_forward_impl.4} parent=0 // pred_check_branch
    %9 = sbr.rel (0) target = $region5
  $region4: #{_block_forward_impl.4} parent=0 // pred_region
    _
  $region5: #{_block_forward_impl.4} parent=0 // pred_fallthru
    _
  %v10 = vld [vmem:[%s0] sm:$0xff]
  %v11 = vld [vmem:[%s0 + $0x8] sm:$0xff]
  %v12 = vld [vmem:[%s0 + $0x10] sm:$0xff]
  %v13 = vld [vmem:[%s0 + $0x18] sm:$0xff]
  %v14 = vadd.f32 %v10, %v11
  %v15 = vadd.f32 %v14, %v12
  %v16 = vadd.f32 %v15, %v13
  %17 = vadd.xlane.f32.xlu0 %v16
  %v18 = vpop.xlane.xlu0 %17
  %vm19 = vcmask 7168
  %20 = vst.msk [vmem:[%s1] sm:$0xff] %vm19, %v18
  %21 = vmatpush.xpose.msra.mxu0 0.0
  %22 = vmatpush.xpose.msra.mxu0 0.0
  %23 = vmatpush.xpose.msra.mxu0 0.0
  %24 = vmatpush.xpose.msra.mxu0 0.0
  %25 = vmatpush.xpose.msra.mxu0 0.0
  %26 = vmatpush.xpose.msra.mxu0 0.0
  %27 = vmatpush.xpose.msra.mxu0 0.0
  %28 = vmatpush.xpose.msra.mxu0 0.0
  %29 = vmatpush.xpose.msra.mxu0 0.0
  %30 = vmatpush.xpose.msra.mxu0 0.0
  %31 = vmatpush.xpose.msra.mxu0 0.0
  %32 = vmatpush.xpose.msra.mxu0 0.0
  %33 = vmatpush.xpose.msra.mxu0 0.0
  %34 = vmatpush.xpose.msra.mxu0 0.0
  %35 = vmatpush.xpose.msra.mxu0 0.0
  %36 = vmatpush.xpose.msra.mxu0 %v10
  %37 = vmatmul.f32.gmra.mxu0 %v10
  %v38 = vpop.f32.mrf.mxu0
  %v39 = vadd.f32 0.0, %v38
  %40 = vdwg.mxu0
  %41 = vmatpush.xpose.msra.mxu0 0.0
  %42 = vmatpush.xpose.msra.mxu0 0.0
  %43 = vmatpush.xpose.msra.mxu0 0.0
  %44 = vmatpush.xpose.msra.mxu0 0.0
  %45 = vmatpush.xpose.msra.mxu0 0.0
  %46 = vmatpush.xpose.msra.mxu0 0.0
  %47 = vmatpush.xpose.msra.mxu0 0.0
  %48 = vmatpush.xpose.msra.mxu0 0.0
  %49 = vmatpush.xpose.msra.mxu0 0.0
  %50 = vmatpush.xpose.msra.mxu0 0.0
  %51 = vmatpush.xpose.msra.mxu0 0.0
  %52 = vmatpush.xpose.msra.mxu0 0.0
  %53 = vmatpush.xpose.msra.mxu0 0.0
  %54 = vmatpush.xpose.msra.mxu0 0.0
  %55 = vmatpush.xpose.msra.mxu0 0.0
  %56 = vmatpush.xpose.msra.mxu0 %v11
  %57 = vmatmul.f32.gmra.mxu0 %v11
  %v58 = vpop.f32.mrf.mxu0
  %v59 = vadd.f32 %v39, %v58
  %60 = vdwg.mxu0
  %61 = vmatpush.xpose.msra.mxu0 0.0
  %62 = vmatpush.xpose.msra.mxu0 0.0
  %63 = vmatpush.xpose.msra.mxu0 0.0
  %64 = vmatpush.xpose.msra.mxu0 0.0
  %65 = vmatpush.xpose.msra.mxu0 0.0
  %66 = vmatpush.xpose.msra.mxu0 0.0
  %67 = vmatpush.xpose.msra.mxu0 0.0
  %68 = vmatpush.xpose.msra.mxu0 0.0
  %69 = vmatpush.xpose.msra.mxu0 0.0
  %70 = vmatpush.xpose.msra.mxu0 0.0
  %71 = vmatpush.xpose.msra.mxu0 0.0
  %72 = vmatpush.xpose.msra.mxu0 0.0
  %73 = vmatpush.xpose.msra.mxu0 0.0
  %74 = vmatpush.xpose.msra.mxu0 0.0
  %75 = vmatpush.xpose.msra.mxu0 0.0
  %76 = vmatpush.xpose.msra.mxu0 %v12
  %77 = vmatmul.f32.gmra.mxu0 %v12
  %v78 = vpop.f32.mrf.mxu0
  %v79 = vadd.f32 %v59, %v78
  %80 = vdwg.mxu0
  %81 = vmatpush.xpose.msra.mxu0 0.0
  %82 = vmatpush.xpose.msra.mxu0 0.0
  %83 = vmatpush.xpose.msra.mxu0 0.0
  %84 = vmatpush.xpose.msra.mxu0 0.0
  %85 = vmatpush.xpose.msra.mxu0 0.0
  %86 = vmatpush.xpose.msra.mxu0 0.0
  %87 = vmatpush.xpose.msra.mxu0 0.0
  %88 = vmatpush.xpose.msra.mxu0 0.0
  %89 = vmatpush.xpose.msra.mxu0 0.0
  %90 = vmatpush.xpose.msra.mxu0 0.0
  %91 = vmatpush.xpose.msra.mxu0 0.0
  %92 = vmatpush.xpose.msra.mxu0 0.0
  %93 = vmatpush.xpose.msra.mxu0 0.0
  %94 = vmatpush.xpose.msra.mxu0 0.0
  %95 = vmatpush.xpose.msra.mxu0 0.0
  %96 = vmatpush.xpose.msra.mxu0 %v13
  %97 = vmatmul.f32.gmra.mxu0 %v13
  %v98 = vpop.f32.mrf.mxu0
  %v99 = vadd.f32 %v79, %v98
  %100 = vdwg.mxu0
  %vm101 = vcmask 64512
  %102 = vst.msk [vmem:[%s2] sm:$0xff] %vm101, %v99
  // Predicated region
  $region6: #{_block_forward_impl.4} parent=0 // pred_check
    _
  $region7: #{_block_forward_impl.4} parent=0 // pred_check_branch
    %104 = sbr.rel (0) target = $region9
  $region8: #{_block_forward_impl.4} parent=0 // pred_region
    _
  $region9: #{_block_forward_impl.4} parent=0 // pred_fallthru
    _
  // Predicated region
  $region10: #{_block_forward_impl.4} parent=0 // pred_check
    _
  $region11: #{_block_forward_impl.4} parent=0 // pred_check_branch
    %106 = sbr.rel (0) target = $region13
  $region12: #{_block_forward_impl.4} parent=0 // pred_region
    _
  $region13: #{_block_forward_impl.4} parent=0 // pred_fallthru
    _
  // Predicated region
  $region14: #{_block_forward_impl.4} parent=0 // pred_check
    _
  $region15: #{_block_forward_impl.4} parent=0 // pred_check_branch
    %108 = sbr.rel (0) target = $region17
  $region16: #{_block_forward_impl.4} parent=0 // pred_region
    _
  $region17: #{_block_forward_impl.4} parent=0 // pred_fallthru
    _
  // Predicated region
  $region18: #{_block_forward_impl.4} parent=0 // pred_check
    _
  $region19: #{_block_forward_impl.4} parent=0 // pred_check_branch
    %110 = sbr.rel (0) target = $region21
  $region20: #{_block_forward_impl.4} parent=0 // pred_region
    _
  $region21: #{_block_forward_impl.4} parent=0 // pred_fallthru
    _

// kernel: _block_forward_impl.7
$region0: #{_block_forward_impl.7}
  #allocation0 [shape = 'u32[]', space=smem, size = 0x4, offset = 0x4, fixed_abs, tag = 'smem constant byte address 0x4 - core index']
  #allocation1 [shape = 'u32[72,128]{1,0:T(1,128)}', space=vmem, size = 0x9000, scoped, tag = 'internal scratch']
  %s0 = inlined_call_operand.vmem [shape: bf16[16,512], index: 0, kind: input, shape index: {}]
  %s1 = inlined_call_operand.vmem [shape: bf16[16,16], index: 1, kind: input, shape index: {}]
  %s2 = inlined_call_operand.vmem [shape: f32[16,1], index: 2, kind: input, shape index: {}]
  %s3 = inlined_call_operand.vmem [shape: f32[16,1], index: 3, kind: input, shape index: {}]
  %s4 = inlined_call_operand.vmem [shape: f32[8,512], index: 4, kind: input, shape index: {}]
  %s5 = inlined_call_operand.vmem [shape: f32[16,8], index: 5, kind: input, shape index: {}]
  %s6 = inlined_call_operand.vmem [shape: f32[16,1], index: 6, kind: input, shape index: {}]
  %s7 = inlined_call_operand.vmem [shape: f32[16,1], index: 7, kind: input, shape index: {}]
  %s8 = inlined_call_operand.vmem [shape: f32[16,512], index: 8, kind: output, shape index: {}]
  %s9 = sld [smem:[#allocation0]]
  $region42: #{_block_forward_impl.7} parent=0
    _
  %s11 = ssub.s32 1, %s9
  %s12 = scalar_select 0, %s11, %s9
  // Predicated region
  $region2: #{_block_forward_impl.7} parent=0 // pred_check
    _
  $region3: #{_block_forward_impl.7} parent=0 // pred_check_branch
    %14 = sbr.rel (0) target = $region5
  $region4: #{_block_forward_impl.7} parent=0 // pred_region
    _
  $region5: #{_block_forward_impl.7} parent=0 // pred_fallthru
    _
  // Predicated region
  $region6: #{_block_forward_impl.7} parent=0 // pred_check
    _
  $region7: #{_block_forward_impl.7} parent=0 // pred_check_branch
    %16 = sbr.rel (0) target = $region9
  $region8: #{_block_forward_impl.7} parent=0 // pred_region
    _
  $region9: #{_block_forward_impl.7} parent=0 // pred_fallthru
    _
  // Predicated region
  $region10: #{_block_forward_impl.7} parent=0 // pred_check
    _
  $region11: #{_block_forward_impl.7} parent=0 // pred_check_branch
    %18 = sbr.rel (0) target = $region13
  $region12: #{_block_forward_impl.7} parent=0 // pred_region
    _
  $region13: #{_block_forward_impl.7} parent=0 // pred_fallthru
    _
  // Predicated region
  $region14: #{_block_forward_impl.7} parent=0 // pred_check
    _
  $region15: #{_block_forward_impl.7} parent=0 // pred_check_branch
    %20 = sbr.rel (0) target = $region17
  $region16: #{_block_forward_impl.7} parent=0 // pred_region
    _
  $region17: #{_block_forward_impl.7} parent=0 // pred_fallthru
    _
  // Predicated region
  $region18: #{_block_forward_impl.7} parent=0 // pred_check
    _
  $region19: #{_block_forward_impl.7} parent=0 // pred_check_branch
    %22 = sbr.rel (0) target = $region21
  $region20: #{_block_forward_impl.7} parent=0 // pred_region
    _
  $region21: #{_block_forward_impl.7} parent=0 // pred_fallthru
    _
  // Predicated region
  $region22: #{_block_forward_impl.7} parent=0 // pred_check
    _
  $region23: #{_block_forward_impl.7} parent=0 // pred_check_branch
    %24 = sbr.rel (0) target = $region25
  $region24: #{_block_forward_impl.7} parent=0 // pred_region
    _
  $region25: #{_block_forward_impl.7} parent=0 // pred_fallthru
    _
  // Predicated region
  $region26: #{_block_forward_impl.7} parent=0 // pred_check
    _
  $region27: #{_block_forward_impl.7} parent=0 // pred_check_branch
    %26 = sbr.rel (0) target = $region29
  $region28: #{_block_forward_impl.7} parent=0 // pred_region
    _
  $region29: #{_block_forward_impl.7} parent=0 // pred_fallthru
    _
  // Predicated region
  $region30: #{_block_forward_impl.7} parent=0 // pred_check
    _
  $region31: #{_block_forward_impl.7} parent=0 // pred_check_branch
    %28 = sbr.rel (0) target = $region33
  $region32: #{_block_forward_impl.7} parent=0 // pred_region
    _
  $region33: #{_block_forward_impl.7} parent=0 // pred_fallthru
    _
  %v30 = vld [vmem:[%s1] sm:$0xf]
  %v31 = vld [vmem:[%s1 + $0x4] sm:$0xf]
  %v32 = vld [vmem:[%s0] sm:$0xff]
  %v33 = vld [vmem:[%s0 + $0x8] sm:$0xff]
  %v34 = vld [vmem:[%s0 + $0x10] sm:$0xff]
  %v35 = vld [vmem:[%s0 + $0x18] sm:$0xff]
  %v38 = vunpack.c.l.b16 %v30
  %v39 = vunpack.c.l.b16 %v31
  %v40 = vpack.c.b16 %v39, %v38
  %v45 = vunpack.c.l.b16 %v32
  %v46 = vunpack.c.h.b16 %v32
  %v47 = vunpack.c.l.b16 %v33
  %v48 = vunpack.c.h.b16 %v33
  %v49 = vunpack.c.l.b16 %v34
  %v50 = vunpack.c.h.b16 %v34
  %v51 = vunpack.c.l.b16 %v35
  %v52 = vunpack.c.h.b16 %v35
  %v53 = vpack.c.b16 %v49, %v45
  %v54 = vpack.c.b16 %v50, %v46
  %v55 = vpack.c.b16 %v51, %v47
  %v56 = vpack.c.b16 %v52, %v48
  %vm61 = vcmask 130048
  %v63 = vsel %vm61, %v40, 0
  %65 = vmatpush.bf16.msra.mxu0 0
  %66 = vmatpush.bf16.msra.mxu0 0
  %67 = vmatpush.bf16.msra.mxu0 0
  %68 = vmatpush.bf16.msra.mxu0 0
  %69 = vmatpush.bf16.msra.mxu0 0
  %70 = vmatpush.bf16.msra.mxu0 0
  %71 = vmatpush.bf16.msra.mxu0 0
  %72 = vmatpush.bf16.msra.mxu0 %v53
  %73 = vmatmul.bf16.gmra.mxu0 %v63
  %v74 = vpop.f32.mrf.mxu0
  %v75 = vadd.f32 0.0, %v74
  %v76 = vpop.f32.mrf.mxu0
  %v77 = vadd.f32 0.0, %v76
  %78 = vdwg.mxu0
  %79 = vmatpush.bf16.msra.mxu0 0
  %80 = vmatpush.bf16.msra.mxu0 0
  %81 = vmatpush.bf16.msra.mxu0 0
  %82 = vmatpush.bf16.msra.mxu0 0
  %83 = vmatpush.bf16.msra.mxu0 0
  %84 = vmatpush.bf16.msra.mxu0 0
  %85 = vmatpush.bf16.msra.mxu0 0
  %86 = vmatpush.bf16.msra.mxu0 %v54
  %87 = vmatmul.bf16.gmra.mxu0 %v63
  %v88 = vpop.f32.mrf.mxu0
  %v89 = vadd.f32 0.0, %v88
  %v90 = vpop.f32.mrf.mxu0
  %v91 = vadd.f32 0.0, %v90
  %92 = vdwg.mxu0
  %93 = vmatpush.bf16.msra.mxu0 0
  %94 = vmatpush.bf16.msra.mxu0 0
  %95 = vmatpush.bf16.msra.mxu0 0
  %96 = vmatpush.bf16.msra.mxu0 0
  %97 = vmatpush.bf16.msra.mxu0 0
  %98 = vmatpush.bf16.msra.mxu0 0
  %99 = vmatpush.bf16.msra.mxu0 0
  %100 = vmatpush.bf16.msra.mxu0 %v55
  %101 = vmatmul.bf16.gmra.mxu0 %v63
  %v102 = vpop.f32.mrf.mxu0
  %v103 = vadd.f32 0.0, %v102
  %v104 = vpop.f32.mrf.mxu0
  %v105 = vadd.f32 0.0, %v104
  %106 = vdwg.mxu0
  %107 = vmatpush.bf16.msra.mxu0 0
  %108 = vmatpush.bf16.msra.mxu0 0
  %109 = vmatpush.bf16.msra.mxu0 0
  %110 = vmatpush.bf16.msra.mxu0 0
  %111 = vmatpush.bf16.msra.mxu0 0
  %112 = vmatpush.bf16.msra.mxu0 0
  %113 = vmatpush.bf16.msra.mxu0 0
  %114 = vmatpush.bf16.msra.mxu0 %v56
  %115 = vmatmul.bf16.gmra.mxu0 %v63
  %v116 = vpop.f32.mrf.mxu0
  %v117 = vadd.f32 0.0, %v116
  %v118 = vpop.f32.mrf.mxu0
  %v119 = vadd.f32 0.0, %v118
  %120 = vdwg.mxu0
  %v121 = vld [vmem:[%s2] sm:$0xff]
  %v122 = vld [vmem:[%s2 + $0x8] sm:$0xff]
  %124 = vset.pattern.permute.xlu0 0
  %125 = vperm.xlu0 %124, %v121
  %v126 = vpop.permute.xlu0 %125
  %129 = vset.pattern.permute.xlu0 0
  %130 = vperm.xlu0 %129, %v122
  %v131 = vpop.permute.xlu0 %130
  %v133 = vmul.f32 %v126, %v75
  %v134 = vmul.f32 %v126, %v89
  %v135 = vmul.f32 %v126, %v103
  %v136 = vmul.f32 %v126, %v117
  %v137 = vmul.f32 %v131, %v77
  %v138 = vmul.f32 %v131, %v91
  %v139 = vmul.f32 %v131, %v105
  %v140 = vmul.f32 %v131, %v119
  %v141 = vld [vmem:[%s3] sm:$0xff]
  %v142 = vld [vmem:[%s3 + $0x8] sm:$0xff]
  %144 = vset.pattern.permute.xlu0 0
  %145 = vperm.xlu0 %144, %v141
  %v146 = vpop.permute.xlu0 %145
  %149 = vset.pattern.permute.xlu0 0
  %150 = vperm.xlu0 %149, %v142
  %v151 = vpop.permute.xlu0 %150
  %v153 = vadd.f32 %v133, %v146
  %v154 = vadd.f32 %v134, %v146
  %v155 = vadd.f32 %v135, %v146
  %v156 = vadd.f32 %v136, %v146
  %v157 = vadd.f32 %v137, %v151
  %v158 = vadd.f32 %v138, %v151
  %v159 = vadd.f32 %v139, %v151
  %v160 = vadd.f32 %v140, %v151
  %v161 = vld [vmem:[%s5] sm:$0xff]
  %v162 = vld [vmem:[%s5 + $0x8] sm:$0xff]
  %v163 = vld [vmem:[%s4] sm:$0xff]
  %v164 = vld [vmem:[%s4 + $0x8] sm:$0xff]
  %v165 = vld [vmem:[%s4 + $0x10] sm:$0xff]
  %v166 = vld [vmem:[%s4 + $0x18] sm:$0xff]
  %vm167 = vcmask 64512
  %v169 = vsel %vm167, %v161, 0
  %v172 = vsel %vm167, %v162, 0
  %174 = vmatpush.msra.mxu0 0.0
  %175 = vmatpush.msra.mxu0 0.0
  %176 = vmatpush.msra.mxu0 0.0
  %177 = vmatpush.msra.mxu0 0.0
  %178 = vmatpush.msra.mxu0 0.0
  %179 = vmatpush.msra.mxu0 0.0
  %180 = vmatpush.msra.mxu0 0.0
  %181 = vmatpush.msra.mxu0 0.0
  %182 = vmatpush.msra.mxu0 0.0
  %183 = vmatpush.msra.mxu0 0.0
  %184 = vmatpush.msra.mxu0 0.0
  %185 = vmatpush.msra.mxu0 0.0
  %186 = vmatpush.msra.mxu0 0.0
  %187 = vmatpush.msra.mxu0 0.0
  %188 = vmatpush.msra.mxu0 0.0
  %189 = vmatpush.msra.mxu0 %v163
  %190 = vmatmul.f32.gmra.mxu0 %v169
  %v191 = vpop.f32.mrf.mxu0
  %v192 = vadd.f32 0.0, %v191
  %193 = vmatmul.f32.gmra.mxu0 %v172
  %v194 = vpop.f32.mrf.mxu0
  %v195 = vadd.f32 0.0, %v194
  %196 = vdwg.mxu0
  %197 = vmatpush.msra.mxu0 0.0
  %198 = vmatpush.msra.mxu0 0.0
  %199 = vmatpush.msra.mxu0 0.0
  %200 = vmatpush.msra.mxu0 0.0
  %201 = vmatpush.msra.mxu0 0.0
  %202 = vmatpush.msra.mxu0 0.0
  %203 = vmatpush.msra.mxu0 0.0
  %204 = vmatpush.msra.mxu0 0.0
  %205 = vmatpush.msra.mxu0 0.0
  %206 = vmatpush.msra.mxu0 0.0
  %207 = vmatpush.msra.mxu0 0.0
  %208 = vmatpush.msra.mxu0 0.0
  %209 = vmatpush.msra.mxu0 0.0
  %210 = vmatpush.msra.mxu0 0.0
  %211 = vmatpush.msra.mxu0 0.0
  %212 = vmatpush.msra.mxu0 %v164
  %213 = vmatmul.f32.gmra.mxu0 %v169
  %v214 = vpop.f32.mrf.mxu0
  %v215 = vadd.f32 0.0, %v214
  %216 = vmatmul.f32.gmra.mxu0 %v172
  %v217 = vpop.f32.mrf.mxu0
  %v218 = vadd.f32 0.0, %v217
  %219 = vdwg.mxu0
  %220 = vmatpush.msra.mxu0 0.0
  %221 = vmatpush.msra.mxu0 0.0
  %222 = vmatpush.msra.mxu0 0.0
  %223 = vmatpush.msra.mxu0 0.0
  %224 = vmatpush.msra.mxu0 0.0
  %225 = vmatpush.msra.mxu0 0.0
  %226 = vmatpush.msra.mxu0 0.0
  %227 = vmatpush.msra.mxu0 0.0
  %228 = vmatpush.msra.mxu0 0.0
  %229 = vmatpush.msra.mxu0 0.0
  %230 = vmatpush.msra.mxu0 0.0
  %231 = vmatpush.msra.mxu0 0.0
  %232 = vmatpush.msra.mxu0 0.0
  %233 = vmatpush.msra.mxu0 0.0
  %234 = vmatpush.msra.mxu0 0.0
  %235 = vmatpush.msra.mxu0 %v165
  %236 = vmatmul.f32.gmra.mxu0 %v169
  %v237 = vpop.f32.mrf.mxu0
  %v238 = vadd.f32 0.0, %v237
  %239 = vmatmul.f32.gmra.mxu0 %v172
  %v240 = vpop.f32.mrf.mxu0
  %v241 = vadd.f32 0.0, %v240
  %242 = vdwg.mxu0
  %243 = vmatpush.msra.mxu0 0.0
  %244 = vmatpush.msra.mxu0 0.0
  %245 = vmatpush.msra.mxu0 0.0
  %246 = vmatpush.msra.mxu0 0.0
  %247 = vmatpush.msra.mxu0 0.0
  %248 = vmatpush.msra.mxu0 0.0
  %249 = vmatpush.msra.mxu0 0.0
  %250 = vmatpush.msra.mxu0 0.0
  %251 = vmatpush.msra.mxu0 0.0
  %252 = vmatpush.msra.mxu0 0.0
  %253 = vmatpush.msra.mxu0 0.0
  %254 = vmatpush.msra.mxu0 0.0
  %255 = vmatpush.msra.mxu0 0.0
  %256 = vmatpush.msra.mxu0 0.0
  %257 = vmatpush.msra.mxu0 0.0
  %258 = vmatpush.msra.mxu0 %v166
  %259 = vmatmul.f32.gmra.mxu0 %v169
  %v260 = vpop.f32.mrf.mxu0
  %v261 = vadd.f32 0.0, %v260
  %262 = vmatmul.f32.gmra.mxu0 %v172
  %v263 = vpop.f32.mrf.mxu0
  %v264 = vadd.f32 0.0, %v263
  %265 = vdwg.mxu0
  %v266 = vld [vmem:[%s6] sm:$0xff]
  %v267 = vld [vmem:[%s6 + $0x8] sm:$0xff]
  %269 = vset.pattern.permute.xlu0 0
  %270 = vperm.xlu0 %269, %v266
  %v271 = vpop.permute.xlu0 %270
  %274 = vset.pattern.permute.xlu0 0
  %275 = vperm.xlu0 %274, %v267
  %v276 = vpop.permute.xlu0 %275
  %v278 = vmul.f32 %v271, %v192
  %v279 = vmul.f32 %v271, %v215
  %v280 = vmul.f32 %v271, %v238
  %v281 = vmul.f32 %v271, %v261
  %v282 = vmul.f32 %v276, %v195
  %v283 = vmul.f32 %v276, %v218
  %v284 = vmul.f32 %v276, %v241
  %v285 = vmul.f32 %v276, %v264
  %v286 = vadd.f32 %v153, %v278
  %v287 = vadd.f32 %v154, %v279
  %v288 = vadd.f32 %v155, %v280
  %v289 = vadd.f32 %v156, %v281
  %v290 = vadd.f32 %v157, %v282
  %v291 = vadd.f32 %v158, %v283
  %v292 = vadd.f32 %v159, %v284
  %v293 = vadd.f32 %v160, %v285
  %v294 = vld [vmem:[%s7] sm:$0xff]
  %v295 = vld [vmem:[%s7 + $0x8] sm:$0xff]
  %297 = vset.pattern.permute.xlu0 0
  %298 = vperm.xlu0 %297, %v294
  %v299 = vpop.permute.xlu0 %298
  %302 = vset.pattern.permute.xlu0 0
  %303 = vperm.xlu0 %302, %v295
  %v304 = vpop.permute.xlu0 %303
  %v306 = vadd.f32 %v286, %v299
  %v307 = vadd.f32 %v287, %v299
  %v308 = vadd.f32 %v288, %v299
  %v309 = vadd.f32 %v289, %v299
  %v310 = vadd.f32 %v290, %v304
  %v311 = vadd.f32 %v291, %v304
  %v312 = vadd.f32 %v292, %v304
  %v313 = vadd.f32 %v293, %v304
  %314 = vst [vmem:[%s8] sm:$0xff] %v306
  %315 = vst [vmem:[%s8 + $0x8] sm:$0xff] %v307
  %316 = vst [vmem:[%s8 + $0x10] sm:$0xff] %v308
  %317 = vst [vmem:[%s8 + $0x18] sm:$0xff] %v309
  %318 = vst [vmem:[%s8 + $0x20] sm:$0xff] %v310
  %319 = vst [vmem:[%s8 + $0x28] sm:$0xff] %v311
  %320 = vst [vmem:[%s8 + $0x30] sm:$0xff] %v312
  %321 = vst [vmem:[%s8 + $0x38] sm:$0xff] %v313
  // Predicated region
  $region34: #{_block_forward_impl.7} parent=0 // pred_check
    _
  $region35: #{_block_forward_impl.7} parent=0 // pred_check_branch
    %323 = sbr.rel (0) target = $region37
  $region36: #{_block_forward_impl.7} parent=0 // pred_region
    _
  $region37: #{_block_forward_impl.7} parent=0 // pred_fallthru
    _
  // Predicated region
  $region38: #{_block_forward_impl.7} parent=0 // pred_check
    _
  $region39: #{_block_forward_impl.7} parent=0 // pred_check_branch
    %325 = sbr.rel (0) target = $region41
  $region40: #{_block_forward_impl.7} parent=0 // pred_region
    _
  $region41: #{_block_forward_impl.7} parent=0 // pred_fallthru
    _

// kernel: _block_forward_impl.6
$region0: #{_block_forward_impl.6}
  #allocation0 [shape = 'u32[]', space=smem, size = 0x4, offset = 0x4, fixed_abs, tag = 'smem constant byte address 0x4 - core index']
  #allocation1 [shape = 'u32[72,128]{1,0:T(1,128)}', space=vmem, size = 0x9000, scoped, tag = 'internal scratch']
  %s0 = inlined_call_operand.vmem [shape: bf16[16,512], index: 0, kind: input, shape index: {}]
  %s1 = inlined_call_operand.vmem [shape: bf16[16,144], index: 1, kind: input, shape index: {}]
  %s2 = inlined_call_operand.vmem [shape: bf16[9,1,512], index: 2, kind: input, shape index: {}]
  %s3 = inlined_call_operand.vmem [shape: f32[16,1], index: 3, kind: input, shape index: {}]
  %s4 = inlined_call_operand.vmem [shape: f32[16,1], index: 4, kind: input, shape index: {}]
  %s5 = inlined_call_operand.vmem [shape: bf16[16,512], index: 5, kind: output, shape index: {0}]
  %s6 = inlined_call_operand.vmem [shape: f32[1,16,1], index: 6, kind: output, shape index: {1}]
  %s7 = inlined_call_operand.vmem [shape: f32[1,16,16], index: 7, kind: output, shape index: {2}]
  %8 = xla_tuple %s5, %s6, %s7
  %s9 = sld [smem:[#allocation0]]
  $region46: #{_block_forward_impl.6} parent=0
    _
  %s11 = ssub.s32 1, %s9
  %s12 = scalar_select 0, %s11, %s9
  // Predicated region
  $region2: #{_block_forward_impl.6} parent=0 // pred_check
    _
  $region3: #{_block_forward_impl.6} parent=0 // pred_check_branch
    %14 = sbr.rel (0) target = $region5
  $region4: #{_block_forward_impl.6} parent=0 // pred_region
    _
  $region5: #{_block_forward_impl.6} parent=0 // pred_fallthru
    _
  // Predicated region
  $region6: #{_block_forward_impl.6} parent=0 // pred_check
    _
  $region7: #{_block_forward_impl.6} parent=0 // pred_check_branch
    %16 = sbr.rel (0) target = $region9
  $region8: #{_block_forward_impl.6} parent=0 // pred_region
    _
  $region9: #{_block_forward_impl.6} parent=0 // pred_fallthru
    _
  // Predicated region
  $region10: #{_block_forward_impl.6} parent=0 // pred_check
    _
  $region11: #{_block_forward_impl.6} parent=0 // pred_check_branch
    %18 = sbr.rel (0) target = $region13
  $region12: #{_block_forward_impl.6} parent=0 // pred_region
    _
  $region13: #{_block_forward_impl.6} parent=0 // pred_fallthru
    _
  // Predicated region
  $region14: #{_block_forward_impl.6} parent=0 // pred_check
    _
  $region15: #{_block_forward_impl.6} parent=0 // pred_check_branch
    %20 = sbr.rel (0) target = $region17
  $region16: #{_block_forward_impl.6} parent=0 // pred_region
    _
  $region17: #{_block_forward_impl.6} parent=0 // pred_fallthru
    _
  // Predicated region
  $region18: #{_block_forward_impl.6} parent=0 // pred_check
    _
  $region19: #{_block_forward_impl.6} parent=0 // pred_check_branch
    %22 = sbr.rel (0) target = $region21
  $region20: #{_block_forward_impl.6} parent=0 // pred_region
    _
  $region21: #{_block_forward_impl.6} parent=0 // pred_fallthru
    _
  %v24 = vld [vmem:[%s0] sm:$0xff]
  %v25 = vld [vmem:[%s0 + $0x8] sm:$0xff]
  %v26 = vld [vmem:[%s0 + $0x10] sm:$0xff]
  %v27 = vld [vmem:[%s0 + $0x18] sm:$0xff]
  %v30 = vunpack.c.h.b16 %v25
  %v31 = vunpack.c.h.b16 %v27
  %v32 = vpack.c.b16 %v31, %v30
  %33 = vrot.lane.b32.xlu0 %v32, 17
  %v34 = vpop.permute.xlu0 %33
  %v37 = vunpack.c.l.b16 %v24
  %v38 = vunpack.c.h.b16 %v24
  %v39 = vunpack.c.l.b16 %v25
  %v40 = vunpack.c.l.b16 %v26
  %v41 = vunpack.c.h.b16 %v26
  %v42 = vunpack.c.l.b16 %v27
  %v43 = vpack.c.b16 %v40, %v37
  %v44 = vpack.c.b16 %v41, %v38
  %v45 = vpack.c.b16 %v42, %v39
  %46 = vrot.lane.b32.xlu0 %v43, 17
  %v47 = vpop.permute.xlu0 %46
  %48 = vrot.lane.b32.xlu0 %v44, 17
  %v49 = vpop.permute.xlu0 %48
  %50 = vrot.lane.b32.xlu0 %v45, 17
  %v51 = vpop.permute.xlu0 %50
  %vm52 = vcmask 138240
  %v53 = vsel %vm52, %v47, %v49
  %v54 = vsel %vm52, %v49, %v51
  %v55 = vsel %vm52, %v51, %v34
  %vm59 = vcmask 138240
  %v62 = vsel %vm59, %v34, %v47
  %v64 = vld [vmem:[%s2] sm:$0xf]
  %66 = vst [vmem:[#allocation1] ss:$9 sm:$0xff] %v64
  %v67 = vld [vmem:[#allocation1] sm:$0xff]
  %v68 = vld [vmem:[#allocation1 + $0x9] sm:$0xff]
  %v69 = vld [vmem:[#allocation1 + $0x12] sm:$0xff]
  %v70 = vld [vmem:[#allocation1 + $0x1b] sm:$0xff]
  %v71 = vpack.i.b16 %v67, %v67
  %v73 = vperm.slane %v71, 0
  %v74 = vpack.i.b16 %v68, %v68
  %v76 = vperm.slane %v74, 0
  %v77 = vpack.i.b16 %v69, %v69
  %v79 = vperm.slane %v77, 0
  %v80 = vpack.i.b16 %v70, %v70
  %v82 = vperm.slane %v80, 0
  %v83 = vunpack.c.l.bf16 %v62
  %v84 = vunpack.c.l.bf16 %v53
  %v85 = vunpack.c.l.bf16 %v54
  %v86 = vunpack.c.l.bf16 %v55
  %v87 = vunpack.c.h.bf16 %v62
  %v88 = vunpack.c.h.bf16 %v53
  %v89 = vunpack.c.h.bf16 %v54
  %v90 = vunpack.c.h.bf16 %v55
  %v91 = vunpack.c.l.bf16 %v73
  %v92 = vunpack.c.l.bf16 %v76
  %v93 = vunpack.c.l.bf16 %v79
  %v94 = vunpack.c.l.bf16 %v82
  %v95 = vmul.f32 %v83, %v91
  %v96 = vmul.f32 %v84, %v92
  %v97 = vmul.f32 %v85, %v93
  %v98 = vmul.f32 %v86, %v94
  %v99 = vmul.f32 %v87, %v91
  %v100 = vmul.f32 %v88, %v92
  %v101 = vmul.f32 %v89, %v93
  %v102 = vmul.f32 %v90, %v94
  %v103 = vpack.c.bf16 %v96, %v95
  %v104 = vpack.c.bf16 %v98, %v97
  %v105 = vpack.c.bf16 %v100, %v99
  %v106 = vpack.c.bf16 %v102, %v101
  %107 = vrot.lane.b32.xlu0 %v32, 16
  %v108 = vpop.permute.xlu0 %107
  %109 = vrot.lane.b32.xlu0 %v43, 16
  %v110 = vpop.permute.xlu0 %109
  %111 = vrot.lane.b32.xlu0 %v44, 16
  %v112 = vpop.permute.xlu0 %111
  %113 = vrot.lane.b32.xlu0 %v45, 16
  %v114 = vpop.permute.xlu0 %113
  %vm115 = vcmask 130048
  %v116 = vsel %vm115, %v110, %v112
  %v117 = vsel %vm115, %v112, %v114
  %v118 = vsel %vm115, %v114, %v108
  %vm122 = vcmask 130048
  %v125 = vsel %vm122, %v108, %v110
  %s127 = scalar_lea.vmem %s2, 4
  %v128 = vld [vmem:[%s127] sm:$0xf]
  %130 = vst [vmem:[#allocation1] ss:$9 sm:$0xff] %v128
  %v131 = vld [vmem:[#allocation1] sm:$0xff]
  %v132 = vld [vmem:[#allocation1 + $0x9] sm:$0xff]
  %v133 = vld [vmem:[#allocation1 + $0x12] sm:$0xff]
  %v134 = vld [vmem:[#allocation1 + $0x1b] sm:$0xff]
  %v135 = vpack.i.b16 %v131, %v131
  %v137 = vperm.slane %v135, 0
  %v138 = vpack.i.b16 %v132, %v132
  %v140 = vperm.slane %v138, 0
  %v141 = vpack.i.b16 %v133, %v133
  %v143 = vperm.slane %v141, 0
  %v144 = vpack.i.b16 %v134, %v134
  %v146 = vperm.slane %v144, 0
  %v147 = vunpack.c.l.bf16 %v125
  %v148 = vunpack.c.l.bf16 %v116
  %v149 = vunpack.c.l.bf16 %v117
  %v150 = vunpack.c.l.bf16 %v118
  %v151 = vunpack.c.h.bf16 %v125
  %v152 = vunpack.c.h.bf16 %v116
  %v153 = vunpack.c.h.bf16 %v117
  %v154 = vunpack.c.h.bf16 %v118
  %v155 = vunpack.c.l.bf16 %v137
  %v156 = vunpack.c.l.bf16 %v140
  %v157 = vunpack.c.l.bf16 %v143
  %v158 = vunpack.c.l.bf16 %v146
  %v159 = vmul.f32 %v147, %v155
  %v160 = vmul.f32 %v148, %v156
  %v161 = vmul.f32 %v149, %v157
  %v162 = vmul.f32 %v150, %v158
  %v163 = vmul.f32 %v151, %v155
  %v164 = vmul.f32 %v152, %v156
  %v165 = vmul.f32 %v153, %v157
  %v166 = vmul.f32 %v154, %v158
  %v167 = vpack.c.bf16 %v160, %v159
  %v168 = vpack.c.bf16 %v162, %v161
  %v169 = vpack.c.bf16 %v164, %v163
  %v170 = vpack.c.bf16 %v166, %v165
  %171 = vrot.lane.b32.xlu0 %v32, 15
  %v172 = vpop.permute.xlu0 %171
  %173 = vrot.lane.b32.xlu0 %v43, 15
  %v174 = vpop.permute.xlu0 %173
  %175 = vrot.lane.b32.xlu0 %v44, 15
  %v176 = vpop.permute.xlu0 %175
  %177 = vrot.lane.b32.xlu0 %v45, 15
  %v178 = vpop.permute.xlu0 %177
  %vm179 = vcmask 121856
  %v180 = vsel %vm179, %v174, %v176
  %v181 = vsel %vm179, %v176, %v178
  %v182 = vsel %vm179, %v178, %v172
  %vm186 = vcmask 121856
  %v189 = vsel %vm186, %v172, %v174
  %s191 = scalar_lea.vmem %s2, 8
  %v192 = vld [vmem:[%s191] sm:$0xf]
  %194 = vst [vmem:[#allocation1] ss:$9 sm:$0xff] %v192
  %v195 = vld [vmem:[#allocation1] sm:$0xff]
  %v196 = vld [vmem:[#allocation1 + $0x9] sm:$0xff]
  %v197 = vld [vmem:[#allocation1 + $0x12] sm:$0xff]
  %v198 = vld [vmem:[#allocation1 + $0x1b] sm:$0xff]
  %v199 = vpack.i.b16 %v195, %v195
  %v201 = vperm.slane %v199, 0
  %v202 = vpack.i.b16 %v196, %v196
  %v204 = vperm.slane %v202, 0
  %v205 = vpack.i.b16 %v197, %v197
  %v207 = vperm.slane %v205, 0
  %v208 = vpack.i.b16 %v198, %v198
  %v210 = vperm.slane %v208, 0
  %v211 = vunpack.c.l.bf16 %v189
  %v212 = vunpack.c.l.bf16 %v180
  %v213 = vunpack.c.l.bf16 %v181
  %v214 = vunpack.c.l.bf16 %v182
  %v215 = vunpack.c.h.bf16 %v189
  %v216 = vunpack.c.h.bf16 %v180
  %v217 = vunpack.c.h.bf16 %v181
  %v218 = vunpack.c.h.bf16 %v182
  %v219 = vunpack.c.l.bf16 %v201
  %v220 = vunpack.c.l.bf16 %v204
  %v221 = vunpack.c.l.bf16 %v207
  %v222 = vunpack.c.l.bf16 %v210
  %v223 = vmul.f32 %v211, %v219
  %v224 = vmul.f32 %v212, %v220
  %v225 = vmul.f32 %v213, %v221
  %v226 = vmul.f32 %v214, %v222
  %v227 = vmul.f32 %v215, %v219
  %v228 = vmul.f32 %v216, %v220
  %v229 = vmul.f32 %v217, %v221
  %v230 = vmul.f32 %v218, %v222
  %v231 = vpack.c.bf16 %v224, %v223
  %v232 = vpack.c.bf16 %v226, %v225
  %v233 = vpack.c.bf16 %v228, %v227
  %v234 = vpack.c.bf16 %v230, %v229
  %235 = vrot.lane.b32.xlu0 %v32, 1
  %v236 = vpop.permute.xlu0 %235
  %237 = vrot.lane.b32.xlu0 %v43, 1
  %v238 = vpop.permute.xlu0 %237
  %239 = vrot.lane.b32.xlu0 %v44, 1
  %v240 = vpop.permute.xlu0 %239
  %241 = vrot.lane.b32.xlu0 %v45, 1
  %v242 = vpop.permute.xlu0 %241
  %vm243 = vcmask 7168
  %v244 = vsel %vm243, %v238, %v240
  %v245 = vsel %vm243, %v240, %v242
  %v246 = vsel %vm243, %v242, %v236
  %vm250 = vcmask 7168
  %v253 = vsel %vm250, %v236, %v238
  %s255 = scalar_lea.vmem %s2, 12
  %v256 = vld [vmem:[%s255] sm:$0xf]
  %258 = vst [vmem:[#allocation1] ss:$9 sm:$0xff] %v256
  %v259 = vld [vmem:[#allocation1] sm:$0xff]
  %v260 = vld [vmem:[#allocation1 + $0x9] sm:$0xff]
  %v261 = vld [vmem:[#allocation1 + $0x12] sm:$0xff]
  %v262 = vld [vmem:[#allocation1 + $0x1b] sm:$0xff]
  %v263 = vpack.i.b16 %v259, %v259
  %v265 = vperm.slane %v263, 0
  %v266 = vpack.i.b16 %v260, %v260
  %v268 = vperm.slane %v266, 0
  %v269 = vpack.i.b16 %v261, %v261
  %v271 = vperm.slane %v269, 0
  %v272 = vpack.i.b16 %v262, %v262
  %v274 = vperm.slane %v272, 0
  %v275 = vunpack.c.l.bf16 %v253
  %v276 = vunpack.c.l.bf16 %v244
  %v277 = vunpack.c.l.bf16 %v245
  %v278 = vunpack.c.l.bf16 %v246
  %v279 = vunpack.c.h.bf16 %v253
  %v280 = vunpack.c.h.bf16 %v244
  %v281 = vunpack.c.h.bf16 %v245
  %v282 = vunpack.c.h.bf16 %v246
  %v283 = vunpack.c.l.bf16 %v265
  %v284 = vunpack.c.l.bf16 %v268
  %v285 = vunpack.c.l.bf16 %v271
  %v286 = vunpack.c.l.bf16 %v274
  %v287 = vmul.f32 %v275, %v283
  %v288 = vmul.f32 %v276, %v284
  %v289 = vmul.f32 %v277, %v285
  %v290 = vmul.f32 %v278, %v286
  %v291 = vmul.f32 %v279, %v283
  %v292 = vmul.f32 %v280, %v284
  %v293 = vmul.f32 %v281, %v285
  %v294 = vmul.f32 %v282, %v286
  %v295 = vpack.c.bf16 %v288, %v287
  %v296 = vpack.c.bf16 %v290, %v289
  %v297 = vpack.c.bf16 %v292, %v291
  %v298 = vpack.c.bf16 %v294, %v293
  %299 = vrot.lane.b32.xlu0 %v43, 127
  %v300 = vpop.permute.xlu0 %299
  %301 = vrot.lane.b32.xlu0 %v44, 127
  %v302 = vpop.permute.xlu0 %301
  %303 = vrot.lane.b32.xlu0 %v45, 127
  %v304 = vpop.permute.xlu0 %303
  %305 = vrot.lane.b32.xlu0 %v32, 127
  %v306 = vpop.permute.xlu0 %305
  %vm307 = vcmask 1039360
  %v308 = vsel %vm307, %v300, %v302
  %v309 = vsel %vm307, %v302, %v304
  %v310 = vsel %vm307, %v304, %v306
  %vm314 = vcmask 1039360
  %v317 = vsel %vm314, %v306, %v300
  %s319 = scalar_lea.vmem %s2, 20
  %v320 = vld [vmem:[%s319] sm:$0xf]
  %322 = vst [vmem:[#allocation1] ss:$9 sm:$0xff] %v320
  %v323 = vld [vmem:[#allocation1] sm:$0xff]
  %v324 = vld [vmem:[#allocation1 + $0x9] sm:$0xff]
  %v325 = vld [vmem:[#allocation1 + $0x12] sm:$0xff]
  %v326 = vld [vmem:[#allocation1 + $0x1b] sm:$0xff]
  %v327 = vpack.i.b16 %v323, %v323
  %v329 = vperm.slane %v327, 0
  %v330 = vpack.i.b16 %v324, %v324
  %v332 = vperm.slane %v330, 0
  %v333 = vpack.i.b16 %v325, %v325
  %v335 = vperm.slane %v333, 0
  %v336 = vpack.i.b16 %v326, %v326
  %v338 = vperm.slane %v336, 0
  %v339 = vunpack.c.l.bf16 %v308
  %v340 = vunpack.c.l.bf16 %v309
  %v341 = vunpack.c.l.bf16 %v310
  %v342 = vunpack.c.l.bf16 %v317
  %v343 = vunpack.c.h.bf16 %v308
  %v344 = vunpack.c.h.bf16 %v309
  %v345 = vunpack.c.h.bf16 %v310
  %v346 = vunpack.c.h.bf16 %v317
  %v347 = vunpack.c.l.bf16 %v329
  %v348 = vunpack.c.l.bf16 %v332
  %v349 = vunpack.c.l.bf16 %v335
  %v350 = vunpack.c.l.bf16 %v338
  %v351 = vmul.f32 %v339, %v347
  %v352 = vmul.f32 %v340, %v348
  %v353 = vmul.f32 %v341, %v349
  %v354 = vmul.f32 %v342, %v350
  %v355 = vmul.f32 %v343, %v347
  %v356 = vmul.f32 %v344, %v348
  %v357 = vmul.f32 %v345, %v349
  %v358 = vmul.f32 %v346, %v350
  %v359 = vpack.c.bf16 %v352, %v351
  %v360 = vpack.c.bf16 %v354, %v353
  %v361 = vpack.c.bf16 %v356, %v355
  %v362 = vpack.c.bf16 %v358, %v357
  %363 = vrot.lane.b32.xlu0 %v43, 113
  %v364 = vpop.permute.xlu0 %363
  %365 = vrot.lane.b32.xlu0 %v44, 113
  %v366 = vpop.permute.xlu0 %365
  %367 = vrot.lane.b32.xlu0 %v45, 113
  %v368 = vpop.permute.xlu0 %367
  %369 = vrot.lane.b32.xlu0 %v32, 113
  %v370 = vpop.permute.xlu0 %369
  %vm371 = vcmask 924672
  %v372 = vsel %vm371, %v364, %v366
  %v373 = vsel %vm371, %v366, %v368
  %v374 = vsel %vm371, %v368, %v370
  %vm378 = vcmask 924672
  %v381 = vsel %vm378, %v370, %v364
  %s383 = scalar_lea.vmem %s2, 24
  %v384 = vld [vmem:[%s383] sm:$0xf]
  %386 = vst [vmem:[#allocation1] ss:$9 sm:$0xff] %v384
  %v387 = vld [vmem:[#allocation1] sm:$0xff]
  %v388 = vld [vmem:[#allocation1 + $0x9] sm:$0xff]
  %v389 = vld [vmem:[#allocation1 + $0x12] sm:$0xff]
  %v390 = vld [vmem:[#allocation1 + $0x1b] sm:$0xff]
  %v391 = vpack.i.b16 %v387, %v387
  %v393 = vperm.slane %v391, 0
  %v394 = vpack.i.b16 %v388, %v388
  %v396 = vperm.slane %v394, 0
  %v397 = vpack.i.b16 %v389, %v389
  %v399 = vperm.slane %v397, 0
  %v400 = vpack.i.b16 %v390, %v390
  %v402 = vperm.slane %v400, 0
  %v403 = vunpack.c.l.bf16 %v372
  %v404 = vunpack.c.l.bf16 %v373
  %v405 = vunpack.c.l.bf16 %v374
  %v406 = vunpack.c.l.bf16 %v381
  %v407 = vunpack.c.h.bf16 %v372
  %v408 = vunpack.c.h.bf16 %v373
  %v409 = vunpack.c.h.bf16 %v374
  %v410 = vunpack.c.h.bf16 %v381
  %v411 = vunpack.c.l.bf16 %v393
  %v412 = vunpack.c.l.bf16 %v396
  %v413 = vunpack.c.l.bf16 %v399
  %v414 = vunpack.c.l.bf16 %v402
  %v415 = vmul.f32 %v403, %v411
  %v416 = vmul.f32 %v404, %v412
  %v417 = vmul.f32 %v405, %v413
  %v418 = vmul.f32 %v406, %v414
  %v419 = vmul.f32 %v407, %v411
  %v420 = vmul.f32 %v408, %v412
  %v421 = vmul.f32 %v409, %v413
  %v422 = vmul.f32 %v410, %v414
  %v423 = vpack.c.bf16 %v416, %v415
  %v424 = vpack.c.bf16 %v418, %v417
  %v425 = vpack.c.bf16 %v420, %v419
  %v426 = vpack.c.bf16 %v422, %v421
  %427 = vrot.lane.b32.xlu0 %v43, 112
  %v428 = vpop.permute.xlu0 %427
  %429 = vrot.lane.b32.xlu0 %v44, 112
  %v430 = vpop.permute.xlu0 %429
  %431 = vrot.lane.b32.xlu0 %v45, 112
  %v432 = vpop.permute.xlu0 %431
  %433 = vrot.lane.b32.xlu0 %v32, 112
  %v434 = vpop.permute.xlu0 %433
  %vm435 = vcmask 916480
  %v436 = vsel %vm435, %v428, %v430
  %v437 = vsel %vm435, %v430, %v432
  %v438 = vsel %vm435, %v432, %v434
  %vm442 = vcmask 916480
  %v445 = vsel %vm442, %v434, %v428
  %s447 = scalar_lea.vmem %s2, 28
  %v448 = vld [vmem:[%s447] sm:$0xf]
  %450 = vst [vmem:[#allocation1] ss:$9 sm:$0xff] %v448
  %v451 = vld [vmem:[#allocation1] sm:$0xff]
  %v452 = vld [vmem:[#allocation1 + $0x9] sm:$0xff]
  %v453 = vld [vmem:[#allocation1 + $0x12] sm:$0xff]
  %v454 = vld [vmem:[#allocation1 + $0x1b] sm:$0xff]
  %v455 = vpack.i.b16 %v451, %v451
  %v457 = vperm.slane %v455, 0
  %v458 = vpack.i.b16 %v452, %v452
  %v460 = vperm.slane %v458, 0
  %v461 = vpack.i.b16 %v453, %v453
  %v463 = vperm.slane %v461, 0
  %v464 = vpack.i.b16 %v454, %v454
  %v466 = vperm.slane %v464, 0
  %v467 = vunpack.c.l.bf16 %v436
  %v468 = vunpack.c.l.bf16 %v437
  %v469 = vunpack.c.l.bf16 %v438
  %v470 = vunpack.c.l.bf16 %v445
  %v471 = vunpack.c.h.bf16 %v436
  %v472 = vunpack.c.h.bf16 %v437
  %v473 = vunpack.c.h.bf16 %v438
  %v474 = vunpack.c.h.bf16 %v445
  %v475 = vunpack.c.l.bf16 %v457
  %v476 = vunpack.c.l.bf16 %v460
  %v477 = vunpack.c.l.bf16 %v463
  %v478 = vunpack.c.l.bf16 %v466
  %v479 = vmul.f32 %v467, %v475
  %v480 = vmul.f32 %v468, %v476
  %v481 = vmul.f32 %v469, %v477
  %v482 = vmul.f32 %v470, %v478
  %v483 = vmul.f32 %v471, %v475
  %v484 = vmul.f32 %v472, %v476
  %v485 = vmul.f32 %v473, %v477
  %v486 = vmul.f32 %v474, %v478
  %v487 = vpack.c.bf16 %v480, %v479
  %v488 = vpack.c.bf16 %v482, %v481
  %v489 = vpack.c.bf16 %v484, %v483
  %v490 = vpack.c.bf16 %v486, %v485
  %491 = vrot.lane.b32.xlu0 %v43, 111
  %v492 = vpop.permute.xlu0 %491
  %493 = vrot.lane.b32.xlu0 %v44, 111
  %v494 = vpop.permute.xlu0 %493
  %495 = vrot.lane.b32.xlu0 %v45, 111
  %v496 = vpop.permute.xlu0 %495
  %497 = vrot.lane.b32.xlu0 %v32, 111
  %v498 = vpop.permute.xlu0 %497
  %vm499 = vcmask 908288
  %v500 = vsel %vm499, %v492, %v494
  %v501 = vsel %vm499, %v494, %v496
  %v502 = vsel %vm499, %v496, %v498
  %vm506 = vcmask 908288
  %v509 = vsel %vm506, %v498, %v492
  %s511 = scalar_lea.vmem %s2, 32
  %v512 = vld [vmem:[%s511] sm:$0xf]
  %514 = vst [vmem:[#allocation1] ss:$9 sm:$0xff] %v512
  %v515 = vld [vmem:[#allocation1] sm:$0xff]
  %v516 = vld [vmem:[#allocation1 + $0x9] sm:$0xff]
  %v517 = vld [vmem:[#allocation1 + $0x12] sm:$0xff]
  %v518 = vld [vmem:[#allocation1 + $0x1b] sm:$0xff]
  %v519 = vpack.i.b16 %v515, %v515
  %v521 = vperm.slane %v519, 0
  %v522 = vpack.i.b16 %v516, %v516
  %v524 = vperm.slane %v522, 0
  %v525 = vpack.i.b16 %v517, %v517
  %v527 = vperm.slane %v525, 0
  %v528 = vpack.i.b16 %v518, %v518
  %v530 = vperm.slane %v528, 0
  %v531 = vunpack.c.l.bf16 %v500
  %v532 = vunpack.c.l.bf16 %v501
  %v533 = vunpack.c.l.bf16 %v502
  %v534 = vunpack.c.l.bf16 %v509
  %v535 = vunpack.c.h.bf16 %v500
  %v536 = vunpack.c.h.bf16 %v501
  %v537 = vunpack.c.h.bf16 %v502
  %v538 = vunpack.c.h.bf16 %v509
  %v539 = vunpack.c.l.bf16 %v521
  %v540 = vunpack.c.l.bf16 %v524
  %v541 = vunpack.c.l.bf16 %v527
  %v542 = vunpack.c.l.bf16 %v530
  %v543 = vmul.f32 %v531, %v539
  %v544 = vmul.f32 %v532, %v540
  %v545 = vmul.f32 %v533, %v541
  %v546 = vmul.f32 %v534, %v542
  %v547 = vmul.f32 %v535, %v539
  %v548 = vmul.f32 %v536, %v540
  %v549 = vmul.f32 %v537, %v541
  %v550 = vmul.f32 %v538, %v542
  %v551 = vpack.c.bf16 %v544, %v543
  %v552 = vpack.c.bf16 %v546, %v545
  %v553 = vpack.c.bf16 %v548, %v547
  %v554 = vpack.c.bf16 %v550, %v549
  %v559 = vunpack.c.l.b16 %v103
  %v560 = vunpack.c.h.b16 %v103
  %v561 = vunpack.c.l.b16 %v104
  %v562 = vunpack.c.h.b16 %v104
  %v563 = vunpack.c.l.b16 %v105
  %v564 = vunpack.c.h.b16 %v105
  %v565 = vunpack.c.l.b16 %v106
  %v566 = vunpack.c.h.b16 %v106
  %v567 = vpack.c.b16 %v563, %v559
  %v568 = vpack.c.b16 %v564, %v560
  %v569 = vpack.c.b16 %v565, %v561
  %v570 = vpack.c.b16 %v566, %v562
  %v579 = vunpack.c.l.b16 %v167
  %v580 = vunpack.c.h.b16 %v167
  %v581 = vunpack.c.l.b16 %v168
  %v582 = vunpack.c.h.b16 %v168
  %v583 = vunpack.c.l.b16 %v169
  %v584 = vunpack.c.h.b16 %v169
  %v585 = vunpack.c.l.b16 %v170
  %v586 = vunpack.c.h.b16 %v170
  %v587 = vpack.c.b16 %v583, %v579
  %v588 = vpack.c.b16 %v584, %v580
  %v589 = vpack.c.b16 %v585, %v581
  %v590 = vpack.c.b16 %v586, %v582
  %v599 = vunpack.c.l.b16 %v231
  %v600 = vunpack.c.h.b16 %v231
  %v601 = vunpack.c.l.b16 %v232
  %v602 = vunpack.c.h.b16 %v232
  %v603 = vunpack.c.l.b16 %v233
  %v604 = vunpack.c.h.b16 %v233
  %v605 = vunpack.c.l.b16 %v234
  %v606 = vunpack.c.h.b16 %v234
  %v607 = vpack.c.b16 %v603, %v599
  %v608 = vpack.c.b16 %v604, %v600
  %v609 = vpack.c.b16 %v605, %v601
  %v610 = vpack.c.b16 %v606, %v602
  %v619 = vunpack.c.l.b16 %v295
  %v620 = vunpack.c.h.b16 %v295
  %v621 = vunpack.c.l.b16 %v296
  %v622 = vunpack.c.h.b16 %v296
  %v623 = vunpack.c.l.b16 %v297
  %v624 = vunpack.c.h.b16 %v297
  %v625 = vunpack.c.l.b16 %v298
  %v626 = vunpack.c.h.b16 %v298
  %v627 = vpack.c.b16 %v623, %v619
  %v628 = vpack.c.b16 %v624, %v620
  %v629 = vpack.c.b16 %v625, %v621
  %v630 = vpack.c.b16 %v626, %v622
  %v643 = vunpack.c.l.b16 %v359
  %v644 = vunpack.c.h.b16 %v359
  %v645 = vunpack.c.l.b16 %v360
  %v646 = vunpack.c.h.b16 %v360
  %v647 = vunpack.c.l.b16 %v361
  %v648 = vunpack.c.h.b16 %v361
  %v649 = vunpack.c.l.b16 %v362
  %v650 = vunpack.c.h.b16 %v362
  %v651 = vpack.c.b16 %v647, %v643
  %v652 = vpack.c.b16 %v648, %v644
  %v653 = vpack.c.b16 %v649, %v645
  %v654 = vpack.c.b16 %v650, %v646
  %v663 = vunpack.c.l.b16 %v423
  %v664 = vunpack.c.h.b16 %v423
  %v665 = vunpack.c.l.b16 %v424
  %v666 = vunpack.c.h.b16 %v424
  %v667 = vunpack.c.l.b16 %v425
  %v668 = vunpack.c.h.b16 %v425
  %v669 = vunpack.c.l.b16 %v426
  %v670 = vunpack.c.h.b16 %v426
  %v671 = vpack.c.b16 %v667, %v663
  %v672 = vpack.c.b16 %v668, %v664
  %v673 = vpack.c.b16 %v669, %v665
  %v674 = vpack.c.b16 %v670, %v666
  %v683 = vunpack.c.l.b16 %v487
  %v684 = vunpack.c.h.b16 %v487
  %v685 = vunpack.c.l.b16 %v488
  %v686 = vunpack.c.h.b16 %v488
  %v687 = vunpack.c.l.b16 %v489
  %v688 = vunpack.c.h.b16 %v489
  %v689 = vunpack.c.l.b16 %v490
  %v690 = vunpack.c.h.b16 %v490
  %v691 = vpack.c.b16 %v687, %v683
  %v692 = vpack.c.b16 %v688, %v684
  %v693 = vpack.c.b16 %v689, %v685
  %v694 = vpack.c.b16 %v690, %v686
  %v703 = vunpack.c.l.b16 %v551
  %v704 = vunpack.c.h.b16 %v551
  %v705 = vunpack.c.l.b16 %v552
  %v706 = vunpack.c.h.b16 %v552
  %v707 = vunpack.c.l.b16 %v553
  %v708 = vunpack.c.h.b16 %v553
  %v709 = vunpack.c.l.b16 %v554
  %v710 = vunpack.c.h.b16 %v554
  %v711 = vpack.c.b16 %v707, %v703
  %v712 = vpack.c.b16 %v708, %v704
  %v713 = vpack.c.b16 %v709, %v705
  %v714 = vpack.c.b16 %v710, %v706
  %v719 = vld [vmem:[%s1] sm:$0xff]
  %v720 = vld [vmem:[%s1 + $0x8] sm:$0xff]
  %v723 = vunpack.c.l.b16 %v719
  %v724 = vunpack.c.h.b16 %v719
  %v725 = vunpack.c.l.b16 %v720
  %v726 = vunpack.c.h.b16 %v720
  %v727 = vpack.c.b16 %v725, %v723
  %v728 = vpack.c.b16 %v726, %v724
  %v731 = vsel %vm122, %v728, 0
  %733 = vmatpush.bf16.msra.mxu0 %v691
  %734 = vmatpush.bf16.msra.mxu0 %v671
  %735 = vmatpush.bf16.msra.mxu0 %v651
  %736 = vmatpush.bf16.msra.mxu0 %v43
  %737 = vmatpush.bf16.msra.mxu0 %v627
  %738 = vmatpush.bf16.msra.mxu0 %v607
  %739 = vmatpush.bf16.msra.mxu0 %v587
  %740 = vmatpush.bf16.msra.mxu0 %v567
  %741 = vmatmul.bf16.gmra.mxu0 %v727
  %v742 = vpop.f32.mrf.mxu0
  %v743 = vadd.f32 0.0, %v742
  %v744 = vpop.f32.mrf.mxu0
  %v745 = vadd.f32 0.0, %v744
  %746 = vdwg.mxu0
  %747 = vmatpush.bf16.msra.mxu0 0
  %748 = vmatpush.bf16.msra.mxu0 0
  %749 = vmatpush.bf16.msra.mxu0 0
  %750 = vmatpush.bf16.msra.mxu0 0
  %751 = vmatpush.bf16.msra.mxu0 0
  %752 = vmatpush.bf16.msra.mxu0 0
  %753 = vmatpush.bf16.msra.mxu0 0
  %754 = vmatpush.bf16.msra.mxu0 %v711
  %755 = vmatmul.bf16.gmra.mxu0 %v731
  %v756 = vpop.f32.mrf.mxu0
  %v757 = vadd.f32 %v743, %v756
  %v758 = vpop.f32.mrf.mxu0
  %v759 = vadd.f32 %v745, %v758
  %760 = vdwg.mxu0
  %761 = vmatpush.bf16.msra.mxu0 %v692
  %762 = vmatpush.bf16.msra.mxu0 %v672
  %763 = vmatpush.bf16.msra.mxu0 %v652
  %764 = vmatpush.bf16.msra.mxu0 %v44
  %765 = vmatpush.bf16.msra.mxu0 %v628
  %766 = vmatpush.bf16.msra.mxu0 %v608
  %767 = vmatpush.bf16.msra.mxu0 %v588
  %768 = vmatpush.bf16.msra.mxu0 %v568
  %769 = vmatmul.bf16.gmra.mxu0 %v727
  %v770 = vpop.f32.mrf.mxu0
  %v771 = vadd.f32 0.0, %v770
  %v772 = vpop.f32.mrf.mxu0
  %v773 = vadd.f32 0.0, %v772
  %774 = vdwg.mxu0
  %775 = vmatpush.bf16.msra.mxu0 0
  %776 = vmatpush.bf16.msra.mxu0 0
  %777 = vmatpush.bf16.msra.mxu0 0
  %778 = vmatpush.bf16.msra.mxu0 0
  %779 = vmatpush.bf16.msra.mxu0 0
  %780 = vmatpush.bf16.msra.mxu0 0
  %781 = vmatpush.bf16.msra.mxu0 0
  %782 = vmatpush.bf16.msra.mxu0 %v712
  %783 = vmatmul.bf16.gmra.mxu0 %v731
  %v784 = vpop.f32.mrf.mxu0
  %v785 = vadd.f32 %v771, %v784
  %v786 = vpop.f32.mrf.mxu0
  %v787 = vadd.f32 %v773, %v786
  %788 = vdwg.mxu0
  %789 = vmatpush.bf16.msra.mxu0 %v693
  %790 = vmatpush.bf16.msra.mxu0 %v673
  %791 = vmatpush.bf16.msra.mxu0 %v653
  %792 = vmatpush.bf16.msra.mxu0 %v45
  %793 = vmatpush.bf16.msra.mxu0 %v629
  %794 = vmatpush.bf16.msra.mxu0 %v609
  %795 = vmatpush.bf16.msra.mxu0 %v589
  %796 = vmatpush.bf16.msra.mxu0 %v569
  %797 = vmatmul.bf16.gmra.mxu0 %v727
  %v798 = vpop.f32.mrf.mxu0
  %v799 = vadd.f32 0.0, %v798
  %v800 = vpop.f32.mrf.mxu0
  %v801 = vadd.f32 0.0, %v800
  %802 = vdwg.mxu0
  %803 = vmatpush.bf16.msra.mxu0 0
  %804 = vmatpush.bf16.msra.mxu0 0
  %805 = vmatpush.bf16.msra.mxu0 0
  %806 = vmatpush.bf16.msra.mxu0 0
  %807 = vmatpush.bf16.msra.mxu0 0
  %808 = vmatpush.bf16.msra.mxu0 0
  %809 = vmatpush.bf16.msra.mxu0 0
  %810 = vmatpush.bf16.msra.mxu0 %v713
  %811 = vmatmul.bf16.gmra.mxu0 %v731
  %v812 = vpop.f32.mrf.mxu0
  %v813 = vadd.f32 %v799, %v812
  %v814 = vpop.f32.mrf.mxu0
  %v815 = vadd.f32 %v801, %v814
  %816 = vdwg.mxu0
  %817 = vmatpush.bf16.msra.mxu0 %v694
  %818 = vmatpush.bf16.msra.mxu0 %v674
  %819 = vmatpush.bf16.msra.mxu0 %v654
  %820 = vmatpush.bf16.msra.mxu0 %v32
  %821 = vmatpush.bf16.msra.mxu0 %v630
  %822 = vmatpush.bf16.msra.mxu0 %v610
  %823 = vmatpush.bf16.msra.mxu0 %v590
  %824 = vmatpush.bf16.msra.mxu0 %v570
  %825 = vmatmul.bf16.gmra.mxu0 %v727
  %v826 = vpop.f32.mrf.mxu0
  %v827 = vadd.f32 0.0, %v826
  %v828 = vpop.f32.mrf.mxu0
  %v829 = vadd.f32 0.0, %v828
  %830 = vdwg.mxu0
  %831 = vmatpush.bf16.msra.mxu0 0
  %832 = vmatpush.bf16.msra.mxu0 0
  %833 = vmatpush.bf16.msra.mxu0 0
  %834 = vmatpush.bf16.msra.mxu0 0
  %835 = vmatpush.bf16.msra.mxu0 0
  %836 = vmatpush.bf16.msra.mxu0 0
  %837 = vmatpush.bf16.msra.mxu0 0
  %838 = vmatpush.bf16.msra.mxu0 %v714
  %839 = vmatmul.bf16.gmra.mxu0 %v731
  %v840 = vpop.f32.mrf.mxu0
  %v841 = vadd.f32 %v827, %v840
  %v842 = vpop.f32.mrf.mxu0
  %v843 = vadd.f32 %v829, %v842
  %844 = vdwg.mxu0
  %v845 = vld [vmem:[%s3] sm:$0xff]
  %v846 = vld [vmem:[%s3 + $0x8] sm:$0xff]
  %848 = vset.pattern.permute.xlu0 0
  %849 = vperm.xlu0 %848, %v845
  %v850 = vpop.permute.xlu0 %849
  %853 = vset.pattern.permute.xlu0 0
  %854 = vperm.xlu0 %853, %v846
  %v855 = vpop.permute.xlu0 %854
  %v857 = vmul.f32 %v850, %v757
  %v858 = vmul.f32 %v850, %v785
  %v859 = vmul.f32 %v850, %v813
  %v860 = vmul.f32 %v850, %v841
  %v861 = vmul.f32 %v855, %v759
  %v862 = vmul.f32 %v855, %v787
  %v863 = vmul.f32 %v855, %v815
  %v864 = vmul.f32 %v855, %v843
  %v865 = vld [vmem:[%s4] sm:$0xff]
  %v866 = vld [vmem:[%s4 + $0x8] sm:$0xff]
  %868 = vset.pattern.permute.xlu0 0
  %869 = vperm.xlu0 %868, %v865
  %v870 = vpop.permute.xlu0 %869
  %873 = vset.pattern.permute.xlu0 0
  %874 = vperm.xlu0 %873, %v866
  %v875 = vpop.permute.xlu0 %874
  %v877 = vadd.f32 %v857, %v870
  %v878 = vadd.f32 %v858, %v870
  %v879 = vadd.f32 %v859, %v870
  %v880 = vadd.f32 %v860, %v870
  %v881 = vadd.f32 %v861, %v875
  %v882 = vadd.f32 %v862, %v875
  %v883 = vadd.f32 %v863, %v875
  %v884 = vadd.f32 %v864, %v875
  %vm885 = vcmp.gt.f32.partialorder %v877, 0.0
  %vm886 = vcmp.gt.f32.partialorder %v878, 0.0
  %vm887 = vcmp.gt.f32.partialorder %v879, 0.0
  %vm888 = vcmp.gt.f32.partialorder %v880, 0.0
  %vm889 = vcmp.gt.f32.partialorder %v881, 0.0
  %vm890 = vcmp.gt.f32.partialorder %v882, 0.0
  %vm891 = vcmp.gt.f32.partialorder %v883, 0.0
  %vm892 = vcmp.gt.f32.partialorder %v884, 0.0
  %vm893 = vcmp.lt.f32.partialorder %v877, 0.0
  %vm894 = vcmp.lt.f32.partialorder %v878, 0.0
  %vm895 = vcmp.lt.f32.partialorder %v879, 0.0
  %vm896 = vcmp.lt.f32.partialorder %v880, 0.0
  %vm897 = vcmp.lt.f32.partialorder %v881, 0.0
  %vm898 = vcmp.lt.f32.partialorder %v882, 0.0
  %vm899 = vcmp.lt.f32.partialorder %v883, 0.0
  %vm900 = vcmp.lt.f32.partialorder %v884, 0.0
  %v901 = vsel %vm893, -1.0, 0.0
  %v902 = vsel %vm894, -1.0, 0.0
  %v903 = vsel %vm895, -1.0, 0.0
  %v904 = vsel %vm896, -1.0, 0.0
  %v905 = vsel %vm897, -1.0, 0.0
  %v906 = vsel %vm898, -1.0, 0.0
  %v907 = vsel %vm899, -1.0, 0.0
  %v908 = vsel %vm900, -1.0, 0.0
  %v909 = vsel %vm885, 1.0, %v901
  %v910 = vsel %vm886, 1.0, %v902
  %v911 = vsel %vm887, 1.0, %v903
  %v912 = vsel %vm888, 1.0, %v904
  %v913 = vsel %vm889, 1.0, %v905
  %v914 = vsel %vm890, 1.0, %v906
  %v915 = vsel %vm891, 1.0, %v907
  %v916 = vsel %vm892, 1.0, %v908
  %v917 = vpack.c.bf16 %v910, %v909
  %v918 = vpack.c.bf16 %v912, %v911
  %v919 = vpack.c.bf16 %v914, %v913
  %v920 = vpack.c.bf16 %v916, %v915
  %921 = vst [vmem:[%s5] sm:$0xff] %v917
  %922 = vst [vmem:[%s5 + $0x8] sm:$0xff] %v918
  %923 = vst [vmem:[%s5 + $0x10] sm:$0xff] %v919
  %924 = vst [vmem:[%s5 + $0x18] sm:$0xff] %v920
  %v925 = vunpack.c.l.bf16 %v917
  %v926 = vunpack.c.h.bf16 %v917
  %v927 = vunpack.c.l.bf16 %v918
  %v928 = vunpack.c.h.bf16 %v918
  %v929 = vunpack.c.l.bf16 %v919
  %v930 = vunpack.c.h.bf16 %v919
  %v931 = vunpack.c.l.bf16 %v920
  %v932 = vunpack.c.h.bf16 %v920
  %v933 = vadd.f32 %v925, %v926
  %v934 = vadd.f32 %v933, %v927
  %v935 = vadd.f32 %v934, %v928
  %936 = vadd.xlane.f32.xlu0 %v935
  %v937 = vpop.xlane.xlu0 %936
  %v938 = vadd.f32 %v929, %v930
  %v939 = vadd.f32 %v938, %v931
  %v940 = vadd.f32 %v939, %v932
  %941 = vadd.xlane.f32.xlu0 %v940
  %v942 = vpop.xlane.xlu0 %941
  %943 = vst.msk [vmem:[%s6] sm:$0xff] %vm250, %v937
  %944 = vst.msk [vmem:[%s6 + $0x8] sm:$0xff] %vm250, %v942
  %v949 = vunpack.c.l.b16 %v917
  %v950 = vunpack.c.h.b16 %v917
  %v951 = vunpack.c.l.b16 %v918
  %v952 = vunpack.c.h.b16 %v918
  %v953 = vunpack.c.l.b16 %v919
  %v954 = vunpack.c.h.b16 %v919
  %v955 = vunpack.c.l.b16 %v920
  %v956 = vunpack.c.h.b16 %v920
  %v957 = vpack.c.b16 %v953, %v949
  %v958 = vpack.c.b16 %v954, %v950
  %v959 = vpack.c.b16 %v955, %v951
  %v960 = vpack.c.b16 %v956, %v952
  %965 = vmatpush.bf16.xpose.msra.mxu0 0
  %966 = vmatpush.bf16.xpose.msra.mxu0 0
  %967 = vmatpush.bf16.xpose.msra.mxu0 0
  %968 = vmatpush.bf16.xpose.msra.mxu0 0
  %969 = vmatpush.bf16.xpose.msra.mxu0 0
  %970 = vmatpush.bf16.xpose.msra.mxu0 0
  %971 = vmatpush.bf16.xpose.msra.mxu0 0
  %972 = vmatpush.bf16.xpose.msra.mxu0 %v957
  %973 = vmatmul.bf16.gmra.mxu0 %v957
  %v974 = vpop.f32.mrf.mxu0
  %v975 = vadd.f32 0.0, %v974
  %v976 = vpop.f32.mrf.mxu0
  %v977 = vadd.f32 0.0, %v976
  %978 = vdwg.mxu0
  %979 = vmatpush.bf16.xpose.msra.mxu0 0
  %980 = vmatpush.bf16.xpose.msra.mxu0 0
  %981 = vmatpush.bf16.xpose.msra.mxu0 0
  %982 = vmatpush.bf16.xpose.msra.mxu0 0
  %983 = vmatpush.bf16.xpose.msra.mxu0 0
  %984 = vmatpush.bf16.xpose.msra.mxu0 0
  %985 = vmatpush.bf16.xpose.msra.mxu0 0
  %986 = vmatpush.bf16.xpose.msra.mxu0 %v958
  %987 = vmatmul.bf16.gmra.mxu0 %v958
  %v988 = vpop.f32.mrf.mxu0
  %v989 = vadd.f32 %v975, %v988
  %v990 = vpop.f32.mrf.mxu0
  %v991 = vadd.f32 %v977, %v990
  %992 = vdwg.mxu0
  %993 = vmatpush.bf16.xpose.msra.mxu0 0
  %994 = vmatpush.bf16.xpose.msra.mxu0 0
  %995 = vmatpush.bf16.xpose.msra.mxu0 0
  %996 = vmatpush.bf16.xpose.msra.mxu0 0
  %997 = vmatpush.bf16.xpose.msra.mxu0 0
  %998 = vmatpush.bf16.xpose.msra.mxu0 0
  %999 = vmatpush.bf16.xpose.msra.mxu0 0
  %1000 = vmatpush.bf16.xpose.msra.mxu0 %v959
  %1001 = vmatmul.bf16.gmra.mxu0 %v959
  %v1002 = vpop.f32.mrf.mxu0
  %v1003 = vadd.f32 %v989, %v1002
  %v1004 = vpop.f32.mrf.mxu0
  %v1005 = vadd.f32 %v991, %v1004
  %1006 = vdwg.mxu0
  %1007 = vmatpush.bf16.xpose.msra.mxu0 0
  %1008 = vmatpush.bf16.xpose.msra.mxu0 0
  %1009 = vmatpush.bf16.xpose.msra.mxu0 0
  %1010 = vmatpush.bf16.xpose.msra.mxu0 0
  %1011 = vmatpush.bf16.xpose.msra.mxu0 0
  %1012 = vmatpush.bf16.xpose.msra.mxu0 0
  %1013 = vmatpush.bf16.xpose.msra.mxu0 0
  %1014 = vmatpush.bf16.xpose.msra.mxu0 %v960
  %1015 = vmatmul.bf16.gmra.mxu0 %v960
  %v1016 = vpop.f32.mrf.mxu0
  %v1017 = vadd.f32 %v1003, %v1016
  %v1018 = vpop.f32.mrf.mxu0
  %v1019 = vadd.f32 %v1005, %v1018
  %1020 = vdwg.mxu0
  %1021 = vst.msk [vmem:[%s7] sm:$0xff] %vm122, %v1017
  %1022 = vst.msk [vmem:[%s7 + $0x8] sm:$0xff] %vm122, %v1019
  // Predicated region
  $region22: #{_block_forward_impl.6} parent=0 // pred_check
    _
  $region23: #{_block_forward_impl.6} parent=0 // pred_check_branch
    %1024 = sbr.rel (0) target = $region25
  $region24: #{_block_forward_impl.6} parent=0 // pred_region
    _
  $region25: #{_block_forward_impl.6} parent=0 // pred_fallthru
    _
  // Predicated region
  $region26: #{_block_forward_impl.6} parent=0 // pred_check
    _
  $region27: #{_block_forward_impl.6} parent=0 // pred_check_branch
    %1026 = sbr.rel (0) target = $region29
  $region28: #{_block_forward_impl.6} parent=0 // pred_region
    _
  $region29: #{_block_forward_impl.6} parent=0 // pred_fallthru
    _
  // Predicated region
  $region30: #{_block_forward_impl.6} parent=0 // pred_check
    _
  $region31: #{_block_forward_impl.6} parent=0 // pred_check_branch
    %1028 = sbr.rel (0) target = $region33
  $region32: #{_block_forward_impl.6} parent=0 // pred_region
    _
  $region33: #{_block_forward_impl.6} parent=0 // pred_fallthru
    _
  // Predicated region
  $region34: #{_block_forward_impl.6} parent=0 // pred_check
    _
  $region35: #{_block_forward_impl.6} parent=0 // pred_check_branch
    %1030 = sbr.rel (0) target = $region37
  $region36: #{_block_forward_impl.6} parent=0 // pred_region
    _
  $region37: #{_block_forward_impl.6} parent=0 // pred_fallthru
    _
  // Predicated region
  $region38: #{_block_forward_impl.6} parent=0 // pred_check
    _
  $region39: #{_block_forward_impl.6} parent=0 // pred_check_branch
    %1032 = sbr.rel (0) target = $region41
  $region40: #{_block_forward_impl.6} parent=0 // pred_region
    _
  $region41: #{_block_forward_impl.6} parent=0 // pred_fallthru
    _
  // Predicated region
  $region42: #{_block_forward_impl.6} parent=0 // pred_check
    _
  $region43: #{_block_forward_impl.6} parent=0 // pred_check_branch
    %1034 = sbr.rel (0) target = $region45
  $region44: #{_block_forward_impl.6} parent=0 // pred_region
    _
  $region45: #{_block_forward_impl.6} parent=0 // pred_fallthru
    _

// kernel: _block_forward_impl.5
$region0: #{_block_forward_impl.5}
  #allocation0 [shape = 'u32[]', space=smem, size = 0x4, offset = 0x4, fixed_abs, tag = 'smem constant byte address 0x4 - core index']
  #allocation1 [shape = 'u32[72,128]{1,0:T(1,128)}', space=vmem, size = 0x9000, scoped, tag = 'internal scratch']
  %s0 = inlined_call_operand.vmem [shape: f32[8,512], index: 0, kind: input, shape index: {}]
  %s1 = inlined_call_operand.vmem [shape: f32[16,8], index: 1, kind: input, shape index: {}]
  %s2 = inlined_call_operand.vmem [shape: f32[16,1], index: 2, kind: input, shape index: {}]
  %s3 = inlined_call_operand.vmem [shape: f32[16,1], index: 3, kind: input, shape index: {}]
  %s4 = inlined_call_operand.vmem [shape: bf16[16,144], index: 4, kind: input, shape index: {}]
  %s5 = inlined_call_operand.vmem [shape: bf16[9,1,512], index: 5, kind: input, shape index: {}]
  %s6 = inlined_call_operand.vmem [shape: bf16[16,512], index: 6, kind: output, shape index: {0}]
  %s7 = inlined_call_operand.vmem [shape: f32[1,16,1], index: 7, kind: output, shape index: {1}]
  %s8 = inlined_call_operand.vmem [shape: f32[1,16,1], index: 8, kind: output, shape index: {2}]
  %9 = xla_tuple %s6, %s7, %s8
  %s10 = sld [smem:[#allocation0]]
  $region50: #{_block_forward_impl.5} parent=0
    _
  %s12 = ssub.s32 1, %s10
  %s13 = scalar_select 0, %s12, %s10
  // Predicated region
  $region2: #{_block_forward_impl.5} parent=0 // pred_check
    _
  $region3: #{_block_forward_impl.5} parent=0 // pred_check_branch
    %15 = sbr.rel (0) target = $region5
  $region4: #{_block_forward_impl.5} parent=0 // pred_region
    _
  $region5: #{_block_forward_impl.5} parent=0 // pred_fallthru
    _
  // Predicated region
  $region6: #{_block_forward_impl.5} parent=0 // pred_check
    _
  $region7: #{_block_forward_impl.5} parent=0 // pred_check_branch
    %17 = sbr.rel (0) target = $region9
  $region8: #{_block_forward_impl.5} parent=0 // pred_region
    _
  $region9: #{_block_forward_impl.5} parent=0 // pred_fallthru
    _
  // Predicated region
  $region10: #{_block_forward_impl.5} parent=0 // pred_check
    _
  $region11: #{_block_forward_impl.5} parent=0 // pred_check_branch
    %19 = sbr.rel (0) target = $region13
  $region12: #{_block_forward_impl.5} parent=0 // pred_region
    _
  $region13: #{_block_forward_impl.5} parent=0 // pred_fallthru
    _
  // Predicated region
  $region14: #{_block_forward_impl.5} parent=0 // pred_check
    _
  $region15: #{_block_forward_impl.5} parent=0 // pred_check_branch
    %21 = sbr.rel (0) target = $region17
  $region16: #{_block_forward_impl.5} parent=0 // pred_region
    _
  $region17: #{_block_forward_impl.5} parent=0 // pred_fallthru
    _
  // Predicated region
  $region18: #{_block_forward_impl.5} parent=0 // pred_check
    _
  $region19: #{_block_forward_impl.5} parent=0 // pred_check_branch
    %23 = sbr.rel (0) target = $region21
  $region20: #{_block_forward_impl.5} parent=0 // pred_region
    _
  $region21: #{_block_forward_impl.5} parent=0 // pred_fallthru
    _
  // Predicated region
  $region22: #{_block_forward_impl.5} parent=0 // pred_check
    _
  $region23: #{_block_forward_impl.5} parent=0 // pred_check_branch
    %25 = sbr.rel (0) target = $region25
  $region24: #{_block_forward_impl.5} parent=0 // pred_region
    _
  $region25: #{_block_forward_impl.5} parent=0 // pred_fallthru
    _
  %v27 = vld [vmem:[%s1] sm:$0xff]
  %v28 = vld [vmem:[%s1 + $0x8] sm:$0xff]
  %v29 = vld [vmem:[%s0] sm:$0xff]
  %v30 = vld [vmem:[%s0 + $0x8] sm:$0xff]
  %v31 = vld [vmem:[%s0 + $0x10] sm:$0xff]
  %v32 = vld [vmem:[%s0 + $0x18] sm:$0xff]
  %vm33 = vcmask 64512
  %v35 = vsel %vm33, %v27, 0
  %v38 = vsel %vm33, %v28, 0
  %40 = vmatpush.msra.mxu0 0.0
  %41 = vmatpush.msra.mxu0 0.0
  %42 = vmatpush.msra.mxu0 0.0
  %43 = vmatpush.msra.mxu0 0.0
  %44 = vmatpush.msra.mxu0 0.0
  %45 = vmatpush.msra.mxu0 0.0
  %46 = vmatpush.msra.mxu0 0.0
  %47 = vmatpush.msra.mxu0 0.0
  %48 = vmatpush.msra.mxu0 0.0
  %49 = vmatpush.msra.mxu0 0.0
  %50 = vmatpush.msra.mxu0 0.0
  %51 = vmatpush.msra.mxu0 0.0
  %52 = vmatpush.msra.mxu0 0.0
  %53 = vmatpush.msra.mxu0 0.0
  %54 = vmatpush.msra.mxu0 0.0
  %55 = vmatpush.msra.mxu0 %v29
  %56 = vmatmul.f32.gmra.mxu0 %v35
  %v57 = vpop.f32.mrf.mxu0
  %v58 = vadd.f32 0.0, %v57
  %59 = vmatmul.f32.gmra.mxu0 %v38
  %v60 = vpop.f32.mrf.mxu0
  %v61 = vadd.f32 0.0, %v60
  %62 = vdwg.mxu0
  %63 = vmatpush.msra.mxu0 0.0
  %64 = vmatpush.msra.mxu0 0.0
  %65 = vmatpush.msra.mxu0 0.0
  %66 = vmatpush.msra.mxu0 0.0
  %67 = vmatpush.msra.mxu0 0.0
  %68 = vmatpush.msra.mxu0 0.0
  %69 = vmatpush.msra.mxu0 0.0
  %70 = vmatpush.msra.mxu0 0.0
  %71 = vmatpush.msra.mxu0 0.0
  %72 = vmatpush.msra.mxu0 0.0
  %73 = vmatpush.msra.mxu0 0.0
  %74 = vmatpush.msra.mxu0 0.0
  %75 = vmatpush.msra.mxu0 0.0
  %76 = vmatpush.msra.mxu0 0.0
  %77 = vmatpush.msra.mxu0 0.0
  %78 = vmatpush.msra.mxu0 %v30
  %79 = vmatmul.f32.gmra.mxu0 %v35
  %v80 = vpop.f32.mrf.mxu0
  %v81 = vadd.f32 0.0, %v80
  %82 = vmatmul.f32.gmra.mxu0 %v38
  %v83 = vpop.f32.mrf.mxu0
  %v84 = vadd.f32 0.0, %v83
  %85 = vdwg.mxu0
  %86 = vmatpush.msra.mxu0 0.0
  %87 = vmatpush.msra.mxu0 0.0
  %88 = vmatpush.msra.mxu0 0.0
  %89 = vmatpush.msra.mxu0 0.0
  %90 = vmatpush.msra.mxu0 0.0
  %91 = vmatpush.msra.mxu0 0.0
  %92 = vmatpush.msra.mxu0 0.0
  %93 = vmatpush.msra.mxu0 0.0
  %94 = vmatpush.msra.mxu0 0.0
  %95 = vmatpush.msra.mxu0 0.0
  %96 = vmatpush.msra.mxu0 0.0
  %97 = vmatpush.msra.mxu0 0.0
  %98 = vmatpush.msra.mxu0 0.0
  %99 = vmatpush.msra.mxu0 0.0
  %100 = vmatpush.msra.mxu0 0.0
  %101 = vmatpush.msra.mxu0 %v31
  %102 = vmatmul.f32.gmra.mxu0 %v35
  %v103 = vpop.f32.mrf.mxu0
  %v104 = vadd.f32 0.0, %v103
  %105 = vmatmul.f32.gmra.mxu0 %v38
  %v106 = vpop.f32.mrf.mxu0
  %v107 = vadd.f32 0.0, %v106
  %108 = vdwg.mxu0
  %109 = vmatpush.msra.mxu0 0.0
  %110 = vmatpush.msra.mxu0 0.0
  %111 = vmatpush.msra.mxu0 0.0
  %112 = vmatpush.msra.mxu0 0.0
  %113 = vmatpush.msra.mxu0 0.0
  %114 = vmatpush.msra.mxu0 0.0
  %115 = vmatpush.msra.mxu0 0.0
  %116 = vmatpush.msra.mxu0 0.0
  %117 = vmatpush.msra.mxu0 0.0
  %118 = vmatpush.msra.mxu0 0.0
  %119 = vmatpush.msra.mxu0 0.0
  %120 = vmatpush.msra.mxu0 0.0
  %121 = vmatpush.msra.mxu0 0.0
  %122 = vmatpush.msra.mxu0 0.0
  %123 = vmatpush.msra.mxu0 0.0
  %124 = vmatpush.msra.mxu0 %v32
  %125 = vmatmul.f32.gmra.mxu0 %v35
  %v126 = vpop.f32.mrf.mxu0
  %v127 = vadd.f32 0.0, %v126
  %128 = vmatmul.f32.gmra.mxu0 %v38
  %v129 = vpop.f32.mrf.mxu0
  %v130 = vadd.f32 0.0, %v129
  %131 = vdwg.mxu0
  %v132 = vld [vmem:[%s2] sm:$0xff]
  %v133 = vld [vmem:[%s2 + $0x8] sm:$0xff]
  %135 = vset.pattern.permute.xlu0 0
  %136 = vperm.xlu0 %135, %v132
  %v137 = vpop.permute.xlu0 %136
  %140 = vset.pattern.permute.xlu0 0
  %141 = vperm.xlu0 %140, %v133
  %v142 = vpop.permute.xlu0 %141
  %v144 = vmul.f32 %v137, %v58
  %v145 = vmul.f32 %v137, %v81
  %v146 = vmul.f32 %v137, %v104
  %v147 = vmul.f32 %v137, %v127
  %v148 = vmul.f32 %v142, %v61
  %v149 = vmul.f32 %v142, %v84
  %v150 = vmul.f32 %v142, %v107
  %v151 = vmul.f32 %v142, %v130
  %v152 = vld [vmem:[%s3] sm:$0xff]
  %v153 = vld [vmem:[%s3 + $0x8] sm:$0xff]
  %155 = vset.pattern.permute.xlu0 0
  %156 = vperm.xlu0 %155, %v152
  %v157 = vpop.permute.xlu0 %156
  %160 = vset.pattern.permute.xlu0 0
  %161 = vperm.xlu0 %160, %v153
  %v162 = vpop.permute.xlu0 %161
  %v164 = vadd.f32 %v144, %v157
  %v165 = vadd.f32 %v145, %v157
  %v166 = vadd.f32 %v146, %v157
  %v167 = vadd.f32 %v147, %v157
  %v168 = vadd.f32 %v148, %v162
  %v169 = vadd.f32 %v149, %v162
  %v170 = vadd.f32 %v150, %v162
  %v171 = vadd.f32 %v151, %v162
  %vm172 = vcmp.gt.f32.partialorder %v164, 0.0
  %vm173 = vcmp.gt.f32.partialorder %v165, 0.0
  %vm174 = vcmp.gt.f32.partialorder %v166, 0.0
  %vm175 = vcmp.gt.f32.partialorder %v167, 0.0
  %vm176 = vcmp.gt.f32.partialorder %v168, 0.0
  %vm177 = vcmp.gt.f32.partialorder %v169, 0.0
  %vm178 = vcmp.gt.f32.partialorder %v170, 0.0
  %vm179 = vcmp.gt.f32.partialorder %v171, 0.0
  %vm180 = vcmp.lt.f32.partialorder %v164, 0.0
  %vm181 = vcmp.lt.f32.partialorder %v165, 0.0
  %vm182 = vcmp.lt.f32.partialorder %v166, 0.0
  %vm183 = vcmp.lt.f32.partialorder %v167, 0.0
  %vm184 = vcmp.lt.f32.partialorder %v168, 0.0
  %vm185 = vcmp.lt.f32.partialorder %v169, 0.0
  %vm186 = vcmp.lt.f32.partialorder %v170, 0.0
  %vm187 = vcmp.lt.f32.partialorder %v171, 0.0
  %v188 = vsel %vm180, -1.0, 0.0
  %v189 = vsel %vm181, -1.0, 0.0
  %v190 = vsel %vm182, -1.0, 0.0
  %v191 = vsel %vm183, -1.0, 0.0
  %v192 = vsel %vm184, -1.0, 0.0
  %v193 = vsel %vm185, -1.0, 0.0
  %v194 = vsel %vm186, -1.0, 0.0
  %v195 = vsel %vm187, -1.0, 0.0
  %v196 = vsel %vm172, 1.0, %v188
  %v197 = vsel %vm173, 1.0, %v189
  %v198 = vsel %vm174, 1.0, %v190
  %v199 = vsel %vm175, 1.0, %v191
  %v200 = vsel %vm176, 1.0, %v192
  %v201 = vsel %vm177, 1.0, %v193
  %v202 = vsel %vm178, 1.0, %v194
  %v203 = vsel %vm179, 1.0, %v195
  %v204 = vpack.c.bf16 %v197, %v196
  %v205 = vpack.c.bf16 %v199, %v198
  %v206 = vpack.c.bf16 %v201, %v200
  %v207 = vpack.c.bf16 %v203, %v202
  %208 = vst [vmem:[%s6] sm:$0xff] %v204
  %209 = vst [vmem:[%s6 + $0x8] sm:$0xff] %v205
  %210 = vst [vmem:[%s6 + $0x10] sm:$0xff] %v206
  %211 = vst [vmem:[%s6 + $0x18] sm:$0xff] %v207
  %v214 = vunpack.c.h.b16 %v205
  %v215 = vunpack.c.h.b16 %v207
  %v216 = vpack.c.b16 %v215, %v214
  %217 = vrot.lane.b32.xlu0 %v216, 17
  %v218 = vpop.permute.xlu0 %217
  %v221 = vunpack.c.l.b16 %v204
  %v222 = vunpack.c.h.b16 %v204
  %v223 = vunpack.c.l.b16 %v205
  %v224 = vunpack.c.l.b16 %v206
  %v225 = vunpack.c.h.b16 %v206
  %v226 = vunpack.c.l.b16 %v207
  %v227 = vpack.c.b16 %v224, %v221
  %v228 = vpack.c.b16 %v225, %v222
  %v229 = vpack.c.b16 %v226, %v223
  %230 = vrot.lane.b32.xlu0 %v227, 17
  %v231 = vpop.permute.xlu0 %230
  %232 = vrot.lane.b32.xlu0 %v228, 17
  %v233 = vpop.permute.xlu0 %232
  %234 = vrot.lane.b32.xlu0 %v229, 17
  %v235 = vpop.permute.xlu0 %234
  %vm236 = vcmask 138240
  %v237 = vsel %vm236, %v231, %v233
  %v238 = vsel %vm236, %v233, %v235
  %v239 = vsel %vm236, %v235, %v218
  %vm243 = vcmask 138240
  %v246 = vsel %vm243, %v218, %v231
  %v248 = vld [vmem:[%s5] sm:$0xf]
  %250 = vst [vmem:[#allocation1] ss:$9 sm:$0xff] %v248
  %v251 = vld [vmem:[#allocation1] sm:$0xff]
  %v252 = vld [vmem:[#allocation1 + $0x9] sm:$0xff]
  %v253 = vld [vmem:[#allocation1 + $0x12] sm:$0xff]
  %v254 = vld [vmem:[#allocation1 + $0x1b] sm:$0xff]
  %v255 = vpack.i.b16 %v251, %v251
  %v257 = vperm.slane %v255, 0
  %v258 = vpack.i.b16 %v252, %v252
  %v260 = vperm.slane %v258, 0
  %v261 = vpack.i.b16 %v253, %v253
  %v263 = vperm.slane %v261, 0
  %v264 = vpack.i.b16 %v254, %v254
  %v266 = vperm.slane %v264, 0
  %v267 = vunpack.c.l.bf16 %v246
  %v268 = vunpack.c.l.bf16 %v237
  %v269 = vunpack.c.l.bf16 %v238
  %v270 = vunpack.c.l.bf16 %v239
  %v271 = vunpack.c.h.bf16 %v246
  %v272 = vunpack.c.h.bf16 %v237
  %v273 = vunpack.c.h.bf16 %v238
  %v274 = vunpack.c.h.bf16 %v239
  %v275 = vunpack.c.l.bf16 %v257
  %v276 = vunpack.c.l.bf16 %v260
  %v277 = vunpack.c.l.bf16 %v263
  %v278 = vunpack.c.l.bf16 %v266
  %v279 = vmul.f32 %v267, %v275
  %v280 = vmul.f32 %v268, %v276
  %v281 = vmul.f32 %v269, %v277
  %v282 = vmul.f32 %v270, %v278
  %v283 = vmul.f32 %v271, %v275
  %v284 = vmul.f32 %v272, %v276
  %v285 = vmul.f32 %v273, %v277
  %v286 = vmul.f32 %v274, %v278
  %v287 = vpack.c.bf16 %v280, %v279
  %v288 = vpack.c.bf16 %v282, %v281
  %v289 = vpack.c.bf16 %v284, %v283
  %v290 = vpack.c.bf16 %v286, %v285
  %291 = vrot.lane.b32.xlu0 %v216, 16
  %v292 = vpop.permute.xlu0 %291
  %293 = vrot.lane.b32.xlu0 %v227, 16
  %v294 = vpop.permute.xlu0 %293
  %295 = vrot.lane.b32.xlu0 %v228, 16
  %v296 = vpop.permute.xlu0 %295
  %297 = vrot.lane.b32.xlu0 %v229, 16
  %v298 = vpop.permute.xlu0 %297
  %vm299 = vcmask 130048
  %v300 = vsel %vm299, %v294, %v296
  %v301 = vsel %vm299, %v296, %v298
  %v302 = vsel %vm299, %v298, %v292
  %vm306 = vcmask 130048
  %v309 = vsel %vm306, %v292, %v294
  %s311 = scalar_lea.vmem %s5, 4
  %v312 = vld [vmem:[%s311] sm:$0xf]
  %314 = vst [vmem:[#allocation1] ss:$9 sm:$0xff] %v312
  %v315 = vld [vmem:[#allocation1] sm:$0xff]
  %v316 = vld [vmem:[#allocation1 + $0x9] sm:$0xff]
  %v317 = vld [vmem:[#allocation1 + $0x12] sm:$0xff]
  %v318 = vld [vmem:[#allocation1 + $0x1b] sm:$0xff]
  %v319 = vpack.i.b16 %v315, %v315
  %v321 = vperm.slane %v319, 0
  %v322 = vpack.i.b16 %v316, %v316
  %v324 = vperm.slane %v322, 0
  %v325 = vpack.i.b16 %v317, %v317
  %v327 = vperm.slane %v325, 0
  %v328 = vpack.i.b16 %v318, %v318
  %v330 = vperm.slane %v328, 0
  %v331 = vunpack.c.l.bf16 %v309
  %v332 = vunpack.c.l.bf16 %v300
  %v333 = vunpack.c.l.bf16 %v301
  %v334 = vunpack.c.l.bf16 %v302
  %v335 = vunpack.c.h.bf16 %v309
  %v336 = vunpack.c.h.bf16 %v300
  %v337 = vunpack.c.h.bf16 %v301
  %v338 = vunpack.c.h.bf16 %v302
  %v339 = vunpack.c.l.bf16 %v321
  %v340 = vunpack.c.l.bf16 %v324
  %v341 = vunpack.c.l.bf16 %v327
  %v342 = vunpack.c.l.bf16 %v330
  %v343 = vmul.f32 %v331, %v339
  %v344 = vmul.f32 %v332, %v340
  %v345 = vmul.f32 %v333, %v341
  %v346 = vmul.f32 %v334, %v342
  %v347 = vmul.f32 %v335, %v339
  %v348 = vmul.f32 %v336, %v340
  %v349 = vmul.f32 %v337, %v341
  %v350 = vmul.f32 %v338, %v342
  %v351 = vpack.c.bf16 %v344, %v343
  %v352 = vpack.c.bf16 %v346, %v345
  %v353 = vpack.c.bf16 %v348, %v347
  %v354 = vpack.c.bf16 %v350, %v349
  %355 = vrot.lane.b32.xlu0 %v216, 15
  %v356 = vpop.permute.xlu0 %355
  %357 = vrot.lane.b32.xlu0 %v227, 15
  %v358 = vpop.permute.xlu0 %357
  %359 = vrot.lane.b32.xlu0 %v228, 15
  %v360 = vpop.permute.xlu0 %359
  %361 = vrot.lane.b32.xlu0 %v229, 15
  %v362 = vpop.permute.xlu0 %361
  %vm363 = vcmask 121856
  %v364 = vsel %vm363, %v358, %v360
  %v365 = vsel %vm363, %v360, %v362
  %v366 = vsel %vm363, %v362, %v356
  %vm370 = vcmask 121856
  %v373 = vsel %vm370, %v356, %v358
  %s375 = scalar_lea.vmem %s5, 8
  %v376 = vld [vmem:[%s375] sm:$0xf]
  %378 = vst [vmem:[#allocation1] ss:$9 sm:$0xff] %v376
  %v379 = vld [vmem:[#allocation1] sm:$0xff]
  %v380 = vld [vmem:[#allocation1 + $0x9] sm:$0xff]
  %v381 = vld [vmem:[#allocation1 + $0x12] sm:$0xff]
  %v382 = vld [vmem:[#allocation1 + $0x1b] sm:$0xff]
  %v383 = vpack.i.b16 %v379, %v379
  %v385 = vperm.slane %v383, 0
  %v386 = vpack.i.b16 %v380, %v380
  %v388 = vperm.slane %v386, 0
  %v389 = vpack.i.b16 %v381, %v381
  %v391 = vperm.slane %v389, 0
  %v392 = vpack.i.b16 %v382, %v382
  %v394 = vperm.slane %v392, 0
  %v395 = vunpack.c.l.bf16 %v373
  %v396 = vunpack.c.l.bf16 %v364
  %v397 = vunpack.c.l.bf16 %v365
  %v398 = vunpack.c.l.bf16 %v366
  %v399 = vunpack.c.h.bf16 %v373
  %v400 = vunpack.c.h.bf16 %v364
  %v401 = vunpack.c.h.bf16 %v365
  %v402 = vunpack.c.h.bf16 %v366
  %v403 = vunpack.c.l.bf16 %v385
  %v404 = vunpack.c.l.bf16 %v388
  %v405 = vunpack.c.l.bf16 %v391
  %v406 = vunpack.c.l.bf16 %v394
  %v407 = vmul.f32 %v395, %v403
  %v408 = vmul.f32 %v396, %v404
  %v409 = vmul.f32 %v397, %v405
  %v410 = vmul.f32 %v398, %v406
  %v411 = vmul.f32 %v399, %v403
  %v412 = vmul.f32 %v400, %v404
  %v413 = vmul.f32 %v401, %v405
  %v414 = vmul.f32 %v402, %v406
  %v415 = vpack.c.bf16 %v408, %v407
  %v416 = vpack.c.bf16 %v410, %v409
  %v417 = vpack.c.bf16 %v412, %v411
  %v418 = vpack.c.bf16 %v414, %v413
  %419 = vrot.lane.b32.xlu0 %v216, 1
  %v420 = vpop.permute.xlu0 %419
  %421 = vrot.lane.b32.xlu0 %v227, 1
  %v422 = vpop.permute.xlu0 %421
  %423 = vrot.lane.b32.xlu0 %v228, 1
  %v424 = vpop.permute.xlu0 %423
  %425 = vrot.lane.b32.xlu0 %v229, 1
  %v426 = vpop.permute.xlu0 %425
  %vm427 = vcmask 7168
  %v428 = vsel %vm427, %v422, %v424
  %v429 = vsel %vm427, %v424, %v426
  %v430 = vsel %vm427, %v426, %v420
  %vm434 = vcmask 7168
  %v437 = vsel %vm434, %v420, %v422
  %s439 = scalar_lea.vmem %s5, 12
  %v440 = vld [vmem:[%s439] sm:$0xf]
  %442 = vst [vmem:[#allocation1] ss:$9 sm:$0xff] %v440
  %v443 = vld [vmem:[#allocation1] sm:$0xff]
  %v444 = vld [vmem:[#allocation1 + $0x9] sm:$0xff]
  %v445 = vld [vmem:[#allocation1 + $0x12] sm:$0xff]
  %v446 = vld [vmem:[#allocation1 + $0x1b] sm:$0xff]
  %v447 = vpack.i.b16 %v443, %v443
  %v449 = vperm.slane %v447, 0
  %v450 = vpack.i.b16 %v444, %v444
  %v452 = vperm.slane %v450, 0
  %v453 = vpack.i.b16 %v445, %v445
  %v455 = vperm.slane %v453, 0
  %v456 = vpack.i.b16 %v446, %v446
  %v458 = vperm.slane %v456, 0
  %v459 = vunpack.c.l.bf16 %v437
  %v460 = vunpack.c.l.bf16 %v428
  %v461 = vunpack.c.l.bf16 %v429
  %v462 = vunpack.c.l.bf16 %v430
  %v463 = vunpack.c.h.bf16 %v437
  %v464 = vunpack.c.h.bf16 %v428
  %v465 = vunpack.c.h.bf16 %v429
  %v466 = vunpack.c.h.bf16 %v430
  %v467 = vunpack.c.l.bf16 %v449
  %v468 = vunpack.c.l.bf16 %v452
  %v469 = vunpack.c.l.bf16 %v455
  %v470 = vunpack.c.l.bf16 %v458
  %v471 = vmul.f32 %v459, %v467
  %v472 = vmul.f32 %v460, %v468
  %v473 = vmul.f32 %v461, %v469
  %v474 = vmul.f32 %v462, %v470
  %v475 = vmul.f32 %v463, %v467
  %v476 = vmul.f32 %v464, %v468
  %v477 = vmul.f32 %v465, %v469
  %v478 = vmul.f32 %v466, %v470
  %v479 = vpack.c.bf16 %v472, %v471
  %v480 = vpack.c.bf16 %v474, %v473
  %v481 = vpack.c.bf16 %v476, %v475
  %v482 = vpack.c.bf16 %v478, %v477
  %483 = vrot.lane.b32.xlu0 %v227, 127
  %v484 = vpop.permute.xlu0 %483
  %485 = vrot.lane.b32.xlu0 %v228, 127
  %v486 = vpop.permute.xlu0 %485
  %487 = vrot.lane.b32.xlu0 %v229, 127
  %v488 = vpop.permute.xlu0 %487
  %489 = vrot.lane.b32.xlu0 %v216, 127
  %v490 = vpop.permute.xlu0 %489
  %vm491 = vcmask 1039360
  %v492 = vsel %vm491, %v484, %v486
  %v493 = vsel %vm491, %v486, %v488
  %v494 = vsel %vm491, %v488, %v490
  %vm498 = vcmask 1039360
  %v501 = vsel %vm498, %v490, %v484
  %s503 = scalar_lea.vmem %s5, 20
  %v504 = vld [vmem:[%s503] sm:$0xf]
  %506 = vst [vmem:[#allocation1] ss:$9 sm:$0xff] %v504
  %v507 = vld [vmem:[#allocation1] sm:$0xff]
  %v508 = vld [vmem:[#allocation1 + $0x9] sm:$0xff]
  %v509 = vld [vmem:[#allocation1 + $0x12] sm:$0xff]
  %v510 = vld [vmem:[#allocation1 + $0x1b] sm:$0xff]
  %v511 = vpack.i.b16 %v507, %v507
  %v513 = vperm.slane %v511, 0
  %v514 = vpack.i.b16 %v508, %v508
  %v516 = vperm.slane %v514, 0
  %v517 = vpack.i.b16 %v509, %v509
  %v519 = vperm.slane %v517, 0
  %v520 = vpack.i.b16 %v510, %v510
  %v522 = vperm.slane %v520, 0
  %v523 = vunpack.c.l.bf16 %v492
  %v524 = vunpack.c.l.bf16 %v493
  %v525 = vunpack.c.l.bf16 %v494
  %v526 = vunpack.c.l.bf16 %v501
  %v527 = vunpack.c.h.bf16 %v492
  %v528 = vunpack.c.h.bf16 %v493
  %v529 = vunpack.c.h.bf16 %v494
  %v530 = vunpack.c.h.bf16 %v501
  %v531 = vunpack.c.l.bf16 %v513
  %v532 = vunpack.c.l.bf16 %v516
  %v533 = vunpack.c.l.bf16 %v519
  %v534 = vunpack.c.l.bf16 %v522
  %v535 = vmul.f32 %v523, %v531
  %v536 = vmul.f32 %v524, %v532
  %v537 = vmul.f32 %v525, %v533
  %v538 = vmul.f32 %v526, %v534
  %v539 = vmul.f32 %v527, %v531
  %v540 = vmul.f32 %v528, %v532
  %v541 = vmul.f32 %v529, %v533
  %v542 = vmul.f32 %v530, %v534
  %v543 = vpack.c.bf16 %v536, %v535
  %v544 = vpack.c.bf16 %v538, %v537
  %v545 = vpack.c.bf16 %v540, %v539
  %v546 = vpack.c.bf16 %v542, %v541
  %547 = vrot.lane.b32.xlu0 %v227, 113
  %v548 = vpop.permute.xlu0 %547
  %549 = vrot.lane.b32.xlu0 %v228, 113
  %v550 = vpop.permute.xlu0 %549
  %551 = vrot.lane.b32.xlu0 %v229, 113
  %v552 = vpop.permute.xlu0 %551
  %553 = vrot.lane.b32.xlu0 %v216, 113
  %v554 = vpop.permute.xlu0 %553
  %vm555 = vcmask 924672
  %v556 = vsel %vm555, %v548, %v550
  %v557 = vsel %vm555, %v550, %v552
  %v558 = vsel %vm555, %v552, %v554
  %vm562 = vcmask 924672
  %v565 = vsel %vm562, %v554, %v548
  %s567 = scalar_lea.vmem %s5, 24
  %v568 = vld [vmem:[%s567] sm:$0xf]
  %570 = vst [vmem:[#allocation1] ss:$9 sm:$0xff] %v568
  %v571 = vld [vmem:[#allocation1] sm:$0xff]
  %v572 = vld [vmem:[#allocation1 + $0x9] sm:$0xff]
  %v573 = vld [vmem:[#allocation1 + $0x12] sm:$0xff]
  %v574 = vld [vmem:[#allocation1 + $0x1b] sm:$0xff]
  %v575 = vpack.i.b16 %v571, %v571
  %v577 = vperm.slane %v575, 0
  %v578 = vpack.i.b16 %v572, %v572
  %v580 = vperm.slane %v578, 0
  %v581 = vpack.i.b16 %v573, %v573
  %v583 = vperm.slane %v581, 0
  %v584 = vpack.i.b16 %v574, %v574
  %v586 = vperm.slane %v584, 0
  %v587 = vunpack.c.l.bf16 %v556
  %v588 = vunpack.c.l.bf16 %v557
  %v589 = vunpack.c.l.bf16 %v558
  %v590 = vunpack.c.l.bf16 %v565
  %v591 = vunpack.c.h.bf16 %v556
  %v592 = vunpack.c.h.bf16 %v557
  %v593 = vunpack.c.h.bf16 %v558
  %v594 = vunpack.c.h.bf16 %v565
  %v595 = vunpack.c.l.bf16 %v577
  %v596 = vunpack.c.l.bf16 %v580
  %v597 = vunpack.c.l.bf16 %v583
  %v598 = vunpack.c.l.bf16 %v586
  %v599 = vmul.f32 %v587, %v595
  %v600 = vmul.f32 %v588, %v596
  %v601 = vmul.f32 %v589, %v597
  %v602 = vmul.f32 %v590, %v598
  %v603 = vmul.f32 %v591, %v595
  %v604 = vmul.f32 %v592, %v596
  %v605 = vmul.f32 %v593, %v597
  %v606 = vmul.f32 %v594, %v598
  %v607 = vpack.c.bf16 %v600, %v599
  %v608 = vpack.c.bf16 %v602, %v601
  %v609 = vpack.c.bf16 %v604, %v603
  %v610 = vpack.c.bf16 %v606, %v605
  %611 = vrot.lane.b32.xlu0 %v227, 112
  %v612 = vpop.permute.xlu0 %611
  %613 = vrot.lane.b32.xlu0 %v228, 112
  %v614 = vpop.permute.xlu0 %613
  %615 = vrot.lane.b32.xlu0 %v229, 112
  %v616 = vpop.permute.xlu0 %615
  %617 = vrot.lane.b32.xlu0 %v216, 112
  %v618 = vpop.permute.xlu0 %617
  %vm619 = vcmask 916480
  %v620 = vsel %vm619, %v612, %v614
  %v621 = vsel %vm619, %v614, %v616
  %v622 = vsel %vm619, %v616, %v618
  %vm626 = vcmask 916480
  %v629 = vsel %vm626, %v618, %v612
  %s631 = scalar_lea.vmem %s5, 28
  %v632 = vld [vmem:[%s631] sm:$0xf]
  %634 = vst [vmem:[#allocation1] ss:$9 sm:$0xff] %v632
  %v635 = vld [vmem:[#allocation1] sm:$0xff]
  %v636 = vld [vmem:[#allocation1 + $0x9] sm:$0xff]
  %v637 = vld [vmem:[#allocation1 + $0x12] sm:$0xff]
  %v638 = vld [vmem:[#allocation1 + $0x1b] sm:$0xff]
  %v639 = vpack.i.b16 %v635, %v635
  %v641 = vperm.slane %v639, 0
  %v642 = vpack.i.b16 %v636, %v636
  %v644 = vperm.slane %v642, 0
  %v645 = vpack.i.b16 %v637, %v637
  %v647 = vperm.slane %v645, 0
  %v648 = vpack.i.b16 %v638, %v638
  %v650 = vperm.slane %v648, 0
  %v651 = vunpack.c.l.bf16 %v620
  %v652 = vunpack.c.l.bf16 %v621
  %v653 = vunpack.c.l.bf16 %v622
  %v654 = vunpack.c.l.bf16 %v629
  %v655 = vunpack.c.h.bf16 %v620
  %v656 = vunpack.c.h.bf16 %v621
  %v657 = vunpack.c.h.bf16 %v622
  %v658 = vunpack.c.h.bf16 %v629
  %v659 = vunpack.c.l.bf16 %v641
  %v660 = vunpack.c.l.bf16 %v644
  %v661 = vunpack.c.l.bf16 %v647
  %v662 = vunpack.c.l.bf16 %v650
  %v663 = vmul.f32 %v651, %v659
  %v664 = vmul.f32 %v652, %v660
  %v665 = vmul.f32 %v653, %v661
  %v666 = vmul.f32 %v654, %v662
  %v667 = vmul.f32 %v655, %v659
  %v668 = vmul.f32 %v656, %v660
  %v669 = vmul.f32 %v657, %v661
  %v670 = vmul.f32 %v658, %v662
  %v671 = vpack.c.bf16 %v664, %v663
  %v672 = vpack.c.bf16 %v666, %v665
  %v673 = vpack.c.bf16 %v668, %v667
  %v674 = vpack.c.bf16 %v670, %v669
  %675 = vrot.lane.b32.xlu0 %v227, 111
  %v676 = vpop.permute.xlu0 %675
  %677 = vrot.lane.b32.xlu0 %v228, 111
  %v678 = vpop.permute.xlu0 %677
  %679 = vrot.lane.b32.xlu0 %v229, 111
  %v680 = vpop.permute.xlu0 %679
  %681 = vrot.lane.b32.xlu0 %v216, 111
  %v682 = vpop.permute.xlu0 %681
  %vm683 = vcmask 908288
  %v684 = vsel %vm683, %v676, %v678
  %v685 = vsel %vm683, %v678, %v680
  %v686 = vsel %vm683, %v680, %v682
  %vm690 = vcmask 908288
  %v693 = vsel %vm690, %v682, %v676
  %s695 = scalar_lea.vmem %s5, 32
  %v696 = vld [vmem:[%s695] sm:$0xf]
  %698 = vst [vmem:[#allocation1] ss:$9 sm:$0xff] %v696
  %v699 = vld [vmem:[#allocation1] sm:$0xff]
  %v700 = vld [vmem:[#allocation1 + $0x9] sm:$0xff]
  %v701 = vld [vmem:[#allocation1 + $0x12] sm:$0xff]
  %v702 = vld [vmem:[#allocation1 + $0x1b] sm:$0xff]
  %v703 = vpack.i.b16 %v699, %v699
  %v705 = vperm.slane %v703, 0
  %v706 = vpack.i.b16 %v700, %v700
  %v708 = vperm.slane %v706, 0
  %v709 = vpack.i.b16 %v701, %v701
  %v711 = vperm.slane %v709, 0
  %v712 = vpack.i.b16 %v702, %v702
  %v714 = vperm.slane %v712, 0
  %v715 = vunpack.c.l.bf16 %v684
  %v716 = vunpack.c.l.bf16 %v685
  %v717 = vunpack.c.l.bf16 %v686
  %v718 = vunpack.c.l.bf16 %v693
  %v719 = vunpack.c.h.bf16 %v684
  %v720 = vunpack.c.h.bf16 %v685
  %v721 = vunpack.c.h.bf16 %v686
  %v722 = vunpack.c.h.bf16 %v693
  %v723 = vunpack.c.l.bf16 %v705
  %v724 = vunpack.c.l.bf16 %v708
  %v725 = vunpack.c.l.bf16 %v711
  %v726 = vunpack.c.l.bf16 %v714
  %v727 = vmul.f32 %v715, %v723
  %v728 = vmul.f32 %v716, %v724
  %v729 = vmul.f32 %v717, %v725
  %v730 = vmul.f32 %v718, %v726
  %v731 = vmul.f32 %v719, %v723
  %v732 = vmul.f32 %v720, %v724
  %v733 = vmul.f32 %v721, %v725
  %v734 = vmul.f32 %v722, %v726
  %v735 = vpack.c.bf16 %v728, %v727
  %v736 = vpack.c.bf16 %v730, %v729
  %v737 = vpack.c.bf16 %v732, %v731
  %v738 = vpack.c.bf16 %v734, %v733
  %v743 = vunpack.c.l.b16 %v287
  %v744 = vunpack.c.h.b16 %v287
  %v745 = vunpack.c.l.b16 %v288
  %v746 = vunpack.c.h.b16 %v288
  %v747 = vunpack.c.l.b16 %v289
  %v748 = vunpack.c.h.b16 %v289
  %v749 = vunpack.c.l.b16 %v290
  %v750 = vunpack.c.h.b16 %v290
  %v751 = vpack.c.b16 %v747, %v743
  %v752 = vpack.c.b16 %v748, %v744
  %v753 = vpack.c.b16 %v749, %v745
  %v754 = vpack.c.b16 %v750, %v746
  %v763 = vunpack.c.l.b16 %v351
  %v764 = vunpack.c.h.b16 %v351
  %v765 = vunpack.c.l.b16 %v352
  %v766 = vunpack.c.h.b16 %v352
  %v767 = vunpack.c.l.b16 %v353
  %v768 = vunpack.c.h.b16 %v353
  %v769 = vunpack.c.l.b16 %v354
  %v770 = vunpack.c.h.b16 %v354
  %v771 = vpack.c.b16 %v767, %v763
  %v772 = vpack.c.b16 %v768, %v764
  %v773 = vpack.c.b16 %v769, %v765
  %v774 = vpack.c.b16 %v770, %v766
  %v783 = vunpack.c.l.b16 %v415
  %v784 = vunpack.c.h.b16 %v415
  %v785 = vunpack.c.l.b16 %v416
  %v786 = vunpack.c.h.b16 %v416
  %v787 = vunpack.c.l.b16 %v417
  %v788 = vunpack.c.h.b16 %v417
  %v789 = vunpack.c.l.b16 %v418
  %v790 = vunpack.c.h.b16 %v418
  %v791 = vpack.c.b16 %v787, %v783
  %v792 = vpack.c.b16 %v788, %v784
  %v793 = vpack.c.b16 %v789, %v785
  %v794 = vpack.c.b16 %v790, %v786
  %v803 = vunpack.c.l.b16 %v479
  %v804 = vunpack.c.h.b16 %v479
  %v805 = vunpack.c.l.b16 %v480
  %v806 = vunpack.c.h.b16 %v480
  %v807 = vunpack.c.l.b16 %v481
  %v808 = vunpack.c.h.b16 %v481
  %v809 = vunpack.c.l.b16 %v482
  %v810 = vunpack.c.h.b16 %v482
  %v811 = vpack.c.b16 %v807, %v803
  %v812 = vpack.c.b16 %v808, %v804
  %v813 = vpack.c.b16 %v809, %v805
  %v814 = vpack.c.b16 %v810, %v806
  %v827 = vunpack.c.l.b16 %v543
  %v828 = vunpack.c.h.b16 %v543
  %v829 = vunpack.c.l.b16 %v544
  %v830 = vunpack.c.h.b16 %v544
  %v831 = vunpack.c.l.b16 %v545
  %v832 = vunpack.c.h.b16 %v545
  %v833 = vunpack.c.l.b16 %v546
  %v834 = vunpack.c.h.b16 %v546
  %v835 = vpack.c.b16 %v831, %v827
  %v836 = vpack.c.b16 %v832, %v828
  %v837 = vpack.c.b16 %v833, %v829
  %v838 = vpack.c.b16 %v834, %v830
  %v847 = vunpack.c.l.b16 %v607
  %v848 = vunpack.c.h.b16 %v607
  %v849 = vunpack.c.l.b16 %v608
  %v850 = vunpack.c.h.b16 %v608
  %v851 = vunpack.c.l.b16 %v609
  %v852 = vunpack.c.h.b16 %v609
  %v853 = vunpack.c.l.b16 %v610
  %v854 = vunpack.c.h.b16 %v610
  %v855 = vpack.c.b16 %v851, %v847
  %v856 = vpack.c.b16 %v852, %v848
  %v857 = vpack.c.b16 %v853, %v849
  %v858 = vpack.c.b16 %v854, %v850
  %v867 = vunpack.c.l.b16 %v671
  %v868 = vunpack.c.h.b16 %v671
  %v869 = vunpack.c.l.b16 %v672
  %v870 = vunpack.c.h.b16 %v672
  %v871 = vunpack.c.l.b16 %v673
  %v872 = vunpack.c.h.b16 %v673
  %v873 = vunpack.c.l.b16 %v674
  %v874 = vunpack.c.h.b16 %v674
  %v875 = vpack.c.b16 %v871, %v867
  %v876 = vpack.c.b16 %v872, %v868
  %v877 = vpack.c.b16 %v873, %v869
  %v878 = vpack.c.b16 %v874, %v870
  %v887 = vunpack.c.l.b16 %v735
  %v888 = vunpack.c.h.b16 %v735
  %v889 = vunpack.c.l.b16 %v736
  %v890 = vunpack.c.h.b16 %v736
  %v891 = vunpack.c.l.b16 %v737
  %v892 = vunpack.c.h.b16 %v737
  %v893 = vunpack.c.l.b16 %v738
  %v894 = vunpack.c.h.b16 %v738
  %v895 = vpack.c.b16 %v891, %v887
  %v896 = vpack.c.b16 %v892, %v888
  %v897 = vpack.c.b16 %v893, %v889
  %v898 = vpack.c.b16 %v894, %v890
  %v903 = vld [vmem:[%s4] sm:$0xff]
  %v904 = vld [vmem:[%s4 + $0x8] sm:$0xff]
  %v907 = vunpack.c.l.b16 %v903
  %v908 = vunpack.c.h.b16 %v903
  %v909 = vunpack.c.l.b16 %v904
  %v910 = vunpack.c.h.b16 %v904
  %v911 = vpack.c.b16 %v909, %v907
  %v912 = vpack.c.b16 %v910, %v908
  %v915 = vsel %vm306, %v912, 0
  %917 = vmatpush.bf16.msra.mxu0 %v875
  %918 = vmatpush.bf16.msra.mxu0 %v855
  %919 = vmatpush.bf16.msra.mxu0 %v835
  %920 = vmatpush.bf16.msra.mxu0 %v227
  %921 = vmatpush.bf16.msra.mxu0 %v811
  %922 = vmatpush.bf16.msra.mxu0 %v791
  %923 = vmatpush.bf16.msra.mxu0 %v771
  %924 = vmatpush.bf16.msra.mxu0 %v751
  %925 = vmatmul.bf16.gmra.mxu0 %v911
  %v926 = vpop.f32.mrf.mxu0
  %v927 = vadd.f32 0.0, %v926
  %v928 = vpop.f32.mrf.mxu0
  %v929 = vadd.f32 0.0, %v928
  %930 = vdwg.mxu0
  %931 = vmatpush.bf16.msra.mxu0 0
  %932 = vmatpush.bf16.msra.mxu0 0
  %933 = vmatpush.bf16.msra.mxu0 0
  %934 = vmatpush.bf16.msra.mxu0 0
  %935 = vmatpush.bf16.msra.mxu0 0
  %936 = vmatpush.bf16.msra.mxu0 0
  %937 = vmatpush.bf16.msra.mxu0 0
  %938 = vmatpush.bf16.msra.mxu0 %v895
  %939 = vmatmul.bf16.gmra.mxu0 %v915
  %v940 = vpop.f32.mrf.mxu0
  %v941 = vadd.f32 %v927, %v940
  %v942 = vpop.f32.mrf.mxu0
  %v943 = vadd.f32 %v929, %v942
  %944 = vdwg.mxu0
  %945 = vmatpush.bf16.msra.mxu0 %v876
  %946 = vmatpush.bf16.msra.mxu0 %v856
  %947 = vmatpush.bf16.msra.mxu0 %v836
  %948 = vmatpush.bf16.msra.mxu0 %v228
  %949 = vmatpush.bf16.msra.mxu0 %v812
  %950 = vmatpush.bf16.msra.mxu0 %v792
  %951 = vmatpush.bf16.msra.mxu0 %v772
  %952 = vmatpush.bf16.msra.mxu0 %v752
  %953 = vmatmul.bf16.gmra.mxu0 %v911
  %v954 = vpop.f32.mrf.mxu0
  %v955 = vadd.f32 0.0, %v954
  %v956 = vpop.f32.mrf.mxu0
  %v957 = vadd.f32 0.0, %v956
  %958 = vdwg.mxu0
  %959 = vmatpush.bf16.msra.mxu0 0
  %960 = vmatpush.bf16.msra.mxu0 0
  %961 = vmatpush.bf16.msra.mxu0 0
  %962 = vmatpush.bf16.msra.mxu0 0
  %963 = vmatpush.bf16.msra.mxu0 0
  %964 = vmatpush.bf16.msra.mxu0 0
  %965 = vmatpush.bf16.msra.mxu0 0
  %966 = vmatpush.bf16.msra.mxu0 %v896
  %967 = vmatmul.bf16.gmra.mxu0 %v915
  %v968 = vpop.f32.mrf.mxu0
  %v969 = vadd.f32 %v955, %v968
  %v970 = vpop.f32.mrf.mxu0
  %v971 = vadd.f32 %v957, %v970
  %972 = vdwg.mxu0
  %973 = vmatpush.bf16.msra.mxu0 %v877
  %974 = vmatpush.bf16.msra.mxu0 %v857
  %975 = vmatpush.bf16.msra.mxu0 %v837
  %976 = vmatpush.bf16.msra.mxu0 %v229
  %977 = vmatpush.bf16.msra.mxu0 %v813
  %978 = vmatpush.bf16.msra.mxu0 %v793
  %979 = vmatpush.bf16.msra.mxu0 %v773
  %980 = vmatpush.bf16.msra.mxu0 %v753
  %981 = vmatmul.bf16.gmra.mxu0 %v911
  %v982 = vpop.f32.mrf.mxu0
  %v983 = vadd.f32 0.0, %v982
  %v984 = vpop.f32.mrf.mxu0
  %v985 = vadd.f32 0.0, %v984
  %986 = vdwg.mxu0
  %987 = vmatpush.bf16.msra.mxu0 0
  %988 = vmatpush.bf16.msra.mxu0 0
  %989 = vmatpush.bf16.msra.mxu0 0
  %990 = vmatpush.bf16.msra.mxu0 0
  %991 = vmatpush.bf16.msra.mxu0 0
  %992 = vmatpush.bf16.msra.mxu0 0
  %993 = vmatpush.bf16.msra.mxu0 0
  %994 = vmatpush.bf16.msra.mxu0 %v897
  %995 = vmatmul.bf16.gmra.mxu0 %v915
  %v996 = vpop.f32.mrf.mxu0
  %v997 = vadd.f32 %v983, %v996
  %v998 = vpop.f32.mrf.mxu0
  %v999 = vadd.f32 %v985, %v998
  %1000 = vdwg.mxu0
  %1001 = vmatpush.bf16.msra.mxu0 %v878
  %1002 = vmatpush.bf16.msra.mxu0 %v858
  %1003 = vmatpush.bf16.msra.mxu0 %v838
  %1004 = vmatpush.bf16.msra.mxu0 %v216
  %1005 = vmatpush.bf16.msra.mxu0 %v814
  %1006 = vmatpush.bf16.msra.mxu0 %v794
  %1007 = vmatpush.bf16.msra.mxu0 %v774
  %1008 = vmatpush.bf16.msra.mxu0 %v754
  %1009 = vmatmul.bf16.gmra.mxu0 %v911
  %v1010 = vpop.f32.mrf.mxu0
  %v1011 = vadd.f32 0.0, %v1010
  %v1012 = vpop.f32.mrf.mxu0
  %v1013 = vadd.f32 0.0, %v1012
  %1014 = vdwg.mxu0
  %1015 = vmatpush.bf16.msra.mxu0 0
  %1016 = vmatpush.bf16.msra.mxu0 0
  %1017 = vmatpush.bf16.msra.mxu0 0
  %1018 = vmatpush.bf16.msra.mxu0 0
  %1019 = vmatpush.bf16.msra.mxu0 0
  %1020 = vmatpush.bf16.msra.mxu0 0
  %1021 = vmatpush.bf16.msra.mxu0 0
  %1022 = vmatpush.bf16.msra.mxu0 %v898
  %1023 = vmatmul.bf16.gmra.mxu0 %v915
  %v1024 = vpop.f32.mrf.mxu0
  %v1025 = vadd.f32 %v1011, %v1024
  %v1026 = vpop.f32.mrf.mxu0
  %v1027 = vadd.f32 %v1013, %v1026
  %1028 = vdwg.mxu0
  %v1029 = vadd.f32 %v941, %v969
  %v1030 = vadd.f32 %v1029, %v997
  %v1031 = vadd.f32 %v1030, %v1025
  %1032 = vadd.xlane.f32.xlu0 %v1031
  %v1033 = vpop.xlane.xlu0 %1032
  %v1034 = vadd.f32 %v943, %v971
  %v1035 = vadd.f32 %v1034, %v999
  %v1036 = vadd.f32 %v1035, %v1027
  %1037 = vadd.xlane.f32.xlu0 %v1036
  %v1038 = vpop.xlane.xlu0 %1037
  %1039 = vst.msk [vmem:[%s7] sm:$0xff] %vm434, %v1033
  %1040 = vst.msk [vmem:[%s7 + $0x8] sm:$0xff] %vm434, %v1038
  %v1041 = vmul.f32 %v941, %v941
  %v1042 = vmul.f32 %v969, %v969
  %v1043 = vmul.f32 %v997, %v997
  %v1044 = vmul.f32 %v1025, %v1025
  %v1045 = vmul.f32 %v943, %v943
  %v1046 = vmul.f32 %v971, %v971
  %v1047 = vmul.f32 %v999, %v999
  %v1048 = vmul.f32 %v1027, %v1027
  %v1049 = vadd.f32 %v1041, %v1042
  %v1050 = vadd.f32 %v1049, %v1043
  %v1051 = vadd.f32 %v1050, %v1044
  %1052 = vadd.xlane.f32.xlu0 %v1051
  %v1053 = vpop.xlane.xlu0 %1052
  %v1054 = vadd.f32 %v1045, %v1046
  %v1055 = vadd.f32 %v1054, %v1047
  %v1056 = vadd.f32 %v1055, %v1048
  %1057 = vadd.xlane.f32.xlu0 %v1056
  %v1058 = vpop.xlane.xlu0 %1057
  %1059 = vst.msk [vmem:[%s8] sm:$0xff] %vm434, %v1053
  %1060 = vst.msk [vmem:[%s8 + $0x8] sm:$0xff] %vm434, %v1058
  // Predicated region
  $region26: #{_block_forward_impl.5} parent=0 // pred_check
    _
  $region27: #{_block_forward_impl.5} parent=0 // pred_check_branch
    %1062 = sbr.rel (0) target = $region29
  $region28: #{_block_forward_impl.5} parent=0 // pred_region
    _
  $region29: #{_block_forward_impl.5} parent=0 // pred_fallthru
    _
  // Predicated region
  $region30: #{_block_forward_impl.5} parent=0 // pred_check
    _
  $region31: #{_block_forward_impl.5} parent=0 // pred_check_branch
    %1064 = sbr.rel (0) target = $region33
  $region32: #{_block_forward_impl.5} parent=0 // pred_region
    _
  $region33: #{_block_forward_impl.5} parent=0 // pred_fallthru
    _
  // Predicated region
  $region34: #{_block_forward_impl.5} parent=0 // pred_check
    _
  $region35: #{_block_forward_impl.5} parent=0 // pred_check_branch
    %1066 = sbr.rel (0) target = $region37
  $region36: #{_block_forward_impl.5} parent=0 // pred_region
    _
  $region37: #{_block_forward_impl.5} parent=0 // pred_fallthru
    _
  // Predicated region
  $region38: #{_block_forward_impl.5} parent=0 // pred_check
    _
  $region39: #{_block_forward_impl.5} parent=0 // pred_check_branch
    %1068 = sbr.rel (0) target = $region41
  $region40: #{_block_forward_impl.5} parent=0 // pred_region
    _
  $region41: #{_block_forward_impl.5} parent=0 // pred_fallthru
    _
  // Predicated region
  $region42: #{_block_forward_impl.5} parent=0 // pred_check
    _
  $region43: #{_block_forward_impl.5} parent=0 // pred_check_branch
    %1070 = sbr.rel (0) target = $region45
  $region44: #{_block_forward_impl.5} parent=0 // pred_region
    _
  $region45: #{_block_forward_impl.5} parent=0 // pred_fallthru
    _
  // Predicated region
  $region46: #{_block_forward_impl.5} parent=0 // pred_check
    _
  $region47: #{_block_forward_impl.5} parent=0 // pred_check_branch
    %1072 = sbr.rel (0) target = $region49
  $region48: #{_block_forward_impl.5} parent=0 // pred_region
    _
  $region49: #{_block_forward_impl.5} parent=0 // pred_fallthru
    _

</llo_original>
